<compile_context>
chip_gen: v7x
topology: tpu7x:2x2x1
jax: 0.10.0
libtpu: 0.0.40
codegen_flags: <defaults>
</compile_context>

<pallas_src>
import jax
import jax.numpy as jnp
from jax.experimental import pallas as pl
from jax.experimental.pallas import tpu as pltpu

NUM_V = int(1558 / 2)  # 779, as in the PyTorch source


# ----------------------------------------------------------------------------
# Pallas kernel: fused attention (fconv_at) + gated projection (fconv_ated)
# ----------------------------------------------------------------------------
def _fusion_kernel(fs_ref, fk_ref, fkt_ref, ex_ref,
                   wat1s_ref, wat1k_ref, wat1t_ref, wat1e_ref, wat2_ref,
                   wau1s_ref, wau1k_ref, wau1t_ref, wau1e_ref, wau2_ref,
                   out_ref):
    f32 = jnp.float32
    fs = fs_ref[...]          # (TM, C)  bf16
    fk = fk_ref[...]          # (TM, C)  bf16
    fkt = fkt_ref[...]        # (TM, C)  bf16
    ex = ex_ref[...]          # (TM, 4)  bf16

    # Gated projection path, re-associated: (fs*a0)@W == a0*(fs@W), so these
    # dots are issued independently of the sigmoid path (no MXU bubble).
    p_s = jnp.dot(fs, wau1s_ref[...], preferred_element_type=f32)   # (TM, he)
    p_k = jnp.dot(fk, wau1k_ref[...], preferred_element_type=f32)
    p_t = jnp.dot(fkt, wau1t_ref[...], preferred_element_type=f32)
    p_e = jnp.dot(ex, wau1e_ref[...], preferred_element_type=f32)

    # Attention path: Conv1d -> ReLU -> Conv1d -> Sigmoid.
    h = (jnp.dot(fs, wat1s_ref[...], preferred_element_type=f32)
         + jnp.dot(fk, wat1k_ref[...], preferred_element_type=f32)
         + jnp.dot(fkt, wat1t_ref[...], preferred_element_type=f32)
         + jnp.dot(ex, wat1e_ref[...], preferred_element_type=f32))  # (TM, hid_at)
    h = jnp.maximum(h, 0.0)
    z = jnp.dot(h.astype(wat2_ref.dtype), wat2_ref[...],
                preferred_element_type=f32)                          # (TM, 3)
    at = pl.reciprocal(1.0 + jnp.exp(-z), approx=True)               # sigmoid (EUP)

    g = (at[:, 0:1] * p_s + at[:, 1:2] * p_k + at[:, 2:3] * p_t + p_e)
    g = jnp.maximum(g, 0.0)
    out_ref[...] = jnp.dot(g.astype(wau2_ref.dtype), wau2_ref[...],
                           preferred_element_type=f32).astype(out_ref.dtype)


# ----------------------------------------------------------------------------
# Tiling helpers (generation-aware)
# ----------------------------------------------------------------------------
def _round_up(x, m):
    return -(-x // m) * m


def _has_two_tensorcores():
    """True on 2-TensorCore parts (v7x); False on v5e/v6e (and on failure)."""
    try:
        kind = jax.devices()[0].device_kind.lower()
    except Exception:
        return False
    return "v7" in kind


def _row_tiling(m, two_tc):
    """Pick (m_pad, tm).  Single biggest tile on 1-TC chips; >=2 steps on v7x."""
    if m <= 2048:
        steps = 2 if (two_tc and m >= 256) else 1
        tm = max(128, _round_up(-(-m // steps), 128))
        return steps * tm, tm
    # Large M: big fixed tile, modest pad waste, plenty of grid steps for both TCs.
    for tm in (2048, 1024):
        if m % tm == 0:
            return m, tm
    tm = 1024
    return _round_up(m, tm), tm


# ----------------------------------------------------------------------------
# Pallas wrapper for one pyramid level (the big-channel level 0)
# ----------------------------------------------------------------------------
def fused_level_pallas(fs, fk, fkt, extras, wb, out_dtype=jnp.bfloat16):
    """fs/fk/fkt: (B, Q, C) ; extras: (B, Q, 4) ; wb: bf16 weight dict.

    Returns (B, Q, Cout) in `out_dtype` (bf16 by default, per perf review —
    halves output writeback; within the bf16 / approx-sigmoid error budget).
    """
    B, Q, C = fs.shape
    M = B * Q
    cout = wb["wau2"].shape[1]
    cex = extras.shape[-1]

    two_tc = _has_two_tensorcores()
    m_pad, tm = _row_tiling(M, two_tc)

    def prep(a):
        # (B, Q, c) -> (M, c) bf16; row pad (rare) fuses with the cast — no
        # wrapper-side concat slab, no second HBM round trip.
        a = a.reshape(M, a.shape[-1]).astype(jnp.bfloat16)
        if m_pad != M:
            a = jnp.pad(a, ((0, m_pad - M), (0, 0)))
        return a

    fs2, fk2, fkt2, ex2 = prep(fs), prep(fk), prep(fkt), prep(extras)

    def row_spec(c):
        return pl.BlockSpec((tm, c), lambda i: (i, 0))

    def resident(arr):  # whole-array block, constant index -> stays in VMEM
        return pl.BlockSpec(arr.shape, lambda i: (0,) * arr.ndim)

    out = pl.pallas_call(
        _fusion_kernel,
        out_shape=jax.ShapeDtypeStruct((m_pad, cout), out_dtype),
        grid=(m_pad // tm,),
        in_specs=[row_spec(C), row_spec(C), row_spec(C), row_spec(cex),
                  resident(wb["wat1_fs"]), resident(wb["wat1_fk"]),
                  resident(wb["wat1_fkt"]), resident(wb["wat1_ex"]),
                  resident(wb["wat2"]),
                  resident(wb["wau1_fs"]), resident(wb["wau1_fk"]),
                  resident(wb["wau1_fkt"]), resident(wb["wau1_ex"]),
                  resident(wb["wau2"])],
        out_specs=pl.BlockSpec((tm, cout), lambda i: (i, 0)),
        compiler_params=pltpu.CompilerParams(
            dimension_semantics=("parallel",)),
    )(fs2, fk2, fkt2, ex2,
      wb["wat1_fs"], wb["wat1_fk"], wb["wat1_fkt"], wb["wat1_ex"], wb["wat2"],
      wb["wau1_fs"], wb["wau1_fk"], wb["wau1_fkt"], wb["wau1_ex"], wb["wau2"])

    return out[:M].reshape(B, Q, cout)


# Plain-JAX (XLA) version of the fused level: exact f32 reference, and the
# production path for the tiny-channel level 1 (Pallas launch is pure
# overhead at C=8).
def fused_level_xla(fs, fk, fkt, extras, w):
    fs = fs.astype(jnp.float32)
    fk = fk.astype(jnp.float32)
    fkt = fkt.astype(jnp.float32)
    ex = extras.astype(jnp.float32)
    h = (fs @ w["wat1_fs"] + fk @ w["wat1_fk"]
         + fkt @ w["wat1_fkt"] + ex @ w["wat1_ex"])
    h = jnp.maximum(h, 0.0)
    at = jax.nn.sigmoid(h @ w["wat2"])
    g = ((fs * at[..., 0:1]) @ w["wau1_fs"]
         + (fk * at[..., 1:2]) @ w["wau1_fk"]
         + (fkt * at[..., 2:3]) @ w["wau1_fkt"]
         + ex @ w["wau1_ex"])
    g = jnp.maximum(g, 0.0)
    return g @ w["wau2"]


# ----------------------------------------------------------------------------
# Plain-JAX glue: feat_sample (bilinear grid-sample) and KNN_vis gather
# ----------------------------------------------------------------------------
def feat_sample(fg, vert_xy):
    """Bilinear sample of NCHW `fg` at coords in [-1, 1]: (B,C,H,W),(B,N,2)->(B,N,C)."""
    # TODO(synk): `feat_sample` is not defined in the provided source; an
    # align_corners=True bilinear grid_sample is assumed (PyTorch F.grid_sample
    # defaults to align_corners=False — verify against the original).
    B, C, H, W = fg.shape
    x = (vert_xy[..., 0] + 1.0) * 0.5 * (W - 1)
    y = (vert_xy[..., 1] + 1.0) * 0.5 * (H - 1)
    x0 = jnp.floor(x)
    y0 = jnp.floor(y)
    wx1, wy1 = x - x0, y - y0
    wx0, wy0 = 1.0 - wx1, 1.0 - wy1
    x0i = jnp.clip(x0, 0, W - 1).astype(jnp.int32)
    x1i = jnp.clip(x0 + 1, 0, W - 1).astype(jnp.int32)
    y0i = jnp.clip(y0, 0, H - 1).astype(jnp.int32)
    y1i = jnp.clip(y0 + 1, 0, H - 1).astype(jnp.int32)

    def gather(f, yi, xi):            # f: (C,H,W), yi/xi: (N,) -> (C,N)
        return f[:, yi, xi]

    g = jax.vmap(gather)
    v00, v01 = g(fg, y0i, x0i), g(fg, y0i, x1i)
    v10, v11 = g(fg, y1i, x0i), g(fg, y1i, x1i)
    wx0b, wx1b = wx0[:, None, :], wx1[:, None, :]
    wy0b, wy1b = wy0[:, None, :], wy1[:, None, :]
    out = (v00 * wy0b * wx0b + v01 * wy0b * wx1b +
           v10 * wy1b * wx0b + v11 * wy1b * wx1b)      # (B,C,N)
    return jnp.transpose(out, (0, 2, 1))               # (B,N,C)


def knn_vis(query, vert, vert_feat, vert_vis, num_v):
    """Mirrors PyTorch KNN_vis with K=1 (batch-0 neighbour indices for all batches)."""
    d = jnp.sum((query[0][:, None, :] - vert[0][None, :, :]) ** 2, axis=-1)  # (Q,N)
    idx = jnp.argmin(d, axis=-1)                                             # (Q,)
    vf_knn = vert_feat[:, idx] * vert_vis[:, idx]
    vf_toh = jnp.concatenate([vert_feat[:, num_v:], vert_feat[:, :num_v]], axis=1)
    vv_toh = jnp.concatenate([vert_vis[:, num_v:], vert_vis[:, :num_v]], axis=1)
    vf_knn_toh = vf_toh[:, idx] * vv_toh[:, idx]
    return vf_knn, vf_knn_toh, vert_vis[:, idx], vv_toh[:, idx]


# ----------------------------------------------------------------------------
# Parameters (deterministic synthetic init; shapes follow the Conv1d stacks)
# ----------------------------------------------------------------------------
def init_level_weights(key, c, hid_at, hid_ated, cout):
    """Conv1d(3c+4->hid_at->3) and Conv1d(3c+4->hid_ated->cout), bias=False.

    Stored transposed (in, out) and split per concat block: rows
    [0:c)=fs, [c:2c)=fk, [2c:3c)=fkt, [3c:3c+4)=extras.
    """
    ks = jax.random.split(key, 10)
    cin = 3 * c + 4

    def w(k, fan_in, shape):
        return jax.random.normal(k, shape, jnp.float32) / jnp.sqrt(float(fan_in))

    return {
        "wat1_fs": w(ks[0], cin, (c, hid_at)),
        "wat1_fk": w(ks[1], cin, (c, hid_at)),
        "wat1_fkt": w(ks[2], cin, (c, hid_at)),
        "wat1_ex": w(ks[3], cin, (4, hid_at)),
        "wat2": w(ks[4], hid_at, (hid_at, 3)),
        "wau1_fs": w(ks[5], cin, (c, hid_ated)),
        "wau1_fk": w(ks[6], cin, (c, hid_ated)),
        "wau1_fkt": w(ks[7], cin, (c, hid_ated)),
        "wau1_ex": w(ks[8], cin, (4, hid_ated)),
        "wau2": w(ks[9], hid_ated, (hid_ated, cout)),
    }


def pack_level_weights(w_f32):
    """One-time weight packing (hoisted out of the per-call path): bf16 casts
    live with the params so the forward never re-packs under jit."""
    bf16 = jax.tree_util.tree_map(lambda a: a.astype(jnp.bfloat16), w_f32)
    return {"f32": w_f32, "bf16": bf16}


# ----------------------------------------------------------------------------
# Full forward (two pyramid levels, as in the PyTorch module)
# ----------------------------------------------------------------------------
def geo_vis_fusion_forward(params, vert_xy, fg, feat_sampled, vert, v, vert_vis,
                           query_vis, closest_face, query_sdf):
    del closest_face  # unused in the PyTorch forward as well
    outs = []
    for lvl in range(2):
        vert_feat = feat_sample(fg[lvl], vert_xy)
        vf_knn, vf_knn_toh, vv_th, vv_toh = knn_vis(v, vert, vert_feat,
                                                    vert_vis, NUM_V)
        fs = jnp.squeeze(feat_sampled[lvl], axis=1)                 # (B, Q, C)
        extras = jnp.concatenate([query_sdf, query_vis, vv_th, vv_toh], axis=2)
        if fs.shape[-1] >= 16:
            fused = fused_level_pallas(fs, vf_knn, vf_knn_toh, extras,
                                       params[lvl]["bf16"])
        else:
            # Tiny-channel level: a Pallas launch is pure overhead — keep XLA.
            fused = fused_level_xla(fs, vf_knn, vf_knn_toh, extras,
                                    params[lvl]["f32"])
        outs.append(fused[:, None, :, :])                           # (B,1,Q,Cout)
    return outs


if __name__ == "__main__":
    key = jax.random.PRNGKey(0)
    B, Q, N = 2, 256, 1558            # N = 1558 so the num_v=779 half-swap is exact
    C0, C1 = 64, 8                    # 3*64+4 = 196 and 3*8+4 = 28 input channels
    H0 = W0 = 16
    H1 = W1 = 8

    keys = jax.random.split(key, 12)
    vert_xy = jax.random.uniform(keys[0], (B, N, 2), jnp.float32, -1.0, 1.0)
    fg = [jax.random.normal(keys[1], (B, C0, H0, W0), jnp.float32),
          jax.random.normal(keys[2], (B, C1, H1, W1), jnp.float32)]
    feat_sampled = [jax.random.normal(keys[3], (B, 1, Q, C0), jnp.float32),
                    jax.random.normal(keys[4], (B, 1, Q, C1), jnp.float32)]
    vert = jax.random.normal(keys[5], (B, N, 3), jnp.float32)
    v = jax.random.normal(keys[6], (B, Q, 3), jnp.float32)
    vert_vis = (jax.random.uniform(keys[7], (B, N, 1)) > 0.5).astype(jnp.float32)
    query_vis = (jax.random.uniform(keys[8], (B, Q, 1)) > 0.5).astype(jnp.float32)
    closest_face = jnp.zeros((B, Q, 1), jnp.int32)   # unused by forward
    query_sdf = jax.random.normal(keys[9], (B, Q, 1), jnp.float32)

    params = [pack_level_weights(init_level_weights(keys[10], C0, 10, 64, 64)),
              pack_level_weights(init_level_weights(keys[11], C1, 10, 8, 8))]

    outs = geo_vis_fusion_forward(params, vert_xy, fg, feat_sampled, vert, v,
                                  vert_vis, query_vis, closest_face, query_sdf)
    outs = [jax.block_until_ready(o) for o in outs]
    assert outs[0].shape == (B, 1, Q, 64), outs[0].shape
    assert outs[1].shape == (B, 1, Q, 8), outs[1].shape

    # Cross-check the Pallas hot path (level 0) against the exact f32 reference.
    vert_feat0 = feat_sample(fg[0], vert_xy)
    vf_knn, vf_knn_toh, vv_th, vv_toh = knn_vis(v, vert, vert_feat0, vert_vis, NUM_V)
    fs0 = jnp.squeeze(feat_sampled[0], axis=1)
    extras0 = jnp.concatenate([query_sdf, query_vis, vv_th, vv_toh], axis=2)
    ref0 = fused_level_xla(fs0, vf_knn, vf_knn_toh, extras0, params[0]["f32"])
    out0 = outs[0].astype(jnp.float32)
    err = float(jnp.max(jnp.abs(ref0[:, None] - out0)))
    scale = float(jnp.max(jnp.abs(ref0)))
    tol = 5e-2 * max(1.0, scale)      # bf16-operand / approx-reciprocal tolerance
    assert err < tol, f"max abs err {err} (tol {tol})"

    print("KERNEL_OK")
</pallas_src>

<mosaic_0001>
module attributes {stable_mosaic.version = 11 : i64} {
  func.func @_fusion_kernel(%arg0: i32, %arg1: memref<512x64xbf16, #tpu.memory_space<vmem>>, %arg2: memref<512x64xbf16, #tpu.memory_space<vmem>>, %arg3: memref<512x64xbf16, #tpu.memory_space<vmem>>, %arg4: memref<512x4xbf16, #tpu.memory_space<vmem>>, %arg5: memref<64x10xbf16, #tpu.memory_space<vmem>>, %arg6: memref<64x10xbf16, #tpu.memory_space<vmem>>, %arg7: memref<64x10xbf16, #tpu.memory_space<vmem>>, %arg8: memref<4x10xbf16, #tpu.memory_space<vmem>>, %arg9: memref<10x3xbf16, #tpu.memory_space<vmem>>, %arg10: memref<64x64xbf16, #tpu.memory_space<vmem>>, %arg11: memref<64x64xbf16, #tpu.memory_space<vmem>>, %arg12: memref<64x64xbf16, #tpu.memory_space<vmem>>, %arg13: memref<4x64xbf16, #tpu.memory_space<vmem>>, %arg14: memref<64x64xbf16, #tpu.memory_space<vmem>>, %arg15: memref<512x64xbf16, #tpu.memory_space<vmem>>) attributes {dimension_semantics = [#tpu.dimension_semantics<parallel>], iteration_bounds = array<i64: 1>, scalar_prefetch = 0 : i64, scratch_operands = 0 : i64, tpu.core_type = #tpu.core_type<tc>, window_params = [{transform_indices = @transform_0, window_bounds = array<i64: 512, 64>}, {transform_indices = @transform_1, window_bounds = array<i64: 512, 64>}, {transform_indices = @transform_2, window_bounds = array<i64: 512, 64>}, {transform_indices = @transform_3, window_bounds = array<i64: 512, 4>}, {pipeline_mode = #tpu.pipeline_mode<synchronous>, transform_indices = @transform_4, window_bounds = array<i64: 64, 10>}, {pipeline_mode = #tpu.pipeline_mode<synchronous>, transform_indices = @transform_5, window_bounds = array<i64: 64, 10>}, {pipeline_mode = #tpu.pipeline_mode<synchronous>, transform_indices = @transform_6, window_bounds = array<i64: 64, 10>}, {pipeline_mode = #tpu.pipeline_mode<synchronous>, transform_indices = @transform_7, window_bounds = array<i64: 4, 10>}, {pipeline_mode = #tpu.pipeline_mode<synchronous>, transform_indices = @transform_8, window_bounds = array<i64: 10, 3>}, {pipeline_mode = #tpu.pipeline_mode<synchronous>, transform_indices = @transform_9, window_bounds = array<i64: 64, 64>}, {pipeline_mode = #tpu.pipeline_mode<synchronous>, transform_indices = @transform_10, window_bounds = array<i64: 64, 64>}, {pipeline_mode = #tpu.pipeline_mode<synchronous>, transform_indices = @transform_11, window_bounds = array<i64: 64, 64>}, {pipeline_mode = #tpu.pipeline_mode<synchronous>, transform_indices = @transform_12, window_bounds = array<i64: 4, 64>}, {pipeline_mode = #tpu.pipeline_mode<synchronous>, transform_indices = @transform_13, window_bounds = array<i64: 64, 64>}, {transform_indices = @transform_14, window_bounds = array<i64: 512, 64>}]} {
    %c0 = arith.constant 0 : index
    %c0_0 = arith.constant 0 : index
    %0 = vector.load %arg1[%c0, %c0_0] : memref<512x64xbf16, #tpu.memory_space<vmem>>, vector<512x64xbf16>
    %c0_1 = arith.constant 0 : index
    %c0_2 = arith.constant 0 : index
    %1 = vector.load %arg2[%c0_1, %c0_2] : memref<512x64xbf16, #tpu.memory_space<vmem>>, vector<512x64xbf16>
    %c0_3 = arith.constant 0 : index
    %c0_4 = arith.constant 0 : index
    %2 = vector.load %arg3[%c0_3, %c0_4] : memref<512x64xbf16, #tpu.memory_space<vmem>>, vector<512x64xbf16>
    %c0_5 = arith.constant 0 : index
    %c0_6 = arith.constant 0 : index
    %3 = vector.load %arg4[%c0_5, %c0_6] : memref<512x4xbf16, #tpu.memory_space<vmem>>, vector<512x4xbf16>
    %c0_7 = arith.constant 0 : index
    %c0_8 = arith.constant 0 : index
    %4 = vector.load %arg10[%c0_7, %c0_8] : memref<64x64xbf16, #tpu.memory_space<vmem>>, vector<64x64xbf16>
    %cst = arith.constant dense<0.000000e+00> : vector<512x64xf32>
    %5 = tpu.matmul %0, %4, %cst {dimension_numbers = #tpu.dot_dimension_numbers<[1], [0], [0], [1], [0, 0, 1, 1], [], []>} : vector<512x64xbf16>, vector<64x64xbf16>, vector<512x64xf32> -> vector<512x64xf32>
    %c0_9 = arith.constant 0 : index
    %c0_10 = arith.constant 0 : index
    %6 = vector.load %arg11[%c0_9, %c0_10] : memref<64x64xbf16, #tpu.memory_space<vmem>>, vector<64x64xbf16>
    %cst_11 = arith.constant dense<0.000000e+00> : vector<512x64xf32>
    %7 = tpu.matmul %1, %6, %cst_11 {dimension_numbers = #tpu.dot_dimension_numbers<[1], [0], [0], [1], [0, 0, 1, 1], [], []>} : vector<512x64xbf16>, vector<64x64xbf16>, vector<512x64xf32> -> vector<512x64xf32>
    %c0_12 = arith.constant 0 : index
    %c0_13 = arith.constant 0 : index
    %8 = vector.load %arg12[%c0_12, %c0_13] : memref<64x64xbf16, #tpu.memory_space<vmem>>, vector<64x64xbf16>
    %cst_14 = arith.constant dense<0.000000e+00> : vector<512x64xf32>
    %9 = tpu.matmul %2, %8, %cst_14 {dimension_numbers = #tpu.dot_dimension_numbers<[1], [0], [0], [1], [0, 0, 1, 1], [], []>} : vector<512x64xbf16>, vector<64x64xbf16>, vector<512x64xf32> -> vector<512x64xf32>
    %c0_15 = arith.constant 0 : index
    %c0_16 = arith.constant 0 : index
    %10 = vector.load %arg13[%c0_15, %c0_16] : memref<4x64xbf16, #tpu.memory_space<vmem>>, vector<4x64xbf16>
    %cst_17 = arith.constant dense<0.000000e+00> : vector<512x64xf32>
    %11 = tpu.matmul %3, %10, %cst_17 {dimension_numbers = #tpu.dot_dimension_numbers<[1], [0], [0], [1], [0, 0, 1, 1], [], []>} : vector<512x4xbf16>, vector<4x64xbf16>, vector<512x64xf32> -> vector<512x64xf32>
    %c0_18 = arith.constant 0 : index
    %c0_19 = arith.constant 0 : index
    %12 = vector.load %arg5[%c0_18, %c0_19] : memref<64x10xbf16, #tpu.memory_space<vmem>>, vector<64x10xbf16>
    %cst_20 = arith.constant dense<0.000000e+00> : vector<512x10xf32>
    %13 = tpu.matmul %0, %12, %cst_20 {dimension_numbers = #tpu.dot_dimension_numbers<[1], [0], [0], [1], [0, 0, 1, 1], [], []>} : vector<512x64xbf16>, vector<64x10xbf16>, vector<512x10xf32> -> vector<512x10xf32>
    %c0_21 = arith.constant 0 : index
    %c0_22 = arith.constant 0 : index
    %14 = vector.load %arg6[%c0_21, %c0_22] : memref<64x10xbf16, #tpu.memory_space<vmem>>, vector<64x10xbf16>
    %cst_23 = arith.constant dense<0.000000e+00> : vector<512x10xf32>
    %15 = tpu.matmul %1, %14, %cst_23 {dimension_numbers = #tpu.dot_dimension_numbers<[1], [0], [0], [1], [0, 0, 1, 1], [], []>} : vector<512x64xbf16>, vector<64x10xbf16>, vector<512x10xf32> -> vector<512x10xf32>
    %16 = arith.addf %13, %15 : vector<512x10xf32>
    %c0_24 = arith.constant 0 : index
    %c0_25 = arith.constant 0 : index
    %17 = vector.load %arg7[%c0_24, %c0_25] : memref<64x10xbf16, #tpu.memory_space<vmem>>, vector<64x10xbf16>
    %cst_26 = arith.constant dense<0.000000e+00> : vector<512x10xf32>
    %18 = tpu.matmul %2, %17, %cst_26 {dimension_numbers = #tpu.dot_dimension_numbers<[1], [0], [0], [1], [0, 0, 1, 1], [], []>} : vector<512x64xbf16>, vector<64x10xbf16>, vector<512x10xf32> -> vector<512x10xf32>
    %19 = arith.addf %16, %18 : vector<512x10xf32>
    %c0_27 = arith.constant 0 : index
    %c0_28 = arith.constant 0 : index
    %20 = vector.load %arg8[%c0_27, %c0_28] : memref<4x10xbf16, #tpu.memory_space<vmem>>, vector<4x10xbf16>
    %cst_29 = arith.constant dense<0.000000e+00> : vector<512x10xf32>
    %21 = tpu.matmul %3, %20, %cst_29 {dimension_numbers = #tpu.dot_dimension_numbers<[1], [0], [0], [1], [0, 0, 1, 1], [], []>} : vector<512x4xbf16>, vector<4x10xbf16>, vector<512x10xf32> -> vector<512x10xf32>
    %22 = arith.addf %19, %21 : vector<512x10xf32>
    %cst_30 = arith.constant 0.000000e+00 : f32
    %23 = vector.broadcast %cst_30 : f32 to vector<512x10xf32>
    %24 = arith.maximumf %22, %23 : vector<512x10xf32>
    %25 = arith.truncf %24 : vector<512x10xf32> to vector<512x10xbf16>
    %c0_31 = arith.constant 0 : index
    %c0_32 = arith.constant 0 : index
    %26 = vector.load %arg9[%c0_31, %c0_32] : memref<10x3xbf16, #tpu.memory_space<vmem>>, vector<10x3xbf16>
    %cst_33 = arith.constant dense<0.000000e+00> : vector<512x3xf32>
    %27 = tpu.matmul %25, %26, %cst_33 {dimension_numbers = #tpu.dot_dimension_numbers<[1], [0], [0], [1], [0, 0, 1, 1], [], []>} : vector<512x10xbf16>, vector<10x3xbf16>, vector<512x3xf32> -> vector<512x3xf32>
    %cst_34 = arith.constant 0.000000e+00 : f32
    %28 = vector.broadcast %cst_34 : f32 to vector<512x3xf32>
    %29 = arith.subf %28, %27 : vector<512x3xf32>
    %30 = math.exp %29 : vector<512x3xf32>
    %cst_35 = arith.constant 1.000000e+00 : f32
    %31 = vector.broadcast %cst_35 : f32 to vector<512x3xf32>
    %32 = arith.addf %31, %30 : vector<512x3xf32>
    %33 = tpu.reciprocal %32 {approx = true} : vector<512x3xf32> -> vector<512x3xf32>
    %34 = vector.extract_strided_slice %33 {offsets = [0, 0], sizes = [512, 1], strides = [1, 1]} : vector<512x3xf32> to vector<512x1xf32>
    %35 = vector.broadcast %34 : vector<512x1xf32> to vector<512x64xf32>
    %36 = arith.mulf %35, %5 : vector<512x64xf32>
    %37 = vector.extract_strided_slice %33 {offsets = [0, 1], sizes = [512, 1], strides = [1, 1]} : vector<512x3xf32> to vector<512x1xf32>
    %38 = vector.broadcast %37 : vector<512x1xf32> to vector<512x64xf32>
    %39 = arith.mulf %38, %7 : vector<512x64xf32>
    %40 = arith.addf %36, %39 : vector<512x64xf32>
    %41 = vector.extract_strided_slice %33 {offsets = [0, 2], sizes = [512, 1], strides = [1, 1]} : vector<512x3xf32> to vector<512x1xf32>
    %42 = vector.broadcast %41 : vector<512x1xf32> to vector<512x64xf32>
    %43 = arith.mulf %42, %9 : vector<512x64xf32>
    %44 = arith.addf %40, %43 : vector<512x64xf32>
    %45 = arith.addf %44, %11 : vector<512x64xf32>
    %cst_36 = arith.constant 0.000000e+00 : f32
    %46 = vector.broadcast %cst_36 : f32 to vector<512x64xf32>
    %47 = arith.maximumf %45, %46 : vector<512x64xf32>
    %48 = arith.truncf %47 : vector<512x64xf32> to vector<512x64xbf16>
    %c0_37 = arith.constant 0 : index
    %c0_38 = arith.constant 0 : index
    %49 = vector.load %arg14[%c0_37, %c0_38] : memref<64x64xbf16, #tpu.memory_space<vmem>>, vector<64x64xbf16>
    %cst_39 = arith.constant dense<0.000000e+00> : vector<512x64xf32>
    %50 = tpu.matmul %48, %49, %cst_39 {dimension_numbers = #tpu.dot_dimension_numbers<[1], [0], [0], [1], [0, 0, 1, 1], [], []>} : vector<512x64xbf16>, vector<64x64xbf16>, vector<512x64xf32> -> vector<512x64xf32>
    %51 = arith.truncf %50 : vector<512x64xf32> to vector<512x64xbf16>
    %c0_40 = arith.constant 0 : index
    %c0_41 = arith.constant 0 : index
    %52 = vector.load %arg15[%c0_40, %c0_41] : memref<512x64xbf16, #tpu.memory_space<vmem>>, vector<512x64xbf16>
    tpu.vector_store %arg15[%c0_40, %c0_41], %51 {strides = array<i32>} : memref<512x64xbf16, #tpu.memory_space<vmem>>, vector<512x64xbf16>,
    return
  }
  func.func @transform_0(%arg0: i32) -> (i32, i32) {
    %c0_i32 = arith.constant 0 : i32
    %c0_i32_0 = arith.constant 0 : i32
    return %arg0, %c0_i32 : i32, i32
  }
  func.func @transform_1(%arg0: i32) -> (i32, i32) {
    %c0_i32 = arith.constant 0 : i32
    %c0_i32_0 = arith.constant 0 : i32
    return %arg0, %c0_i32 : i32, i32
  }
  func.func @transform_2(%arg0: i32) -> (i32, i32) {
    %c0_i32 = arith.constant 0 : i32
    %c0_i32_0 = arith.constant 0 : i32
    return %arg0, %c0_i32 : i32, i32
  }
  func.func @transform_3(%arg0: i32) -> (i32, i32) {
    %c0_i32 = arith.constant 0 : i32
    %c0_i32_0 = arith.constant 0 : i32
    return %arg0, %c0_i32 : i32, i32
  }
  func.func @transform_4(%arg0: i32) -> (i32, i32) {
    %c0_i32 = arith.constant 0 : i32
    %c0_i32_0 = arith.constant 0 : i32
    %c0_i32_1 = arith.constant 0 : i32
    return %c0_i32, %c0_i32_0 : i32, i32
  }
  func.func @transform_5(%arg0: i32) -> (i32, i32) {
    %c0_i32 = arith.constant 0 : i32
    %c0_i32_0 = arith.constant 0 : i32
    %c0_i32_1 = arith.constant 0 : i32
    return %c0_i32, %c0_i32_0 : i32, i32
  }
  func.func @transform_6(%arg0: i32) -> (i32, i32) {
    %c0_i32 = arith.constant 0 : i32
    %c0_i32_0 = arith.constant 0 : i32
    %c0_i32_1 = arith.constant 0 : i32
    return %c0_i32, %c0_i32_0 : i32, i32
  }
  func.func @transform_7(%arg0: i32) -> (i32, i32) {
    %c0_i32 = arith.constant 0 : i32
    %c0_i32_0 = arith.constant 0 : i32
    %c0_i32_1 = arith.constant 0 : i32
    return %c0_i32, %c0_i32_0 : i32, i32
  }
  func.func @transform_8(%arg0: i32) -> (i32, i32) {
    %c0_i32 = arith.constant 0 : i32
    %c0_i32_0 = arith.constant 0 : i32
    %c0_i32_1 = arith.constant 0 : i32
    return %c0_i32, %c0_i32_0 : i32, i32
  }
  func.func @transform_9(%arg0: i32) -> (i32, i32) {
    %c0_i32 = arith.constant 0 : i32
    %c0_i32_0 = arith.constant 0 : i32
    %c0_i32_1 = arith.constant 0 : i32
    return %c0_i32, %c0_i32_0 : i32, i32
  }
  func.func @transform_10(%arg0: i32) -> (i32, i32) {
    %c0_i32 = arith.constant 0 : i32
    %c0_i32_0 = arith.constant 0 : i32
    %c0_i32_1 = arith.constant 0 : i32
    return %c0_i32, %c0_i32_0 : i32, i32
  }
  func.func @transform_11(%arg0: i32) -> (i32, i32) {
    %c0_i32 = arith.constant 0 : i32
    %c0_i32_0 = arith.constant 0 : i32
    %c0_i32_1 = arith.constant 0 : i32
    return %c0_i32, %c0_i32_0 : i32, i32
  }
  func.func @transform_12(%arg0: i32) -> (i32, i32) {
    %c0_i32 = arith.constant 0 : i32
    %c0_i32_0 = arith.constant 0 : i32
    %c0_i32_1 = arith.constant 0 : i32
    return %c0_i32, %c0_i32_0 : i32, i32
  }
  func.func @transform_13(%arg0: i32) -> (i32, i32) {
    %c0_i32 = arith.constant 0 : i32
    %c0_i32_0 = arith.constant 0 : i32
    %c0_i32_1 = arith.constant 0 : i32
    return %c0_i32, %c0_i32_0 : i32, i32
  }
  func.func @transform_14(%arg0: i32) -> (i32, i32) {
    %c0_i32 = arith.constant 0 : i32
    %c0_i32_0 = arith.constant 0 : i32
    return %arg0, %c0_i32 : i32, i32
  }
}

</mosaic_0001>

<llo_original>
// kernel: tpu_custom_call.1
$region0: #{tpu_custom_call.1}
  #allocation0 [shape = 'u32[]', space=smem, size = 0x4, offset = 0x4, fixed_abs, tag = 'smem constant byte address 0x4 - core index']
  #allocation1 [shape = 'u32[144,128]{1,0:T(1,128)}', space=vmem, size = 0x12000, scoped, tag = 'internal scratch']
  %s0 = inlined_call_operand.vmem [shape: bf16[512,64], index: 0, kind: input, shape index: {}]
  %s1 = inlined_call_operand.vmem [shape: bf16[512,64], index: 1, kind: input, shape index: {}]
  %s2 = inlined_call_operand.vmem [shape: bf16[512,64], index: 2, kind: input, shape index: {}]
  %s3 = inlined_call_operand.vmem [shape: bf16[512,4], index: 3, kind: input, shape index: {}]
  %s4 = inlined_call_operand.vmem [shape: bf16[64,10], index: 4, kind: input, shape index: {}]
  %s5 = inlined_call_operand.vmem [shape: bf16[64,10], index: 5, kind: input, shape index: {}]
  %s6 = inlined_call_operand.vmem [shape: bf16[64,10], index: 6, kind: input, shape index: {}]
  %s7 = inlined_call_operand.vmem [shape: bf16[4,10], index: 7, kind: input, shape index: {}]
  %s8 = inlined_call_operand.vmem [shape: bf16[10,3], index: 8, kind: input, shape index: {}]
  %s9 = inlined_call_operand.vmem [shape: bf16[64,64], index: 9, kind: input, shape index: {}]
  %s10 = inlined_call_operand.vmem [shape: bf16[64,64], index: 10, kind: input, shape index: {}]
  %s11 = inlined_call_operand.vmem [shape: bf16[64,64], index: 11, kind: input, shape index: {}]
  %s12 = inlined_call_operand.vmem [shape: bf16[4,64], index: 12, kind: input, shape index: {}]
  %s13 = inlined_call_operand.vmem [shape: bf16[64,64], index: 13, kind: input, shape index: {}]
  %s14 = inlined_call_operand.vmem [shape: bf16[512,64], index: 14, kind: output, shape index: {}]
  %s15 = sld [smem:[#allocation0]]
  $region66: #{tpu_custom_call.1} parent=0
    _
  %s17 = ssub.s32 1, %s15
  %s18 = scalar_select 0, %s17, %s15
  // Predicated region
  $region2: #{tpu_custom_call.1} parent=0 // pred_check
    _
  $region3: #{tpu_custom_call.1} parent=0 // pred_check_branch
    %20 = sbr.rel (0) target = $region5
  $region4: #{tpu_custom_call.1} parent=0 // pred_region
    _
  $region5: #{tpu_custom_call.1} parent=0 // pred_fallthru
    _
  // Predicated region
  $region6: #{tpu_custom_call.1} parent=0 // pred_check
    _
  $region7: #{tpu_custom_call.1} parent=0 // pred_check_branch
    %22 = sbr.rel (0) target = $region9
  $region8: #{tpu_custom_call.1} parent=0 // pred_region
    _
  $region9: #{tpu_custom_call.1} parent=0 // pred_fallthru
    _
  // Predicated region
  $region10: #{tpu_custom_call.1} parent=0 // pred_check
    _
  $region11: #{tpu_custom_call.1} parent=0 // pred_check_branch
    %24 = sbr.rel (0) target = $region13
  $region12: #{tpu_custom_call.1} parent=0 // pred_region
    _
  $region13: #{tpu_custom_call.1} parent=0 // pred_fallthru
    _
  // Predicated region
  $region14: #{tpu_custom_call.1} parent=0 // pred_check
    _
  $region15: #{tpu_custom_call.1} parent=0 // pred_check_branch
    %26 = sbr.rel (0) target = $region17
  $region16: #{tpu_custom_call.1} parent=0 // pred_region
    _
  $region17: #{tpu_custom_call.1} parent=0 // pred_fallthru
    _
  // Predicated region
  $region18: #{tpu_custom_call.1} parent=0 // pred_check
    _
  $region19: #{tpu_custom_call.1} parent=0 // pred_check_branch
    %28 = sbr.rel (0) target = $region21
  $region20: #{tpu_custom_call.1} parent=0 // pred_region
    _
  $region21: #{tpu_custom_call.1} parent=0 // pred_fallthru
    _
  // Predicated region
  $region22: #{tpu_custom_call.1} parent=0 // pred_check
    _
  $region23: #{tpu_custom_call.1} parent=0 // pred_check_branch
    %30 = sbr.rel (0) target = $region25
  $region24: #{tpu_custom_call.1} parent=0 // pred_region
    _
  $region25: #{tpu_custom_call.1} parent=0 // pred_fallthru
    _
  // Predicated region
  $region26: #{tpu_custom_call.1} parent=0 // pred_check
    _
  $region27: #{tpu_custom_call.1} parent=0 // pred_check_branch
    %32 = sbr.rel (0) target = $region29
  $region28: #{tpu_custom_call.1} parent=0 // pred_region
    _
  $region29: #{tpu_custom_call.1} parent=0 // pred_fallthru
    _
  // Predicated region
  $region30: #{tpu_custom_call.1} parent=0 // pred_check
    _
  $region31: #{tpu_custom_call.1} parent=0 // pred_check_branch
    %34 = sbr.rel (0) target = $region33
  $region32: #{tpu_custom_call.1} parent=0 // pred_region
    _
  $region33: #{tpu_custom_call.1} parent=0 // pred_fallthru
    _
  // Predicated region
  $region34: #{tpu_custom_call.1} parent=0 // pred_check
    _
  $region35: #{tpu_custom_call.1} parent=0 // pred_check_branch
    %36 = sbr.rel (0) target = $region37
  $region36: #{tpu_custom_call.1} parent=0 // pred_region
    _
  $region37: #{tpu_custom_call.1} parent=0 // pred_fallthru
    _
  // Predicated region
  $region38: #{tpu_custom_call.1} parent=0 // pred_check
    _
  $region39: #{tpu_custom_call.1} parent=0 // pred_check_branch
    %38 = sbr.rel (0) target = $region41
  $region40: #{tpu_custom_call.1} parent=0 // pred_region
    _
  $region41: #{tpu_custom_call.1} parent=0 // pred_fallthru
    _
  // Predicated region
  $region42: #{tpu_custom_call.1} parent=0 // pred_check
    _
  $region43: #{tpu_custom_call.1} parent=0 // pred_check_branch
    %40 = sbr.rel (0) target = $region45
  $region44: #{tpu_custom_call.1} parent=0 // pred_region
    _
  $region45: #{tpu_custom_call.1} parent=0 // pred_fallthru
    _
  // Predicated region
  $region46: #{tpu_custom_call.1} parent=0 // pred_check
    _
  $region47: #{tpu_custom_call.1} parent=0 // pred_check_branch
    %42 = sbr.rel (0) target = $region49
  $region48: #{tpu_custom_call.1} parent=0 // pred_region
    _
  $region49: #{tpu_custom_call.1} parent=0 // pred_fallthru
    _
  // Predicated region
  $region50: #{tpu_custom_call.1} parent=0 // pred_check
    _
  $region51: #{tpu_custom_call.1} parent=0 // pred_check_branch
    %44 = sbr.rel (0) target = $region53
  $region52: #{tpu_custom_call.1} parent=0 // pred_region
    _
  $region53: #{tpu_custom_call.1} parent=0 // pred_fallthru
    _
  // Predicated region
  $region54: #{tpu_custom_call.1} parent=0 // pred_check
    _
  $region55: #{tpu_custom_call.1} parent=0 // pred_check_branch
    %46 = sbr.rel (0) target = $region57
  $region56: #{tpu_custom_call.1} parent=0 // pred_region
    _
  $region57: #{tpu_custom_call.1} parent=0 // pred_fallthru
    _
  %v48 = vld [vmem:[%s0] sm:$0xf]
  %v49 = vld [vmem:[%s0 + $0x4] sm:$0xf]
  %v50 = vld [vmem:[%s0 + $0x8] sm:$0xf]
  %v51 = vld [vmem:[%s0 + $0xc] sm:$0xf]
  %v52 = vld [vmem:[%s0 + $0x10] sm:$0xf]
  %v53 = vld [vmem:[%s0 + $0x14] sm:$0xf]
  %v54 = vld [vmem:[%s0 + $0x18] sm:$0xf]
  %v55 = vld [vmem:[%s0 + $0x1c] sm:$0xf]
  %v56 = vld [vmem:[%s0 + $0x20] sm:$0xf]
  %v57 = vld [vmem:[%s0 + $0x24] sm:$0xf]
  %v58 = vld [vmem:[%s0 + $0x28] sm:$0xf]
  %v59 = vld [vmem:[%s0 + $0x2c] sm:$0xf]
  %v60 = vld [vmem:[%s0 + $0x30] sm:$0xf]
  %v61 = vld [vmem:[%s0 + $0x34] sm:$0xf]
  %v62 = vld [vmem:[%s0 + $0x38] sm:$0xf]
  %v63 = vld [vmem:[%s0 + $0x3c] sm:$0xf]
  %v64 = vld [vmem:[%s0 + $0x40] sm:$0xf]
  %v65 = vld [vmem:[%s0 + $0x44] sm:$0xf]
  %v66 = vld [vmem:[%s0 + $0x48] sm:$0xf]
  %v67 = vld [vmem:[%s0 + $0x4c] sm:$0xf]
  %v68 = vld [vmem:[%s0 + $0x50] sm:$0xf]
  %v69 = vld [vmem:[%s0 + $0x54] sm:$0xf]
  %v70 = vld [vmem:[%s0 + $0x58] sm:$0xf]
  %v71 = vld [vmem:[%s0 + $0x5c] sm:$0xf]
  %v72 = vld [vmem:[%s0 + $0x60] sm:$0xf]
  %v73 = vld [vmem:[%s0 + $0x64] sm:$0xf]
  %v74 = vld [vmem:[%s0 + $0x68] sm:$0xf]
  %v75 = vld [vmem:[%s0 + $0x6c] sm:$0xf]
  %v76 = vld [vmem:[%s0 + $0x70] sm:$0xf]
  %v77 = vld [vmem:[%s0 + $0x74] sm:$0xf]
  %v78 = vld [vmem:[%s0 + $0x78] sm:$0xf]
  %v79 = vld [vmem:[%s0 + $0x7c] sm:$0xf]
  %v80 = vld [vmem:[%s0 + $0x80] sm:$0xf]
  %v81 = vld [vmem:[%s0 + $0x84] sm:$0xf]
  %v82 = vld [vmem:[%s0 + $0x88] sm:$0xf]
  %v83 = vld [vmem:[%s0 + $0x8c] sm:$0xf]
  %v84 = vld [vmem:[%s0 + $0x90] sm:$0xf]
  %v85 = vld [vmem:[%s0 + $0x94] sm:$0xf]
  %v86 = vld [vmem:[%s0 + $0x98] sm:$0xf]
  %v87 = vld [vmem:[%s0 + $0x9c] sm:$0xf]
  %v88 = vld [vmem:[%s0 + $0xa0] sm:$0xf]
  %v89 = vld [vmem:[%s0 + $0xa4] sm:$0xf]
  %v90 = vld [vmem:[%s0 + $0xa8] sm:$0xf]
  %v91 = vld [vmem:[%s0 + $0xac] sm:$0xf]
  %v92 = vld [vmem:[%s0 + $0xb0] sm:$0xf]
  %v93 = vld [vmem:[%s0 + $0xb4] sm:$0xf]
  %v94 = vld [vmem:[%s0 + $0xb8] sm:$0xf]
  %v95 = vld [vmem:[%s0 + $0xbc] sm:$0xf]
  %v96 = vld [vmem:[%s0 + $0xc0] sm:$0xf]
  %v97 = vld [vmem:[%s0 + $0xc4] sm:$0xf]
  %v98 = vld [vmem:[%s0 + $0xc8] sm:$0xf]
  %v99 = vld [vmem:[%s0 + $0xcc] sm:$0xf]
  %v100 = vld [vmem:[%s0 + $0xd0] sm:$0xf]
  %v101 = vld [vmem:[%s0 + $0xd4] sm:$0xf]
  %v102 = vld [vmem:[%s0 + $0xd8] sm:$0xf]
  %v103 = vld [vmem:[%s0 + $0xdc] sm:$0xf]
  %v104 = vld [vmem:[%s0 + $0xe0] sm:$0xf]
  %v105 = vld [vmem:[%s0 + $0xe4] sm:$0xf]
  %v106 = vld [vmem:[%s0 + $0xe8] sm:$0xf]
  %v107 = vld [vmem:[%s0 + $0xec] sm:$0xf]
  %v108 = vld [vmem:[%s0 + $0xf0] sm:$0xf]
  %v109 = vld [vmem:[%s0 + $0xf4] sm:$0xf]
  %v110 = vld [vmem:[%s0 + $0xf8] sm:$0xf]
  %v111 = vld [vmem:[%s0 + $0xfc] sm:$0xf]
  %v112 = vld [vmem:[%s1] sm:$0xf]
  %v113 = vld [vmem:[%s1 + $0x4] sm:$0xf]
  %v114 = vld [vmem:[%s1 + $0x8] sm:$0xf]
  %v115 = vld [vmem:[%s1 + $0xc] sm:$0xf]
  %v116 = vld [vmem:[%s1 + $0x10] sm:$0xf]
  %v117 = vld [vmem:[%s1 + $0x14] sm:$0xf]
  %v118 = vld [vmem:[%s1 + $0x18] sm:$0xf]
  %v119 = vld [vmem:[%s1 + $0x1c] sm:$0xf]
  %v120 = vld [vmem:[%s1 + $0x20] sm:$0xf]
  %v121 = vld [vmem:[%s1 + $0x24] sm:$0xf]
  %v122 = vld [vmem:[%s1 + $0x28] sm:$0xf]
  %v123 = vld [vmem:[%s1 + $0x2c] sm:$0xf]
  %v124 = vld [vmem:[%s1 + $0x30] sm:$0xf]
  %v125 = vld [vmem:[%s1 + $0x34] sm:$0xf]
  %v126 = vld [vmem:[%s1 + $0x38] sm:$0xf]
  %v127 = vld [vmem:[%s1 + $0x3c] sm:$0xf]
  %v128 = vld [vmem:[%s1 + $0x40] sm:$0xf]
  %v129 = vld [vmem:[%s1 + $0x44] sm:$0xf]
  %v130 = vld [vmem:[%s1 + $0x48] sm:$0xf]
  %v131 = vld [vmem:[%s1 + $0x4c] sm:$0xf]
  %v132 = vld [vmem:[%s1 + $0x50] sm:$0xf]
  %v133 = vld [vmem:[%s1 + $0x54] sm:$0xf]
  %v134 = vld [vmem:[%s1 + $0x58] sm:$0xf]
  %v135 = vld [vmem:[%s1 + $0x5c] sm:$0xf]
  %v136 = vld [vmem:[%s1 + $0x60] sm:$0xf]
  %v137 = vld [vmem:[%s1 + $0x64] sm:$0xf]
  %v138 = vld [vmem:[%s1 + $0x68] sm:$0xf]
  %v139 = vld [vmem:[%s1 + $0x6c] sm:$0xf]
  %v140 = vld [vmem:[%s1 + $0x70] sm:$0xf]
  %v141 = vld [vmem:[%s1 + $0x74] sm:$0xf]
  %v142 = vld [vmem:[%s1 + $0x78] sm:$0xf]
  %v143 = vld [vmem:[%s1 + $0x7c] sm:$0xf]
  %v144 = vld [vmem:[%s1 + $0x80] sm:$0xf]
  %v145 = vld [vmem:[%s1 + $0x84] sm:$0xf]
  %v146 = vld [vmem:[%s1 + $0x88] sm:$0xf]
  %v147 = vld [vmem:[%s1 + $0x8c] sm:$0xf]
  %v148 = vld [vmem:[%s1 + $0x90] sm:$0xf]
  %v149 = vld [vmem:[%s1 + $0x94] sm:$0xf]
  %v150 = vld [vmem:[%s1 + $0x98] sm:$0xf]
  %v151 = vld [vmem:[%s1 + $0x9c] sm:$0xf]
  %v152 = vld [vmem:[%s1 + $0xa0] sm:$0xf]
  %v153 = vld [vmem:[%s1 + $0xa4] sm:$0xf]
  %v154 = vld [vmem:[%s1 + $0xa8] sm:$0xf]
  %v155 = vld [vmem:[%s1 + $0xac] sm:$0xf]
  %v156 = vld [vmem:[%s1 + $0xb0] sm:$0xf]
  %v157 = vld [vmem:[%s1 + $0xb4] sm:$0xf]
  %v158 = vld [vmem:[%s1 + $0xb8] sm:$0xf]
  %v159 = vld [vmem:[%s1 + $0xbc] sm:$0xf]
  %v160 = vld [vmem:[%s1 + $0xc0] sm:$0xf]
  %v161 = vld [vmem:[%s1 + $0xc4] sm:$0xf]
  %v162 = vld [vmem:[%s1 + $0xc8] sm:$0xf]
  %v163 = vld [vmem:[%s1 + $0xcc] sm:$0xf]
  %v164 = vld [vmem:[%s1 + $0xd0] sm:$0xf]
  %v165 = vld [vmem:[%s1 + $0xd4] sm:$0xf]
  %v166 = vld [vmem:[%s1 + $0xd8] sm:$0xf]
  %v167 = vld [vmem:[%s1 + $0xdc] sm:$0xf]
  %v168 = vld [vmem:[%s1 + $0xe0] sm:$0xf]
  %v169 = vld [vmem:[%s1 + $0xe4] sm:$0xf]
  %v170 = vld [vmem:[%s1 + $0xe8] sm:$0xf]
  %v171 = vld [vmem:[%s1 + $0xec] sm:$0xf]
  %v172 = vld [vmem:[%s1 + $0xf0] sm:$0xf]
  %v173 = vld [vmem:[%s1 + $0xf4] sm:$0xf]
  %v174 = vld [vmem:[%s1 + $0xf8] sm:$0xf]
  %v175 = vld [vmem:[%s1 + $0xfc] sm:$0xf]
  %v176 = vld [vmem:[%s2] sm:$0xf]
  %v177 = vld [vmem:[%s2 + $0x4] sm:$0xf]
  %v178 = vld [vmem:[%s2 + $0x8] sm:$0xf]
  %v179 = vld [vmem:[%s2 + $0xc] sm:$0xf]
  %v180 = vld [vmem:[%s2 + $0x10] sm:$0xf]
  %v181 = vld [vmem:[%s2 + $0x14] sm:$0xf]
  %v182 = vld [vmem:[%s2 + $0x18] sm:$0xf]
  %v183 = vld [vmem:[%s2 + $0x1c] sm:$0xf]
  %v184 = vld [vmem:[%s2 + $0x20] sm:$0xf]
  %v185 = vld [vmem:[%s2 + $0x24] sm:$0xf]
  %v186 = vld [vmem:[%s2 + $0x28] sm:$0xf]
  %v187 = vld [vmem:[%s2 + $0x2c] sm:$0xf]
  %v188 = vld [vmem:[%s2 + $0x30] sm:$0xf]
  %v189 = vld [vmem:[%s2 + $0x34] sm:$0xf]
  %v190 = vld [vmem:[%s2 + $0x38] sm:$0xf]
  %v191 = vld [vmem:[%s2 + $0x3c] sm:$0xf]
  %v192 = vld [vmem:[%s2 + $0x40] sm:$0xf]
  %v193 = vld [vmem:[%s2 + $0x44] sm:$0xf]
  %v194 = vld [vmem:[%s2 + $0x48] sm:$0xf]
  %v195 = vld [vmem:[%s2 + $0x4c] sm:$0xf]
  %v196 = vld [vmem:[%s2 + $0x50] sm:$0xf]
  %v197 = vld [vmem:[%s2 + $0x54] sm:$0xf]
  %v198 = vld [vmem:[%s2 + $0x58] sm:$0xf]
  %v199 = vld [vmem:[%s2 + $0x5c] sm:$0xf]
  %v200 = vld [vmem:[%s2 + $0x60] sm:$0xf]
  %v201 = vld [vmem:[%s2 + $0x64] sm:$0xf]
  %v202 = vld [vmem:[%s2 + $0x68] sm:$0xf]
  %v203 = vld [vmem:[%s2 + $0x6c] sm:$0xf]
  %v204 = vld [vmem:[%s2 + $0x70] sm:$0xf]
  %v205 = vld [vmem:[%s2 + $0x74] sm:$0xf]
  %v206 = vld [vmem:[%s2 + $0x78] sm:$0xf]
  %v207 = vld [vmem:[%s2 + $0x7c] sm:$0xf]
  %v208 = vld [vmem:[%s2 + $0x80] sm:$0xf]
  %v209 = vld [vmem:[%s2 + $0x84] sm:$0xf]
  %v210 = vld [vmem:[%s2 + $0x88] sm:$0xf]
  %v211 = vld [vmem:[%s2 + $0x8c] sm:$0xf]
  %v212 = vld [vmem:[%s2 + $0x90] sm:$0xf]
  %v213 = vld [vmem:[%s2 + $0x94] sm:$0xf]
  %v214 = vld [vmem:[%s2 + $0x98] sm:$0xf]
  %v215 = vld [vmem:[%s2 + $0x9c] sm:$0xf]
  %v216 = vld [vmem:[%s2 + $0xa0] sm:$0xf]
  %v217 = vld [vmem:[%s2 + $0xa4] sm:$0xf]
  %v218 = vld [vmem:[%s2 + $0xa8] sm:$0xf]
  %v219 = vld [vmem:[%s2 + $0xac] sm:$0xf]
  %v220 = vld [vmem:[%s2 + $0xb0] sm:$0xf]
  %v221 = vld [vmem:[%s2 + $0xb4] sm:$0xf]
  %v222 = vld [vmem:[%s2 + $0xb8] sm:$0xf]
  %v223 = vld [vmem:[%s2 + $0xbc] sm:$0xf]
  %v224 = vld [vmem:[%s2 + $0xc0] sm:$0xf]
  %v225 = vld [vmem:[%s2 + $0xc4] sm:$0xf]
  %v226 = vld [vmem:[%s2 + $0xc8] sm:$0xf]
  %v227 = vld [vmem:[%s2 + $0xcc] sm:$0xf]
  %v228 = vld [vmem:[%s2 + $0xd0] sm:$0xf]
  %v229 = vld [vmem:[%s2 + $0xd4] sm:$0xf]
  %v230 = vld [vmem:[%s2 + $0xd8] sm:$0xf]
  %v231 = vld [vmem:[%s2 + $0xdc] sm:$0xf]
  %v232 = vld [vmem:[%s2 + $0xe0] sm:$0xf]
  %v233 = vld [vmem:[%s2 + $0xe4] sm:$0xf]
  %v234 = vld [vmem:[%s2 + $0xe8] sm:$0xf]
  %v235 = vld [vmem:[%s2 + $0xec] sm:$0xf]
  %v236 = vld [vmem:[%s2 + $0xf0] sm:$0xf]
  %v237 = vld [vmem:[%s2 + $0xf4] sm:$0xf]
  %v238 = vld [vmem:[%s2 + $0xf8] sm:$0xf]
  %v239 = vld [vmem:[%s2 + $0xfc] sm:$0xf]
  %v240 = vld [vmem:[%s3] sm:$0xf]
  %v241 = vld [vmem:[%s3 + $0x4] sm:$0xf]
  %v242 = vld [vmem:[%s3 + $0x8] sm:$0xf]
  %v243 = vld [vmem:[%s3 + $0xc] sm:$0xf]
  %v244 = vld [vmem:[%s3 + $0x10] sm:$0xf]
  %v245 = vld [vmem:[%s3 + $0x14] sm:$0xf]
  %v246 = vld [vmem:[%s3 + $0x18] sm:$0xf]
  %v247 = vld [vmem:[%s3 + $0x1c] sm:$0xf]
  %v248 = vld [vmem:[%s3 + $0x20] sm:$0xf]
  %v249 = vld [vmem:[%s3 + $0x24] sm:$0xf]
  %v250 = vld [vmem:[%s3 + $0x28] sm:$0xf]
  %v251 = vld [vmem:[%s3 + $0x2c] sm:$0xf]
  %v252 = vld [vmem:[%s3 + $0x30] sm:$0xf]
  %v253 = vld [vmem:[%s3 + $0x34] sm:$0xf]
  %v254 = vld [vmem:[%s3 + $0x38] sm:$0xf]
  %v255 = vld [vmem:[%s3 + $0x3c] sm:$0xf]
  %v256 = vld [vmem:[%s3 + $0x40] sm:$0xf]
  %v257 = vld [vmem:[%s3 + $0x44] sm:$0xf]
  %v258 = vld [vmem:[%s3 + $0x48] sm:$0xf]
  %v259 = vld [vmem:[%s3 + $0x4c] sm:$0xf]
  %v260 = vld [vmem:[%s3 + $0x50] sm:$0xf]
  %v261 = vld [vmem:[%s3 + $0x54] sm:$0xf]
  %v262 = vld [vmem:[%s3 + $0x58] sm:$0xf]
  %v263 = vld [vmem:[%s3 + $0x5c] sm:$0xf]
  %v264 = vld [vmem:[%s3 + $0x60] sm:$0xf]
  %v265 = vld [vmem:[%s3 + $0x64] sm:$0xf]
  %v266 = vld [vmem:[%s3 + $0x68] sm:$0xf]
  %v267 = vld [vmem:[%s3 + $0x6c] sm:$0xf]
  %v268 = vld [vmem:[%s3 + $0x70] sm:$0xf]
  %v269 = vld [vmem:[%s3 + $0x74] sm:$0xf]
  %v270 = vld [vmem:[%s3 + $0x78] sm:$0xf]
  %v271 = vld [vmem:[%s3 + $0x7c] sm:$0xf]
  %v272 = vld [vmem:[%s3 + $0x80] sm:$0xf]
  %v273 = vld [vmem:[%s3 + $0x84] sm:$0xf]
  %v274 = vld [vmem:[%s3 + $0x88] sm:$0xf]
  %v275 = vld [vmem:[%s3 + $0x8c] sm:$0xf]
  %v276 = vld [vmem:[%s3 + $0x90] sm:$0xf]
  %v277 = vld [vmem:[%s3 + $0x94] sm:$0xf]
  %v278 = vld [vmem:[%s3 + $0x98] sm:$0xf]
  %v279 = vld [vmem:[%s3 + $0x9c] sm:$0xf]
  %v280 = vld [vmem:[%s3 + $0xa0] sm:$0xf]
  %v281 = vld [vmem:[%s3 + $0xa4] sm:$0xf]
  %v282 = vld [vmem:[%s3 + $0xa8] sm:$0xf]
  %v283 = vld [vmem:[%s3 + $0xac] sm:$0xf]
  %v284 = vld [vmem:[%s3 + $0xb0] sm:$0xf]
  %v285 = vld [vmem:[%s3 + $0xb4] sm:$0xf]
  %v286 = vld [vmem:[%s3 + $0xb8] sm:$0xf]
  %v287 = vld [vmem:[%s3 + $0xbc] sm:$0xf]
  %v288 = vld [vmem:[%s3 + $0xc0] sm:$0xf]
  %v289 = vld [vmem:[%s3 + $0xc4] sm:$0xf]
  %v290 = vld [vmem:[%s3 + $0xc8] sm:$0xf]
  %v291 = vld [vmem:[%s3 + $0xcc] sm:$0xf]
  %v292 = vld [vmem:[%s3 + $0xd0] sm:$0xf]
  %v293 = vld [vmem:[%s3 + $0xd4] sm:$0xf]
  %v294 = vld [vmem:[%s3 + $0xd8] sm:$0xf]
  %v295 = vld [vmem:[%s3 + $0xdc] sm:$0xf]
  %v296 = vld [vmem:[%s3 + $0xe0] sm:$0xf]
  %v297 = vld [vmem:[%s3 + $0xe4] sm:$0xf]
  %v298 = vld [vmem:[%s3 + $0xe8] sm:$0xf]
  %v299 = vld [vmem:[%s3 + $0xec] sm:$0xf]
  %v300 = vld [vmem:[%s3 + $0xf0] sm:$0xf]
  %v301 = vld [vmem:[%s3 + $0xf4] sm:$0xf]
  %v302 = vld [vmem:[%s3 + $0xf8] sm:$0xf]
  %v303 = vld [vmem:[%s3 + $0xfc] sm:$0xf]
  %v304 = vld [vmem:[%s9] sm:$0xf]
  %v305 = vld [vmem:[%s9 + $0x4] sm:$0xf]
  %v306 = vld [vmem:[%s9 + $0x8] sm:$0xf]
  %v307 = vld [vmem:[%s9 + $0xc] sm:$0xf]
  %v308 = vld [vmem:[%s9 + $0x10] sm:$0xf]
  %v309 = vld [vmem:[%s9 + $0x14] sm:$0xf]
  %v310 = vld [vmem:[%s9 + $0x18] sm:$0xf]
  %v311 = vld [vmem:[%s9 + $0x1c] sm:$0xf]
  %v376 = vunpack.c.l.b16 %v48
  %v377 = vunpack.c.l.b16 %v49
  %v378 = vunpack.c.l.b16 %v50
  %v379 = vunpack.c.l.b16 %v51
  %v380 = vunpack.c.l.b16 %v52
  %v381 = vunpack.c.l.b16 %v53
  %v382 = vunpack.c.l.b16 %v54
  %v383 = vunpack.c.l.b16 %v55
  %v384 = vunpack.c.l.b16 %v56
  %v385 = vunpack.c.l.b16 %v57
  %v386 = vunpack.c.l.b16 %v58
  %v387 = vunpack.c.l.b16 %v59
  %v388 = vunpack.c.l.b16 %v60
  %v389 = vunpack.c.l.b16 %v61
  %v390 = vunpack.c.l.b16 %v62
  %v391 = vunpack.c.l.b16 %v63
  %v392 = vunpack.c.l.b16 %v64
  %v393 = vunpack.c.l.b16 %v65
  %v394 = vunpack.c.l.b16 %v66
  %v395 = vunpack.c.l.b16 %v67
  %v396 = vunpack.c.l.b16 %v68
  %v397 = vunpack.c.l.b16 %v69
  %v398 = vunpack.c.l.b16 %v70
  %v399 = vunpack.c.l.b16 %v71
  %v400 = vunpack.c.l.b16 %v72
  %v401 = vunpack.c.l.b16 %v73
  %v402 = vunpack.c.l.b16 %v74
  %v403 = vunpack.c.l.b16 %v75
  %v404 = vunpack.c.l.b16 %v76
  %v405 = vunpack.c.l.b16 %v77
  %v406 = vunpack.c.l.b16 %v78
  %v407 = vunpack.c.l.b16 %v79
  %v408 = vunpack.c.l.b16 %v80
  %v409 = vunpack.c.l.b16 %v81
  %v410 = vunpack.c.l.b16 %v82
  %v411 = vunpack.c.l.b16 %v83
  %v412 = vunpack.c.l.b16 %v84
  %v413 = vunpack.c.l.b16 %v85
  %v414 = vunpack.c.l.b16 %v86
  %v415 = vunpack.c.l.b16 %v87
  %v416 = vunpack.c.l.b16 %v88
  %v417 = vunpack.c.l.b16 %v89
  %v418 = vunpack.c.l.b16 %v90
  %v419 = vunpack.c.l.b16 %v91
  %v420 = vunpack.c.l.b16 %v92
  %v421 = vunpack.c.l.b16 %v93
  %v422 = vunpack.c.l.b16 %v94
  %v423 = vunpack.c.l.b16 %v95
  %v424 = vunpack.c.l.b16 %v96
  %v425 = vunpack.c.l.b16 %v97
  %v426 = vunpack.c.l.b16 %v98
  %v427 = vunpack.c.l.b16 %v99
  %v428 = vunpack.c.l.b16 %v100
  %v429 = vunpack.c.l.b16 %v101
  %v430 = vunpack.c.l.b16 %v102
  %v431 = vunpack.c.l.b16 %v103
  %v432 = vunpack.c.l.b16 %v104
  %v433 = vunpack.c.l.b16 %v105
  %v434 = vunpack.c.l.b16 %v106
  %v435 = vunpack.c.l.b16 %v107
  %v436 = vunpack.c.l.b16 %v108
  %v437 = vunpack.c.l.b16 %v109
  %v438 = vunpack.c.l.b16 %v110
  %v439 = vunpack.c.l.b16 %v111
  %v440 = vpack.c.b16 %v377, %v376
  %v441 = vpack.c.b16 %v379, %v378
  %v442 = vpack.c.b16 %v381, %v380
  %v443 = vpack.c.b16 %v383, %v382
  %v444 = vpack.c.b16 %v385, %v384
  %v445 = vpack.c.b16 %v387, %v386
  %v446 = vpack.c.b16 %v389, %v388
  %v447 = vpack.c.b16 %v391, %v390
  %v448 = vpack.c.b16 %v393, %v392
  %v449 = vpack.c.b16 %v395, %v394
  %v450 = vpack.c.b16 %v397, %v396
  %v451 = vpack.c.b16 %v399, %v398
  %v452 = vpack.c.b16 %v401, %v400
  %v453 = vpack.c.b16 %v403, %v402
  %v454 = vpack.c.b16 %v405, %v404
  %v455 = vpack.c.b16 %v407, %v406
  %v456 = vpack.c.b16 %v409, %v408
  %v457 = vpack.c.b16 %v411, %v410
  %v458 = vpack.c.b16 %v413, %v412
  %v459 = vpack.c.b16 %v415, %v414
  %v460 = vpack.c.b16 %v417, %v416
  %v461 = vpack.c.b16 %v419, %v418
  %v462 = vpack.c.b16 %v421, %v420
  %v463 = vpack.c.b16 %v423, %v422
  %v464 = vpack.c.b16 %v425, %v424
  %v465 = vpack.c.b16 %v427, %v426
  %v466 = vpack.c.b16 %v429, %v428
  %v467 = vpack.c.b16 %v431, %v430
  %v468 = vpack.c.b16 %v433, %v432
  %v469 = vpack.c.b16 %v435, %v434
  %v470 = vpack.c.b16 %v437, %v436
  %v471 = vpack.c.b16 %v439, %v438
  %v480 = vunpack.c.l.b16 %v304
  %v481 = vunpack.c.l.b16 %v305
  %v482 = vunpack.c.l.b16 %v306
  %v483 = vunpack.c.l.b16 %v307
  %v484 = vunpack.c.l.b16 %v308
  %v485 = vunpack.c.l.b16 %v309
  %v486 = vunpack.c.l.b16 %v310
  %v487 = vunpack.c.l.b16 %v311
  %v488 = vpack.c.b16 %v481, %v480
  %v489 = vpack.c.b16 %v483, %v482
  %v490 = vpack.c.b16 %v485, %v484
  %v491 = vpack.c.b16 %v487, %v486
  %vm496 = vcmask 523264
  %v498 = vsel %vm496, %v440, 0
  %v501 = vsel %vm496, %v441, 0
  %v504 = vsel %vm496, %v442, 0
  %v507 = vsel %vm496, %v443, 0
  %v510 = vsel %vm496, %v444, 0
  %v513 = vsel %vm496, %v445, 0
  %v516 = vsel %vm496, %v446, 0
  %v519 = vsel %vm496, %v447, 0
  %v522 = vsel %vm496, %v448, 0
  %v525 = vsel %vm496, %v449, 0
  %v528 = vsel %vm496, %v450, 0
  %v531 = vsel %vm496, %v451, 0
  %v534 = vsel %vm496, %v452, 0
  %v537 = vsel %vm496, %v453, 0
  %v540 = vsel %vm496, %v454, 0
  %v543 = vsel %vm496, %v455, 0
  %v546 = vsel %vm496, %v456, 0
  %v549 = vsel %vm496, %v457, 0
  %v552 = vsel %vm496, %v458, 0
  %v555 = vsel %vm496, %v459, 0
  %v558 = vsel %vm496, %v460, 0
  %v561 = vsel %vm496, %v461, 0
  %v564 = vsel %vm496, %v462, 0
  %v567 = vsel %vm496, %v463, 0
  %v570 = vsel %vm496, %v464, 0
  %v573 = vsel %vm496, %v465, 0
  %v576 = vsel %vm496, %v466, 0
  %v579 = vsel %vm496, %v467, 0
  %v582 = vsel %vm496, %v468, 0
  %v585 = vsel %vm496, %v469, 0
  %v588 = vsel %vm496, %v470, 0
  %v591 = vsel %vm496, %v471, 0
  %593 = vmatprep.subr.bf16.mxu0 0
  %594 = vmatpush1.bf16.msra.mxu0 %v488
  %595 = vmatprep.subr.bf16.mxu0 0
  %596 = vmatpush1.bf16.msra.mxu0 %v489
  %597 = vmatprep.subr.bf16.mxu0 0
  %598 = vmatpush1.bf16.msra.mxu0 %v490
  %599 = vmatprep.subr.bf16.mxu0 0
  %600 = vmatpush1.bf16.msra.mxu0 %v491
  %601 = vmatprep.subr.bf16.mxu0 0
  %602 = vmatpush1.bf16.msra.mxu0 0
  %603 = vmatprep.subr.bf16.mxu0 0
  %604 = vmatpush1.bf16.msra.mxu0 0
  %605 = vmatprep.subr.bf16.mxu0 0
  %606 = vmatpush1.bf16.msra.mxu0 0
  %607 = vmatprep.subr.bf16.mxu0 0
  %608 = vmatpush1.bf16.msra.mxu0 0
  %609 = vmatprep.subr.bf16.mxu0 0
  %610 = vmatpush1.bf16.msra.mxu0 0
  %611 = vmatprep.subr.bf16.mxu0 0
  %612 = vmatpush1.bf16.msra.mxu0 0
  %613 = vmatprep.subr.bf16.mxu0 0
  %614 = vmatpush1.bf16.msra.mxu0 0
  %615 = vmatprep.subr.bf16.mxu0 0
  %616 = vmatpush1.bf16.msra.mxu0 0
  %617 = vmatprep.subr.bf16.mxu0 0
  %618 = vmatpush1.bf16.msra.mxu0 0
  %619 = vmatprep.subr.bf16.mxu0 0
  %620 = vmatpush1.bf16.msra.mxu0 0
  %621 = vmatprep.subr.bf16.mxu0 0
  %622 = vmatpush1.bf16.msra.mxu0 0
  %623 = vmatprep.subr.bf16.mxu0 0
  %624 = vmatpush1.bf16.msra.mxu0 0
  %625 = vmatprep.mubr.bf16.mxu0 0
  %626 = vmatmul.mubr.bf16.gmra.mrb[0].mxu0 %v498
  %v627 = vpop.f32.mrb[0].mxu0
  %v628 = vadd.f32 0.0, %v627
  %v629 = vpop.f32.mrb[0].mxu0
  %v630 = vpop.f32.mrb[0].mxu0
  %v631 = vadd.f32 0.0, %v630
  %v632 = vpop.f32.mrb[0].mxu0
  %633 = vmatprep.mubr.bf16.mxu0 0
  %634 = vmatmul.mubr.bf16.gmra.mrb[0].mxu0 %v501
  %v635 = vpop.f32.mrb[0].mxu0
  %v636 = vadd.f32 0.0, %v635
  %v637 = vpop.f32.mrb[0].mxu0
  %v638 = vpop.f32.mrb[0].mxu0
  %v639 = vadd.f32 0.0, %v638
  %v640 = vpop.f32.mrb[0].mxu0
  %641 = vmatprep.mubr.bf16.mxu0 0
  %642 = vmatmul.mubr.bf16.gmra.mrb[0].mxu0 %v504
  %v643 = vpop.f32.mrb[0].mxu0
  %v644 = vadd.f32 0.0, %v643
  %v645 = vpop.f32.mrb[0].mxu0
  %v646 = vpop.f32.mrb[0].mxu0
  %v647 = vadd.f32 0.0, %v646
  %v648 = vpop.f32.mrb[0].mxu0
  %649 = vmatprep.mubr.bf16.mxu0 0
  %650 = vmatmul.mubr.bf16.gmra.mrb[0].mxu0 %v507
  %v651 = vpop.f32.mrb[0].mxu0
  %v652 = vadd.f32 0.0, %v651
  %v653 = vpop.f32.mrb[0].mxu0
  %v654 = vpop.f32.mrb[0].mxu0
  %v655 = vadd.f32 0.0, %v654
  %v656 = vpop.f32.mrb[0].mxu0
  %657 = vmatprep.mubr.bf16.mxu0 0
  %658 = vmatmul.mubr.bf16.gmra.mrb[0].mxu0 %v510
  %v659 = vpop.f32.mrb[0].mxu0
  %v660 = vadd.f32 0.0, %v659
  %v661 = vpop.f32.mrb[0].mxu0
  %v662 = vpop.f32.mrb[0].mxu0
  %v663 = vadd.f32 0.0, %v662
  %v664 = vpop.f32.mrb[0].mxu0
  %665 = vmatprep.mubr.bf16.mxu0 0
  %666 = vmatmul.mubr.bf16.gmra.mrb[0].mxu0 %v513
  %v667 = vpop.f32.mrb[0].mxu0
  %v668 = vadd.f32 0.0, %v667
  %v669 = vpop.f32.mrb[0].mxu0
  %v670 = vpop.f32.mrb[0].mxu0
  %v671 = vadd.f32 0.0, %v670
  %v672 = vpop.f32.mrb[0].mxu0
  %673 = vmatprep.mubr.bf16.mxu0 0
  %674 = vmatmul.mubr.bf16.gmra.mrb[0].mxu0 %v516
  %v675 = vpop.f32.mrb[0].mxu0
  %v676 = vadd.f32 0.0, %v675
  %v677 = vpop.f32.mrb[0].mxu0
  %v678 = vpop.f32.mrb[0].mxu0
  %v679 = vadd.f32 0.0, %v678
  %v680 = vpop.f32.mrb[0].mxu0
  %681 = vmatprep.mubr.bf16.mxu0 0
  %682 = vmatmul.mubr.bf16.gmra.mrb[0].mxu0 %v519
  %v683 = vpop.f32.mrb[0].mxu0
  %v684 = vadd.f32 0.0, %v683
  %v685 = vpop.f32.mrb[0].mxu0
  %v686 = vpop.f32.mrb[0].mxu0
  %v687 = vadd.f32 0.0, %v686
  %v688 = vpop.f32.mrb[0].mxu0
  %689 = vmatprep.mubr.bf16.mxu0 0
  %690 = vmatmul.mubr.bf16.gmra.mrb[0].mxu0 %v522
  %v691 = vpop.f32.mrb[0].mxu0
  %v692 = vadd.f32 0.0, %v691
  %v693 = vpop.f32.mrb[0].mxu0
  %v694 = vpop.f32.mrb[0].mxu0
  %v695 = vadd.f32 0.0, %v694
  %v696 = vpop.f32.mrb[0].mxu0
  %697 = vmatprep.mubr.bf16.mxu0 0
  %698 = vmatmul.mubr.bf16.gmra.mrb[0].mxu0 %v525
  %v699 = vpop.f32.mrb[0].mxu0
  %v700 = vadd.f32 0.0, %v699
  %v701 = vpop.f32.mrb[0].mxu0
  %v702 = vpop.f32.mrb[0].mxu0
  %v703 = vadd.f32 0.0, %v702
  %v704 = vpop.f32.mrb[0].mxu0
  %705 = vmatprep.mubr.bf16.mxu0 0
  %706 = vmatmul.mubr.bf16.gmra.mrb[0].mxu0 %v528
  %v707 = vpop.f32.mrb[0].mxu0
  %v708 = vadd.f32 0.0, %v707
  %v709 = vpop.f32.mrb[0].mxu0
  %v710 = vpop.f32.mrb[0].mxu0
  %v711 = vadd.f32 0.0, %v710
  %v712 = vpop.f32.mrb[0].mxu0
  %713 = vmatprep.mubr.bf16.mxu0 0
  %714 = vmatmul.mubr.bf16.gmra.mrb[0].mxu0 %v531
  %v715 = vpop.f32.mrb[0].mxu0
  %v716 = vadd.f32 0.0, %v715
  %v717 = vpop.f32.mrb[0].mxu0
  %v718 = vpop.f32.mrb[0].mxu0
  %v719 = vadd.f32 0.0, %v718
  %v720 = vpop.f32.mrb[0].mxu0
  %721 = vmatprep.mubr.bf16.mxu0 0
  %722 = vmatmul.mubr.bf16.gmra.mrb[0].mxu0 %v534
  %v723 = vpop.f32.mrb[0].mxu0
  %v724 = vadd.f32 0.0, %v723
  %v725 = vpop.f32.mrb[0].mxu0
  %v726 = vpop.f32.mrb[0].mxu0
  %v727 = vadd.f32 0.0, %v726
  %v728 = vpop.f32.mrb[0].mxu0
  %729 = vmatprep.mubr.bf16.mxu0 0
  %730 = vmatmul.mubr.bf16.gmra.mrb[0].mxu0 %v537
  %v731 = vpop.f32.mrb[0].mxu0
  %v732 = vadd.f32 0.0, %v731
  %v733 = vpop.f32.mrb[0].mxu0
  %v734 = vpop.f32.mrb[0].mxu0
  %v735 = vadd.f32 0.0, %v734
  %v736 = vpop.f32.mrb[0].mxu0
  %737 = vmatprep.mubr.bf16.mxu0 0
  %738 = vmatmul.mubr.bf16.gmra.mrb[0].mxu0 %v540
  %v739 = vpop.f32.mrb[0].mxu0
  %v740 = vadd.f32 0.0, %v739
  %v741 = vpop.f32.mrb[0].mxu0
  %v742 = vpop.f32.mrb[0].mxu0
  %v743 = vadd.f32 0.0, %v742
  %v744 = vpop.f32.mrb[0].mxu0
  %745 = vmatprep.mubr.bf16.mxu0 0
  %746 = vmatmul.mubr.bf16.gmra.mrb[0].mxu0 %v543
  %v747 = vpop.f32.mrb[0].mxu0
  %v748 = vadd.f32 0.0, %v747
  %v749 = vpop.f32.mrb[0].mxu0
  %v750 = vpop.f32.mrb[0].mxu0
  %v751 = vadd.f32 0.0, %v750
  %v752 = vpop.f32.mrb[0].mxu0
  %753 = vmatprep.mubr.bf16.mxu0 0
  %754 = vmatmul.mubr.bf16.gmra.mrb[0].mxu0 %v546
  %v755 = vpop.f32.mrb[0].mxu0
  %v756 = vadd.f32 0.0, %v755
  %v757 = vpop.f32.mrb[0].mxu0
  %v758 = vpop.f32.mrb[0].mxu0
  %v759 = vadd.f32 0.0, %v758
  %v760 = vpop.f32.mrb[0].mxu0
  %761 = vmatprep.mubr.bf16.mxu0 0
  %762 = vmatmul.mubr.bf16.gmra.mrb[0].mxu0 %v549
  %v763 = vpop.f32.mrb[0].mxu0
  %v764 = vadd.f32 0.0, %v763
  %v765 = vpop.f32.mrb[0].mxu0
  %v766 = vpop.f32.mrb[0].mxu0
  %v767 = vadd.f32 0.0, %v766
  %v768 = vpop.f32.mrb[0].mxu0
  %769 = vmatprep.mubr.bf16.mxu0 0
  %770 = vmatmul.mubr.bf16.gmra.mrb[0].mxu0 %v552
  %v771 = vpop.f32.mrb[0].mxu0
  %v772 = vadd.f32 0.0, %v771
  %v773 = vpop.f32.mrb[0].mxu0
  %v774 = vpop.f32.mrb[0].mxu0
  %v775 = vadd.f32 0.0, %v774
  %v776 = vpop.f32.mrb[0].mxu0
  %777 = vmatprep.mubr.bf16.mxu0 0
  %778 = vmatmul.mubr.bf16.gmra.mrb[0].mxu0 %v555
  %v779 = vpop.f32.mrb[0].mxu0
  %v780 = vadd.f32 0.0, %v779
  %v781 = vpop.f32.mrb[0].mxu0
  %v782 = vpop.f32.mrb[0].mxu0
  %v783 = vadd.f32 0.0, %v782
  %v784 = vpop.f32.mrb[0].mxu0
  %785 = vmatprep.mubr.bf16.mxu0 0
  %786 = vmatmul.mubr.bf16.gmra.mrb[0].mxu0 %v558
  %v787 = vpop.f32.mrb[0].mxu0
  %v788 = vadd.f32 0.0, %v787
  %v789 = vpop.f32.mrb[0].mxu0
  %v790 = vpop.f32.mrb[0].mxu0
  %v791 = vadd.f32 0.0, %v790
  %v792 = vpop.f32.mrb[0].mxu0
  %793 = vmatprep.mubr.bf16.mxu0 0
  %794 = vmatmul.mubr.bf16.gmra.mrb[0].mxu0 %v561
  %v795 = vpop.f32.mrb[0].mxu0
  %v796 = vadd.f32 0.0, %v795
  %v797 = vpop.f32.mrb[0].mxu0
  %v798 = vpop.f32.mrb[0].mxu0
  %v799 = vadd.f32 0.0, %v798
  %v800 = vpop.f32.mrb[0].mxu0
  %801 = vmatprep.mubr.bf16.mxu0 0
  %802 = vmatmul.mubr.bf16.gmra.mrb[0].mxu0 %v564
  %v803 = vpop.f32.mrb[0].mxu0
  %v804 = vadd.f32 0.0, %v803
  %v805 = vpop.f32.mrb[0].mxu0
  %v806 = vpop.f32.mrb[0].mxu0
  %v807 = vadd.f32 0.0, %v806
  %v808 = vpop.f32.mrb[0].mxu0
  %809 = vmatprep.mubr.bf16.mxu0 0
  %810 = vmatmul.mubr.bf16.gmra.mrb[0].mxu0 %v567
  %v811 = vpop.f32.mrb[0].mxu0
  %v812 = vadd.f32 0.0, %v811
  %v813 = vpop.f32.mrb[0].mxu0
  %v814 = vpop.f32.mrb[0].mxu0
  %v815 = vadd.f32 0.0, %v814
  %v816 = vpop.f32.mrb[0].mxu0
  %817 = vmatprep.mubr.bf16.mxu0 0
  %818 = vmatmul.mubr.bf16.gmra.mrb[0].mxu0 %v570
  %v819 = vpop.f32.mrb[0].mxu0
  %v820 = vadd.f32 0.0, %v819
  %v821 = vpop.f32.mrb[0].mxu0
  %v822 = vpop.f32.mrb[0].mxu0
  %v823 = vadd.f32 0.0, %v822
  %v824 = vpop.f32.mrb[0].mxu0
  %825 = vmatprep.mubr.bf16.mxu0 0
  %826 = vmatmul.mubr.bf16.gmra.mrb[0].mxu0 %v573
  %v827 = vpop.f32.mrb[0].mxu0
  %v828 = vadd.f32 0.0, %v827
  %v829 = vpop.f32.mrb[0].mxu0
  %v830 = vpop.f32.mrb[0].mxu0
  %v831 = vadd.f32 0.0, %v830
  %v832 = vpop.f32.mrb[0].mxu0
  %833 = vmatprep.mubr.bf16.mxu0 0
  %834 = vmatmul.mubr.bf16.gmra.mrb[0].mxu0 %v576
  %v835 = vpop.f32.mrb[0].mxu0
  %v836 = vadd.f32 0.0, %v835
  %v837 = vpop.f32.mrb[0].mxu0
  %v838 = vpop.f32.mrb[0].mxu0
  %v839 = vadd.f32 0.0, %v838
  %v840 = vpop.f32.mrb[0].mxu0
  %841 = vmatprep.mubr.bf16.mxu0 0
  %842 = vmatmul.mubr.bf16.gmra.mrb[0].mxu0 %v579
  %v843 = vpop.f32.mrb[0].mxu0
  %v844 = vadd.f32 0.0, %v843
  %v845 = vpop.f32.mrb[0].mxu0
  %v846 = vpop.f32.mrb[0].mxu0
  %v847 = vadd.f32 0.0, %v846
  %v848 = vpop.f32.mrb[0].mxu0
  %849 = vmatprep.mubr.bf16.mxu0 0
  %850 = vmatmul.mubr.bf16.gmra.mrb[0].mxu0 %v582
  %v851 = vpop.f32.mrb[0].mxu0
  %v852 = vadd.f32 0.0, %v851
  %v853 = vpop.f32.mrb[0].mxu0
  %v854 = vpop.f32.mrb[0].mxu0
  %v855 = vadd.f32 0.0, %v854
  %v856 = vpop.f32.mrb[0].mxu0
  %857 = vmatprep.mubr.bf16.mxu0 0
  %858 = vmatmul.mubr.bf16.gmra.mrb[0].mxu0 %v585
  %v859 = vpop.f32.mrb[0].mxu0
  %v860 = vadd.f32 0.0, %v859
  %v861 = vpop.f32.mrb[0].mxu0
  %v862 = vpop.f32.mrb[0].mxu0
  %v863 = vadd.f32 0.0, %v862
  %v864 = vpop.f32.mrb[0].mxu0
  %865 = vmatprep.mubr.bf16.mxu0 0
  %866 = vmatmul.mubr.bf16.gmra.mrb[0].mxu0 %v588
  %v867 = vpop.f32.mrb[0].mxu0
  %v868 = vadd.f32 0.0, %v867
  %v869 = vpop.f32.mrb[0].mxu0
  %v870 = vpop.f32.mrb[0].mxu0
  %v871 = vadd.f32 0.0, %v870
  %v872 = vpop.f32.mrb[0].mxu0
  %873 = vmatprep.mubr.bf16.mxu0 0
  %874 = vmatmul.mubr.bf16.gmra.mrb[0].mxu0 %v591
  %v875 = vpop.f32.mrb[0].mxu0
  %v876 = vadd.f32 0.0, %v875
  %v877 = vpop.f32.mrb[0].mxu0
  %v878 = vpop.f32.mrb[0].mxu0
  %v879 = vadd.f32 0.0, %v878
  %v880 = vpop.f32.mrb[0].mxu0
  %881 = vdwg.mxu0
  %v882 = vld [vmem:[%s10] sm:$0xf]
  %v883 = vld [vmem:[%s10 + $0x4] sm:$0xf]
  %v884 = vld [vmem:[%s10 + $0x8] sm:$0xf]
  %v885 = vld [vmem:[%s10 + $0xc] sm:$0xf]
  %v886 = vld [vmem:[%s10 + $0x10] sm:$0xf]
  %v887 = vld [vmem:[%s10 + $0x14] sm:$0xf]
  %v888 = vld [vmem:[%s10 + $0x18] sm:$0xf]
  %v889 = vld [vmem:[%s10 + $0x1c] sm:$0xf]
  %v954 = vunpack.c.l.b16 %v112
  %v955 = vunpack.c.l.b16 %v113
  %v956 = vunpack.c.l.b16 %v114
  %v957 = vunpack.c.l.b16 %v115
  %v958 = vunpack.c.l.b16 %v116
  %v959 = vunpack.c.l.b16 %v117
  %v960 = vunpack.c.l.b16 %v118
  %v961 = vunpack.c.l.b16 %v119
  %v962 = vunpack.c.l.b16 %v120
  %v963 = vunpack.c.l.b16 %v121
  %v964 = vunpack.c.l.b16 %v122
  %v965 = vunpack.c.l.b16 %v123
  %v966 = vunpack.c.l.b16 %v124
  %v967 = vunpack.c.l.b16 %v125
  %v968 = vunpack.c.l.b16 %v126
  %v969 = vunpack.c.l.b16 %v127
  %v970 = vunpack.c.l.b16 %v128
  %v971 = vunpack.c.l.b16 %v129
  %v972 = vunpack.c.l.b16 %v130
  %v973 = vunpack.c.l.b16 %v131
  %v974 = vunpack.c.l.b16 %v132
  %v975 = vunpack.c.l.b16 %v133
  %v976 = vunpack.c.l.b16 %v134
  %v977 = vunpack.c.l.b16 %v135
  %v978 = vunpack.c.l.b16 %v136
  %v979 = vunpack.c.l.b16 %v137
  %v980 = vunpack.c.l.b16 %v138
  %v981 = vunpack.c.l.b16 %v139
  %v982 = vunpack.c.l.b16 %v140
  %v983 = vunpack.c.l.b16 %v141
  %v984 = vunpack.c.l.b16 %v142
  %v985 = vunpack.c.l.b16 %v143
  %v986 = vunpack.c.l.b16 %v144
  %v987 = vunpack.c.l.b16 %v145
  %v988 = vunpack.c.l.b16 %v146
  %v989 = vunpack.c.l.b16 %v147
  %v990 = vunpack.c.l.b16 %v148
  %v991 = vunpack.c.l.b16 %v149
  %v992 = vunpack.c.l.b16 %v150
  %v993 = vunpack.c.l.b16 %v151
  %v994 = vunpack.c.l.b16 %v152
  %v995 = vunpack.c.l.b16 %v153
  %v996 = vunpack.c.l.b16 %v154
  %v997 = vunpack.c.l.b16 %v155
  %v998 = vunpack.c.l.b16 %v156
  %v999 = vunpack.c.l.b16 %v157
  %v1000 = vunpack.c.l.b16 %v158
  %v1001 = vunpack.c.l.b16 %v159
  %v1002 = vunpack.c.l.b16 %v160
  %v1003 = vunpack.c.l.b16 %v161
  %v1004 = vunpack.c.l.b16 %v162
  %v1005 = vunpack.c.l.b16 %v163
  %v1006 = vunpack.c.l.b16 %v164
  %v1007 = vunpack.c.l.b16 %v165
  %v1008 = vunpack.c.l.b16 %v166
  %v1009 = vunpack.c.l.b16 %v167
  %v1010 = vunpack.c.l.b16 %v168
  %v1011 = vunpack.c.l.b16 %v169
  %v1012 = vunpack.c.l.b16 %v170
  %v1013 = vunpack.c.l.b16 %v171
  %v1014 = vunpack.c.l.b16 %v172
  %v1015 = vunpack.c.l.b16 %v173
  %v1016 = vunpack.c.l.b16 %v174
  %v1017 = vunpack.c.l.b16 %v175
  %v1018 = vpack.c.b16 %v955, %v954
  %v1019 = vpack.c.b16 %v957, %v956
  %v1020 = vpack.c.b16 %v959, %v958
  %v1021 = vpack.c.b16 %v961, %v960
  %v1022 = vpack.c.b16 %v963, %v962
  %v1023 = vpack.c.b16 %v965, %v964
  %v1024 = vpack.c.b16 %v967, %v966
  %v1025 = vpack.c.b16 %v969, %v968
  %v1026 = vpack.c.b16 %v971, %v970
  %v1027 = vpack.c.b16 %v973, %v972
  %v1028 = vpack.c.b16 %v975, %v974
  %v1029 = vpack.c.b16 %v977, %v976
  %v1030 = vpack.c.b16 %v979, %v978
  %v1031 = vpack.c.b16 %v981, %v980
  %v1032 = vpack.c.b16 %v983, %v982
  %v1033 = vpack.c.b16 %v985, %v984
  %v1034 = vpack.c.b16 %v987, %v986
  %v1035 = vpack.c.b16 %v989, %v988
  %v1036 = vpack.c.b16 %v991, %v990
  %v1037 = vpack.c.b16 %v993, %v992
  %v1038 = vpack.c.b16 %v995, %v994
  %v1039 = vpack.c.b16 %v997, %v996
  %v1040 = vpack.c.b16 %v999, %v998
  %v1041 = vpack.c.b16 %v1001, %v1000
  %v1042 = vpack.c.b16 %v1003, %v1002
  %v1043 = vpack.c.b16 %v1005, %v1004
  %v1044 = vpack.c.b16 %v1007, %v1006
  %v1045 = vpack.c.b16 %v1009, %v1008
  %v1046 = vpack.c.b16 %v1011, %v1010
  %v1047 = vpack.c.b16 %v1013, %v1012
  %v1048 = vpack.c.b16 %v1015, %v1014
  %v1049 = vpack.c.b16 %v1017, %v1016
  %v1058 = vunpack.c.l.b16 %v882
  %v1059 = vunpack.c.l.b16 %v883
  %v1060 = vunpack.c.l.b16 %v884
  %v1061 = vunpack.c.l.b16 %v885
  %v1062 = vunpack.c.l.b16 %v886
  %v1063 = vunpack.c.l.b16 %v887
  %v1064 = vunpack.c.l.b16 %v888
  %v1065 = vunpack.c.l.b16 %v889
  %v1066 = vpack.c.b16 %v1059, %v1058
  %v1067 = vpack.c.b16 %v1061, %v1060
  %v1068 = vpack.c.b16 %v1063, %v1062
  %v1069 = vpack.c.b16 %v1065, %v1064
  %v1075 = vsel %vm496, %v1018, 0
  %v1078 = vsel %vm496, %v1019, 0
  %v1081 = vsel %vm496, %v1020, 0
  %v1084 = vsel %vm496, %v1021, 0
  %v1087 = vsel %vm496, %v1022, 0
  %v1090 = vsel %vm496, %v1023, 0
  %v1093 = vsel %vm496, %v1024, 0
  %v1096 = vsel %vm496, %v1025, 0
  %v1099 = vsel %vm496, %v1026, 0
  %v1102 = vsel %vm496, %v1027, 0
  %v1105 = vsel %vm496, %v1028, 0
  %v1108 = vsel %vm496, %v1029, 0
  %v1111 = vsel %vm496, %v1030, 0
  %v1114 = vsel %vm496, %v1031, 0
  %v1117 = vsel %vm496, %v1032, 0
  %v1120 = vsel %vm496, %v1033, 0
  %v1123 = vsel %vm496, %v1034, 0
  %v1126 = vsel %vm496, %v1035, 0
  %v1129 = vsel %vm496, %v1036, 0
  %v1132 = vsel %vm496, %v1037, 0
  %v1135 = vsel %vm496, %v1038, 0
  %v1138 = vsel %vm496, %v1039, 0
  %v1141 = vsel %vm496, %v1040, 0
  %v1144 = vsel %vm496, %v1041, 0
  %v1147 = vsel %vm496, %v1042, 0
  %v1150 = vsel %vm496, %v1043, 0
  %v1153 = vsel %vm496, %v1044, 0
  %v1156 = vsel %vm496, %v1045, 0
  %v1159 = vsel %vm496, %v1046, 0
  %v1162 = vsel %vm496, %v1047, 0
  %v1165 = vsel %vm496, %v1048, 0
  %v1168 = vsel %vm496, %v1049, 0
  %1170 = vmatprep.subr.bf16.mxu0 0
  %1171 = vmatpush1.bf16.msra.mxu0 %v1066
  %1172 = vmatprep.subr.bf16.mxu0 0
  %1173 = vmatpush1.bf16.msra.mxu0 %v1067
  %1174 = vmatprep.subr.bf16.mxu0 0
  %1175 = vmatpush1.bf16.msra.mxu0 %v1068
  %1176 = vmatprep.subr.bf16.mxu0 0
  %1177 = vmatpush1.bf16.msra.mxu0 %v1069
  %1178 = vmatprep.subr.bf16.mxu0 0
  %1179 = vmatpush1.bf16.msra.mxu0 0
  %1180 = vmatprep.subr.bf16.mxu0 0
  %1181 = vmatpush1.bf16.msra.mxu0 0
  %1182 = vmatprep.subr.bf16.mxu0 0
  %1183 = vmatpush1.bf16.msra.mxu0 0
  %1184 = vmatprep.subr.bf16.mxu0 0
  %1185 = vmatpush1.bf16.msra.mxu0 0
  %1186 = vmatprep.subr.bf16.mxu0 0
  %1187 = vmatpush1.bf16.msra.mxu0 0
  %1188 = vmatprep.subr.bf16.mxu0 0
  %1189 = vmatpush1.bf16.msra.mxu0 0
  %1190 = vmatprep.subr.bf16.mxu0 0
  %1191 = vmatpush1.bf16.msra.mxu0 0
  %1192 = vmatprep.subr.bf16.mxu0 0
  %1193 = vmatpush1.bf16.msra.mxu0 0
  %1194 = vmatprep.subr.bf16.mxu0 0
  %1195 = vmatpush1.bf16.msra.mxu0 0
  %1196 = vmatprep.subr.bf16.mxu0 0
  %1197 = vmatpush1.bf16.msra.mxu0 0
  %1198 = vmatprep.subr.bf16.mxu0 0
  %1199 = vmatpush1.bf16.msra.mxu0 0
  %1200 = vmatprep.subr.bf16.mxu0 0
  %1201 = vmatpush1.bf16.msra.mxu0 0
  %1202 = vmatprep.mubr.bf16.mxu0 0
  %1203 = vmatmul.mubr.bf16.gmra.mrb[0].mxu0 %v1075
  %v1204 = vpop.f32.mrb[0].mxu0
  %v1205 = vadd.f32 0.0, %v1204
  %v1206 = vpop.f32.mrb[0].mxu0
  %v1207 = vpop.f32.mrb[0].mxu0
  %v1208 = vadd.f32 0.0, %v1207
  %v1209 = vpop.f32.mrb[0].mxu0
  %1210 = vmatprep.mubr.bf16.mxu0 0
  %1211 = vmatmul.mubr.bf16.gmra.mrb[0].mxu0 %v1078
  %v1212 = vpop.f32.mrb[0].mxu0
  %v1213 = vadd.f32 0.0, %v1212
  %v1214 = vpop.f32.mrb[0].mxu0
  %v1215 = vpop.f32.mrb[0].mxu0
  %v1216 = vadd.f32 0.0, %v1215
  %v1217 = vpop.f32.mrb[0].mxu0
  %1218 = vmatprep.mubr.bf16.mxu0 0
  %1219 = vmatmul.mubr.bf16.gmra.mrb[0].mxu0 %v1081
  %v1220 = vpop.f32.mrb[0].mxu0
  %v1221 = vadd.f32 0.0, %v1220
  %v1222 = vpop.f32.mrb[0].mxu0
  %v1223 = vpop.f32.mrb[0].mxu0
  %v1224 = vadd.f32 0.0, %v1223
  %v1225 = vpop.f32.mrb[0].mxu0
  %1226 = vmatprep.mubr.bf16.mxu0 0
  %1227 = vmatmul.mubr.bf16.gmra.mrb[0].mxu0 %v1084
  %v1228 = vpop.f32.mrb[0].mxu0
  %v1229 = vadd.f32 0.0, %v1228
  %v1230 = vpop.f32.mrb[0].mxu0
  %v1231 = vpop.f32.mrb[0].mxu0
  %v1232 = vadd.f32 0.0, %v1231
  %v1233 = vpop.f32.mrb[0].mxu0
  %1234 = vmatprep.mubr.bf16.mxu0 0
  %1235 = vmatmul.mubr.bf16.gmra.mrb[0].mxu0 %v1087
  %v1236 = vpop.f32.mrb[0].mxu0
  %v1237 = vadd.f32 0.0, %v1236
  %v1238 = vpop.f32.mrb[0].mxu0
  %v1239 = vpop.f32.mrb[0].mxu0
  %v1240 = vadd.f32 0.0, %v1239
  %v1241 = vpop.f32.mrb[0].mxu0
  %1242 = vmatprep.mubr.bf16.mxu0 0
  %1243 = vmatmul.mubr.bf16.gmra.mrb[0].mxu0 %v1090
  %v1244 = vpop.f32.mrb[0].mxu0
  %v1245 = vadd.f32 0.0, %v1244
  %v1246 = vpop.f32.mrb[0].mxu0
  %v1247 = vpop.f32.mrb[0].mxu0
  %v1248 = vadd.f32 0.0, %v1247
  %v1249 = vpop.f32.mrb[0].mxu0
  %1250 = vmatprep.mubr.bf16.mxu0 0
  %1251 = vmatmul.mubr.bf16.gmra.mrb[0].mxu0 %v1093
  %v1252 = vpop.f32.mrb[0].mxu0
  %v1253 = vadd.f32 0.0, %v1252
  %v1254 = vpop.f32.mrb[0].mxu0
  %v1255 = vpop.f32.mrb[0].mxu0
  %v1256 = vadd.f32 0.0, %v1255
  %v1257 = vpop.f32.mrb[0].mxu0
  %1258 = vmatprep.mubr.bf16.mxu0 0
  %1259 = vmatmul.mubr.bf16.gmra.mrb[0].mxu0 %v1096
  %v1260 = vpop.f32.mrb[0].mxu0
  %v1261 = vadd.f32 0.0, %v1260
  %v1262 = vpop.f32.mrb[0].mxu0
  %v1263 = vpop.f32.mrb[0].mxu0
  %v1264 = vadd.f32 0.0, %v1263
  %v1265 = vpop.f32.mrb[0].mxu0
  %1266 = vmatprep.mubr.bf16.mxu0 0
  %1267 = vmatmul.mubr.bf16.gmra.mrb[0].mxu0 %v1099
  %v1268 = vpop.f32.mrb[0].mxu0
  %v1269 = vadd.f32 0.0, %v1268
  %v1270 = vpop.f32.mrb[0].mxu0
  %v1271 = vpop.f32.mrb[0].mxu0
  %v1272 = vadd.f32 0.0, %v1271
  %v1273 = vpop.f32.mrb[0].mxu0
  %1274 = vmatprep.mubr.bf16.mxu0 0
  %1275 = vmatmul.mubr.bf16.gmra.mrb[0].mxu0 %v1102
  %v1276 = vpop.f32.mrb[0].mxu0
  %v1277 = vadd.f32 0.0, %v1276
  %v1278 = vpop.f32.mrb[0].mxu0
  %v1279 = vpop.f32.mrb[0].mxu0
  %v1280 = vadd.f32 0.0, %v1279
  %v1281 = vpop.f32.mrb[0].mxu0
  %1282 = vmatprep.mubr.bf16.mxu0 0
  %1283 = vmatmul.mubr.bf16.gmra.mrb[0].mxu0 %v1105
  %v1284 = vpop.f32.mrb[0].mxu0
  %v1285 = vadd.f32 0.0, %v1284
  %v1286 = vpop.f32.mrb[0].mxu0
  %v1287 = vpop.f32.mrb[0].mxu0
  %v1288 = vadd.f32 0.0, %v1287
  %v1289 = vpop.f32.mrb[0].mxu0
  %1290 = vmatprep.mubr.bf16.mxu0 0
  %1291 = vmatmul.mubr.bf16.gmra.mrb[0].mxu0 %v1108
  %v1292 = vpop.f32.mrb[0].mxu0
  %v1293 = vadd.f32 0.0, %v1292
  %v1294 = vpop.f32.mrb[0].mxu0
  %v1295 = vpop.f32.mrb[0].mxu0
  %v1296 = vadd.f32 0.0, %v1295
  %v1297 = vpop.f32.mrb[0].mxu0
  %1298 = vmatprep.mubr.bf16.mxu0 0
  %1299 = vmatmul.mubr.bf16.gmra.mrb[0].mxu0 %v1111
  %v1300 = vpop.f32.mrb[0].mxu0
  %v1301 = vadd.f32 0.0, %v1300
  %v1302 = vpop.f32.mrb[0].mxu0
  %v1303 = vpop.f32.mrb[0].mxu0
  %v1304 = vadd.f32 0.0, %v1303
  %v1305 = vpop.f32.mrb[0].mxu0
  %1306 = vmatprep.mubr.bf16.mxu0 0
  %1307 = vmatmul.mubr.bf16.gmra.mrb[0].mxu0 %v1114
  %v1308 = vpop.f32.mrb[0].mxu0
  %v1309 = vadd.f32 0.0, %v1308
  %v1310 = vpop.f32.mrb[0].mxu0
  %v1311 = vpop.f32.mrb[0].mxu0
  %v1312 = vadd.f32 0.0, %v1311
  %v1313 = vpop.f32.mrb[0].mxu0
  %1314 = vmatprep.mubr.bf16.mxu0 0
  %1315 = vmatmul.mubr.bf16.gmra.mrb[0].mxu0 %v1117
  %v1316 = vpop.f32.mrb[0].mxu0
  %v1317 = vadd.f32 0.0, %v1316
  %v1318 = vpop.f32.mrb[0].mxu0
  %v1319 = vpop.f32.mrb[0].mxu0
  %v1320 = vadd.f32 0.0, %v1319
  %v1321 = vpop.f32.mrb[0].mxu0
  %1322 = vmatprep.mubr.bf16.mxu0 0
  %1323 = vmatmul.mubr.bf16.gmra.mrb[0].mxu0 %v1120
  %v1324 = vpop.f32.mrb[0].mxu0
  %v1325 = vadd.f32 0.0, %v1324
  %v1326 = vpop.f32.mrb[0].mxu0
  %v1327 = vpop.f32.mrb[0].mxu0
  %v1328 = vadd.f32 0.0, %v1327
  %v1329 = vpop.f32.mrb[0].mxu0
  %1330 = vmatprep.mubr.bf16.mxu0 0
  %1331 = vmatmul.mubr.bf16.gmra.mrb[0].mxu0 %v1123
  %v1332 = vpop.f32.mrb[0].mxu0
  %v1333 = vadd.f32 0.0, %v1332
  %v1334 = vpop.f32.mrb[0].mxu0
  %v1335 = vpop.f32.mrb[0].mxu0
  %v1336 = vadd.f32 0.0, %v1335
  %v1337 = vpop.f32.mrb[0].mxu0
  %1338 = vmatprep.mubr.bf16.mxu0 0
  %1339 = vmatmul.mubr.bf16.gmra.mrb[0].mxu0 %v1126
  %v1340 = vpop.f32.mrb[0].mxu0
  %v1341 = vadd.f32 0.0, %v1340
  %v1342 = vpop.f32.mrb[0].mxu0
  %v1343 = vpop.f32.mrb[0].mxu0
  %v1344 = vadd.f32 0.0, %v1343
  %v1345 = vpop.f32.mrb[0].mxu0
  %1346 = vmatprep.mubr.bf16.mxu0 0
  %1347 = vmatmul.mubr.bf16.gmra.mrb[0].mxu0 %v1129
  %v1348 = vpop.f32.mrb[0].mxu0
  %v1349 = vadd.f32 0.0, %v1348
  %v1350 = vpop.f32.mrb[0].mxu0
  %v1351 = vpop.f32.mrb[0].mxu0
  %v1352 = vadd.f32 0.0, %v1351
  %v1353 = vpop.f32.mrb[0].mxu0
  %1354 = vmatprep.mubr.bf16.mxu0 0
  %1355 = vmatmul.mubr.bf16.gmra.mrb[0].mxu0 %v1132
  %v1356 = vpop.f32.mrb[0].mxu0
  %v1357 = vadd.f32 0.0, %v1356
  %v1358 = vpop.f32.mrb[0].mxu0
  %v1359 = vpop.f32.mrb[0].mxu0
  %v1360 = vadd.f32 0.0, %v1359
  %v1361 = vpop.f32.mrb[0].mxu0
  %1362 = vmatprep.mubr.bf16.mxu0 0
  %1363 = vmatmul.mubr.bf16.gmra.mrb[0].mxu0 %v1135
  %v1364 = vpop.f32.mrb[0].mxu0
  %v1365 = vadd.f32 0.0, %v1364
  %v1366 = vpop.f32.mrb[0].mxu0
  %v1367 = vpop.f32.mrb[0].mxu0
  %v1368 = vadd.f32 0.0, %v1367
  %v1369 = vpop.f32.mrb[0].mxu0
  %1370 = vmatprep.mubr.bf16.mxu0 0
  %1371 = vmatmul.mubr.bf16.gmra.mrb[0].mxu0 %v1138
  %v1372 = vpop.f32.mrb[0].mxu0
  %v1373 = vadd.f32 0.0, %v1372
  %v1374 = vpop.f32.mrb[0].mxu0
  %v1375 = vpop.f32.mrb[0].mxu0
  %v1376 = vadd.f32 0.0, %v1375
  %v1377 = vpop.f32.mrb[0].mxu0
  %1378 = vmatprep.mubr.bf16.mxu0 0
  %1379 = vmatmul.mubr.bf16.gmra.mrb[0].mxu0 %v1141
  %v1380 = vpop.f32.mrb[0].mxu0
  %v1381 = vadd.f32 0.0, %v1380
  %v1382 = vpop.f32.mrb[0].mxu0
  %v1383 = vpop.f32.mrb[0].mxu0
  %v1384 = vadd.f32 0.0, %v1383
  %v1385 = vpop.f32.mrb[0].mxu0
  %1386 = vmatprep.mubr.bf16.mxu0 0
  %1387 = vmatmul.mubr.bf16.gmra.mrb[0].mxu0 %v1144
  %v1388 = vpop.f32.mrb[0].mxu0
  %v1389 = vadd.f32 0.0, %v1388
  %v1390 = vpop.f32.mrb[0].mxu0
  %v1391 = vpop.f32.mrb[0].mxu0
  %v1392 = vadd.f32 0.0, %v1391
  %v1393 = vpop.f32.mrb[0].mxu0
  %1394 = vmatprep.mubr.bf16.mxu0 0
  %1395 = vmatmul.mubr.bf16.gmra.mrb[0].mxu0 %v1147
  %v1396 = vpop.f32.mrb[0].mxu0
  %v1397 = vadd.f32 0.0, %v1396
  %v1398 = vpop.f32.mrb[0].mxu0
  %v1399 = vpop.f32.mrb[0].mxu0
  %v1400 = vadd.f32 0.0, %v1399
  %v1401 = vpop.f32.mrb[0].mxu0
  %1402 = vmatprep.mubr.bf16.mxu0 0
  %1403 = vmatmul.mubr.bf16.gmra.mrb[0].mxu0 %v1150
  %v1404 = vpop.f32.mrb[0].mxu0
  %v1405 = vadd.f32 0.0, %v1404
  %v1406 = vpop.f32.mrb[0].mxu0
  %v1407 = vpop.f32.mrb[0].mxu0
  %v1408 = vadd.f32 0.0, %v1407
  %v1409 = vpop.f32.mrb[0].mxu0
  %1410 = vmatprep.mubr.bf16.mxu0 0
  %1411 = vmatmul.mubr.bf16.gmra.mrb[0].mxu0 %v1153
  %v1412 = vpop.f32.mrb[0].mxu0
  %v1413 = vadd.f32 0.0, %v1412
  %v1414 = vpop.f32.mrb[0].mxu0
  %v1415 = vpop.f32.mrb[0].mxu0
  %v1416 = vadd.f32 0.0, %v1415
  %v1417 = vpop.f32.mrb[0].mxu0
  %1418 = vmatprep.mubr.bf16.mxu0 0
  %1419 = vmatmul.mubr.bf16.gmra.mrb[0].mxu0 %v1156
  %v1420 = vpop.f32.mrb[0].mxu0
  %v1421 = vadd.f32 0.0, %v1420
  %v1422 = vpop.f32.mrb[0].mxu0
  %v1423 = vpop.f32.mrb[0].mxu0
  %v1424 = vadd.f32 0.0, %v1423
  %v1425 = vpop.f32.mrb[0].mxu0
  %1426 = vmatprep.mubr.bf16.mxu0 0
  %1427 = vmatmul.mubr.bf16.gmra.mrb[0].mxu0 %v1159
  %v1428 = vpop.f32.mrb[0].mxu0
  %v1429 = vadd.f32 0.0, %v1428
  %v1430 = vpop.f32.mrb[0].mxu0
  %v1431 = vpop.f32.mrb[0].mxu0
  %v1432 = vadd.f32 0.0, %v1431
  %v1433 = vpop.f32.mrb[0].mxu0
  %1434 = vmatprep.mubr.bf16.mxu0 0
  %1435 = vmatmul.mubr.bf16.gmra.mrb[0].mxu0 %v1162
  %v1436 = vpop.f32.mrb[0].mxu0
  %v1437 = vadd.f32 0.0, %v1436
  %v1438 = vpop.f32.mrb[0].mxu0
  %v1439 = vpop.f32.mrb[0].mxu0
  %v1440 = vadd.f32 0.0, %v1439
  %v1441 = vpop.f32.mrb[0].mxu0
  %1442 = vmatprep.mubr.bf16.mxu0 0
  %1443 = vmatmul.mubr.bf16.gmra.mrb[0].mxu0 %v1165
  %v1444 = vpop.f32.mrb[0].mxu0
  %v1445 = vadd.f32 0.0, %v1444
  %v1446 = vpop.f32.mrb[0].mxu0
  %v1447 = vpop.f32.mrb[0].mxu0
  %v1448 = vadd.f32 0.0, %v1447
  %v1449 = vpop.f32.mrb[0].mxu0
  %1450 = vmatprep.mubr.bf16.mxu0 0
  %1451 = vmatmul.mubr.bf16.gmra.mrb[0].mxu0 %v1168
  %v1452 = vpop.f32.mrb[0].mxu0
  %v1453 = vadd.f32 0.0, %v1452
  %v1454 = vpop.f32.mrb[0].mxu0
  %v1455 = vpop.f32.mrb[0].mxu0
  %v1456 = vadd.f32 0.0, %v1455
  %v1457 = vpop.f32.mrb[0].mxu0
  %1458 = vdwg.mxu0
  %v1459 = vld [vmem:[%s11] sm:$0xf]
  %v1460 = vld [vmem:[%s11 + $0x4] sm:$0xf]
  %v1461 = vld [vmem:[%s11 + $0x8] sm:$0xf]
  %v1462 = vld [vmem:[%s11 + $0xc] sm:$0xf]
  %v1463 = vld [vmem:[%s11 + $0x10] sm:$0xf]
  %v1464 = vld [vmem:[%s11 + $0x14] sm:$0xf]
  %v1465 = vld [vmem:[%s11 + $0x18] sm:$0xf]
  %v1466 = vld [vmem:[%s11 + $0x1c] sm:$0xf]
  %v1531 = vunpack.c.l.b16 %v176
  %v1532 = vunpack.c.l.b16 %v177
  %v1533 = vunpack.c.l.b16 %v178
  %v1534 = vunpack.c.l.b16 %v179
  %v1535 = vunpack.c.l.b16 %v180
  %v1536 = vunpack.c.l.b16 %v181
  %v1537 = vunpack.c.l.b16 %v182
  %v1538 = vunpack.c.l.b16 %v183
  %v1539 = vunpack.c.l.b16 %v184
  %v1540 = vunpack.c.l.b16 %v185
  %v1541 = vunpack.c.l.b16 %v186
  %v1542 = vunpack.c.l.b16 %v187
  %v1543 = vunpack.c.l.b16 %v188
  %v1544 = vunpack.c.l.b16 %v189
  %v1545 = vunpack.c.l.b16 %v190
  %v1546 = vunpack.c.l.b16 %v191
  %v1547 = vunpack.c.l.b16 %v192
  %v1548 = vunpack.c.l.b16 %v193
  %v1549 = vunpack.c.l.b16 %v194
  %v1550 = vunpack.c.l.b16 %v195
  %v1551 = vunpack.c.l.b16 %v196
  %v1552 = vunpack.c.l.b16 %v197
  %v1553 = vunpack.c.l.b16 %v198
  %v1554 = vunpack.c.l.b16 %v199
  %v1555 = vunpack.c.l.b16 %v200
  %v1556 = vunpack.c.l.b16 %v201
  %v1557 = vunpack.c.l.b16 %v202
  %v1558 = vunpack.c.l.b16 %v203
  %v1559 = vunpack.c.l.b16 %v204
  %v1560 = vunpack.c.l.b16 %v205
  %v1561 = vunpack.c.l.b16 %v206
  %v1562 = vunpack.c.l.b16 %v207
  %v1563 = vunpack.c.l.b16 %v208
  %v1564 = vunpack.c.l.b16 %v209
  %v1565 = vunpack.c.l.b16 %v210
  %v1566 = vunpack.c.l.b16 %v211
  %v1567 = vunpack.c.l.b16 %v212
  %v1568 = vunpack.c.l.b16 %v213
  %v1569 = vunpack.c.l.b16 %v214
  %v1570 = vunpack.c.l.b16 %v215
  %v1571 = vunpack.c.l.b16 %v216
  %v1572 = vunpack.c.l.b16 %v217
  %v1573 = vunpack.c.l.b16 %v218
  %v1574 = vunpack.c.l.b16 %v219
  %v1575 = vunpack.c.l.b16 %v220
  %v1576 = vunpack.c.l.b16 %v221
  %v1577 = vunpack.c.l.b16 %v222
  %v1578 = vunpack.c.l.b16 %v223
  %v1579 = vunpack.c.l.b16 %v224
  %v1580 = vunpack.c.l.b16 %v225
  %v1581 = vunpack.c.l.b16 %v226
  %v1582 = vunpack.c.l.b16 %v227
  %v1583 = vunpack.c.l.b16 %v228
  %v1584 = vunpack.c.l.b16 %v229
  %v1585 = vunpack.c.l.b16 %v230
  %v1586 = vunpack.c.l.b16 %v231
  %v1587 = vunpack.c.l.b16 %v232
  %v1588 = vunpack.c.l.b16 %v233
  %v1589 = vunpack.c.l.b16 %v234
  %v1590 = vunpack.c.l.b16 %v235
  %v1591 = vunpack.c.l.b16 %v236
  %v1592 = vunpack.c.l.b16 %v237
  %v1593 = vunpack.c.l.b16 %v238
  %v1594 = vunpack.c.l.b16 %v239
  %v1595 = vpack.c.b16 %v1532, %v1531
  %v1596 = vpack.c.b16 %v1534, %v1533
  %v1597 = vpack.c.b16 %v1536, %v1535
  %v1598 = vpack.c.b16 %v1538, %v1537
  %v1599 = vpack.c.b16 %v1540, %v1539
  %v1600 = vpack.c.b16 %v1542, %v1541
  %v1601 = vpack.c.b16 %v1544, %v1543
  %v1602 = vpack.c.b16 %v1546, %v1545
  %v1603 = vpack.c.b16 %v1548, %v1547
  %v1604 = vpack.c.b16 %v1550, %v1549
  %v1605 = vpack.c.b16 %v1552, %v1551
  %v1606 = vpack.c.b16 %v1554, %v1553
  %v1607 = vpack.c.b16 %v1556, %v1555
  %v1608 = vpack.c.b16 %v1558, %v1557
  %v1609 = vpack.c.b16 %v1560, %v1559
  %v1610 = vpack.c.b16 %v1562, %v1561
  %v1611 = vpack.c.b16 %v1564, %v1563
  %v1612 = vpack.c.b16 %v1566, %v1565
  %v1613 = vpack.c.b16 %v1568, %v1567
  %v1614 = vpack.c.b16 %v1570, %v1569
  %v1615 = vpack.c.b16 %v1572, %v1571
  %v1616 = vpack.c.b16 %v1574, %v1573
  %v1617 = vpack.c.b16 %v1576, %v1575
  %v1618 = vpack.c.b16 %v1578, %v1577
  %v1619 = vpack.c.b16 %v1580, %v1579
  %v1620 = vpack.c.b16 %v1582, %v1581
  %v1621 = vpack.c.b16 %v1584, %v1583
  %v1622 = vpack.c.b16 %v1586, %v1585
  %v1623 = vpack.c.b16 %v1588, %v1587
  %v1624 = vpack.c.b16 %v1590, %v1589
  %v1625 = vpack.c.b16 %v1592, %v1591
  %v1626 = vpack.c.b16 %v1594, %v1593
  %v1635 = vunpack.c.l.b16 %v1459
  %v1636 = vunpack.c.l.b16 %v1460
  %v1637 = vunpack.c.l.b16 %v1461
  %v1638 = vunpack.c.l.b16 %v1462
  %v1639 = vunpack.c.l.b16 %v1463
  %v1640 = vunpack.c.l.b16 %v1464
  %v1641 = vunpack.c.l.b16 %v1465
  %v1642 = vunpack.c.l.b16 %v1466
  %v1643 = vpack.c.b16 %v1636, %v1635
  %v1644 = vpack.c.b16 %v1638, %v1637
  %v1645 = vpack.c.b16 %v1640, %v1639
  %v1646 = vpack.c.b16 %v1642, %v1641
  %v1652 = vsel %vm496, %v1595, 0
  %v1655 = vsel %vm496, %v1596, 0
  %v1658 = vsel %vm496, %v1597, 0
  %v1661 = vsel %vm496, %v1598, 0
  %v1664 = vsel %vm496, %v1599, 0
  %v1667 = vsel %vm496, %v1600, 0
  %v1670 = vsel %vm496, %v1601, 0
  %v1673 = vsel %vm496, %v1602, 0
  %v1676 = vsel %vm496, %v1603, 0
  %v1679 = vsel %vm496, %v1604, 0
  %v1682 = vsel %vm496, %v1605, 0
  %v1685 = vsel %vm496, %v1606, 0
  %v1688 = vsel %vm496, %v1607, 0
  %v1691 = vsel %vm496, %v1608, 0
  %v1694 = vsel %vm496, %v1609, 0
  %v1697 = vsel %vm496, %v1610, 0
  %v1700 = vsel %vm496, %v1611, 0
  %v1703 = vsel %vm496, %v1612, 0
  %v1706 = vsel %vm496, %v1613, 0
  %v1709 = vsel %vm496, %v1614, 0
  %v1712 = vsel %vm496, %v1615, 0
  %v1715 = vsel %vm496, %v1616, 0
  %v1718 = vsel %vm496, %v1617, 0
  %v1721 = vsel %vm496, %v1618, 0
  %v1724 = vsel %vm496, %v1619, 0
  %v1727 = vsel %vm496, %v1620, 0
  %v1730 = vsel %vm496, %v1621, 0
  %v1733 = vsel %vm496, %v1622, 0
  %v1736 = vsel %vm496, %v1623, 0
  %v1739 = vsel %vm496, %v1624, 0
  %v1742 = vsel %vm496, %v1625, 0
  %v1745 = vsel %vm496, %v1626, 0
  %1747 = vmatprep.subr.bf16.mxu0 0
  %1748 = vmatpush1.bf16.msra.mxu0 %v1643
  %1749 = vmatprep.subr.bf16.mxu0 0
  %1750 = vmatpush1.bf16.msra.mxu0 %v1644
  %1751 = vmatprep.subr.bf16.mxu0 0
  %1752 = vmatpush1.bf16.msra.mxu0 %v1645
  %1753 = vmatprep.subr.bf16.mxu0 0
  %1754 = vmatpush1.bf16.msra.mxu0 %v1646
  %1755 = vmatprep.subr.bf16.mxu0 0
  %1756 = vmatpush1.bf16.msra.mxu0 0
  %1757 = vmatprep.subr.bf16.mxu0 0
  %1758 = vmatpush1.bf16.msra.mxu0 0
  %1759 = vmatprep.subr.bf16.mxu0 0
  %1760 = vmatpush1.bf16.msra.mxu0 0
  %1761 = vmatprep.subr.bf16.mxu0 0
  %1762 = vmatpush1.bf16.msra.mxu0 0
  %1763 = vmatprep.subr.bf16.mxu0 0
  %1764 = vmatpush1.bf16.msra.mxu0 0
  %1765 = vmatprep.subr.bf16.mxu0 0
  %1766 = vmatpush1.bf16.msra.mxu0 0
  %1767 = vmatprep.subr.bf16.mxu0 0
  %1768 = vmatpush1.bf16.msra.mxu0 0
  %1769 = vmatprep.subr.bf16.mxu0 0
  %1770 = vmatpush1.bf16.msra.mxu0 0
  %1771 = vmatprep.subr.bf16.mxu0 0
  %1772 = vmatpush1.bf16.msra.mxu0 0
  %1773 = vmatprep.subr.bf16.mxu0 0
  %1774 = vmatpush1.bf16.msra.mxu0 0
  %1775 = vmatprep.subr.bf16.mxu0 0
  %1776 = vmatpush1.bf16.msra.mxu0 0
  %1777 = vmatprep.subr.bf16.mxu0 0
  %1778 = vmatpush1.bf16.msra.mxu0 0
  %1779 = vmatprep.mubr.bf16.mxu0 0
  %1780 = vmatmul.mubr.bf16.gmra.mrb[0].mxu0 %v1652
  %v1781 = vpop.f32.mrb[0].mxu0
  %v1782 = vadd.f32 0.0, %v1781
  %v1783 = vpop.f32.mrb[0].mxu0
  %v1784 = vpop.f32.mrb[0].mxu0
  %v1785 = vadd.f32 0.0, %v1784
  %v1786 = vpop.f32.mrb[0].mxu0
  %1787 = vmatprep.mubr.bf16.mxu0 0
  %1788 = vmatmul.mubr.bf16.gmra.mrb[0].mxu0 %v1655
  %v1789 = vpop.f32.mrb[0].mxu0
  %v1790 = vadd.f32 0.0, %v1789
  %v1791 = vpop.f32.mrb[0].mxu0
  %v1792 = vpop.f32.mrb[0].mxu0
  %v1793 = vadd.f32 0.0, %v1792
  %v1794 = vpop.f32.mrb[0].mxu0
  %1795 = vmatprep.mubr.bf16.mxu0 0
  %1796 = vmatmul.mubr.bf16.gmra.mrb[0].mxu0 %v1658
  %v1797 = vpop.f32.mrb[0].mxu0
  %v1798 = vadd.f32 0.0, %v1797
  %v1799 = vpop.f32.mrb[0].mxu0
  %v1800 = vpop.f32.mrb[0].mxu0
  %v1801 = vadd.f32 0.0, %v1800
  %v1802 = vpop.f32.mrb[0].mxu0
  %1803 = vmatprep.mubr.bf16.mxu0 0
  %1804 = vmatmul.mubr.bf16.gmra.mrb[0].mxu0 %v1661
  %v1805 = vpop.f32.mrb[0].mxu0
  %v1806 = vadd.f32 0.0, %v1805
  %v1807 = vpop.f32.mrb[0].mxu0
  %v1808 = vpop.f32.mrb[0].mxu0
  %v1809 = vadd.f32 0.0, %v1808
  %v1810 = vpop.f32.mrb[0].mxu0
  %1811 = vmatprep.mubr.bf16.mxu0 0
  %1812 = vmatmul.mubr.bf16.gmra.mrb[0].mxu0 %v1664
  %v1813 = vpop.f32.mrb[0].mxu0
  %v1814 = vadd.f32 0.0, %v1813
  %v1815 = vpop.f32.mrb[0].mxu0
  %v1816 = vpop.f32.mrb[0].mxu0
  %v1817 = vadd.f32 0.0, %v1816
  %v1818 = vpop.f32.mrb[0].mxu0
  %1819 = vmatprep.mubr.bf16.mxu0 0
  %1820 = vmatmul.mubr.bf16.gmra.mrb[0].mxu0 %v1667
  %v1821 = vpop.f32.mrb[0].mxu0
  %v1822 = vadd.f32 0.0, %v1821
  %v1823 = vpop.f32.mrb[0].mxu0
  %v1824 = vpop.f32.mrb[0].mxu0
  %v1825 = vadd.f32 0.0, %v1824
  %v1826 = vpop.f32.mrb[0].mxu0
  %1827 = vmatprep.mubr.bf16.mxu0 0
  %1828 = vmatmul.mubr.bf16.gmra.mrb[0].mxu0 %v1670
  %v1829 = vpop.f32.mrb[0].mxu0
  %v1830 = vadd.f32 0.0, %v1829
  %v1831 = vpop.f32.mrb[0].mxu0
  %v1832 = vpop.f32.mrb[0].mxu0
  %v1833 = vadd.f32 0.0, %v1832
  %v1834 = vpop.f32.mrb[0].mxu0
  %1835 = vmatprep.mubr.bf16.mxu0 0
  %1836 = vmatmul.mubr.bf16.gmra.mrb[0].mxu0 %v1673
  %v1837 = vpop.f32.mrb[0].mxu0
  %v1838 = vadd.f32 0.0, %v1837
  %v1839 = vpop.f32.mrb[0].mxu0
  %v1840 = vpop.f32.mrb[0].mxu0
  %v1841 = vadd.f32 0.0, %v1840
  %v1842 = vpop.f32.mrb[0].mxu0
  %1843 = vmatprep.mubr.bf16.mxu0 0
  %1844 = vmatmul.mubr.bf16.gmra.mrb[0].mxu0 %v1676
  %v1845 = vpop.f32.mrb[0].mxu0
  %v1846 = vadd.f32 0.0, %v1845
  %v1847 = vpop.f32.mrb[0].mxu0
  %v1848 = vpop.f32.mrb[0].mxu0
  %v1849 = vadd.f32 0.0, %v1848
  %v1850 = vpop.f32.mrb[0].mxu0
  %1851 = vmatprep.mubr.bf16.mxu0 0
  %1852 = vmatmul.mubr.bf16.gmra.mrb[0].mxu0 %v1679
  %v1853 = vpop.f32.mrb[0].mxu0
  %v1854 = vadd.f32 0.0, %v1853
  %v1855 = vpop.f32.mrb[0].mxu0
  %v1856 = vpop.f32.mrb[0].mxu0
  %v1857 = vadd.f32 0.0, %v1856
  %v1858 = vpop.f32.mrb[0].mxu0
  %1859 = vmatprep.mubr.bf16.mxu0 0
  %1860 = vmatmul.mubr.bf16.gmra.mrb[0].mxu0 %v1682
  %v1861 = vpop.f32.mrb[0].mxu0
  %v1862 = vadd.f32 0.0, %v1861
  %v1863 = vpop.f32.mrb[0].mxu0
  %v1864 = vpop.f32.mrb[0].mxu0
  %v1865 = vadd.f32 0.0, %v1864
  %v1866 = vpop.f32.mrb[0].mxu0
  %1867 = vmatprep.mubr.bf16.mxu0 0
  %1868 = vmatmul.mubr.bf16.gmra.mrb[0].mxu0 %v1685
  %v1869 = vpop.f32.mrb[0].mxu0
  %v1870 = vadd.f32 0.0, %v1869
  %v1871 = vpop.f32.mrb[0].mxu0
  %v1872 = vpop.f32.mrb[0].mxu0
  %v1873 = vadd.f32 0.0, %v1872
  %v1874 = vpop.f32.mrb[0].mxu0
  %1875 = vmatprep.mubr.bf16.mxu0 0
  %1876 = vmatmul.mubr.bf16.gmra.mrb[0].mxu0 %v1688
  %v1877 = vpop.f32.mrb[0].mxu0
  %v1878 = vadd.f32 0.0, %v1877
  %v1879 = vpop.f32.mrb[0].mxu0
  %v1880 = vpop.f32.mrb[0].mxu0
  %v1881 = vadd.f32 0.0, %v1880
  %v1882 = vpop.f32.mrb[0].mxu0
  %1883 = vmatprep.mubr.bf16.mxu0 0
  %1884 = vmatmul.mubr.bf16.gmra.mrb[0].mxu0 %v1691
  %v1885 = vpop.f32.mrb[0].mxu0
  %v1886 = vadd.f32 0.0, %v1885
  %v1887 = vpop.f32.mrb[0].mxu0
  %v1888 = vpop.f32.mrb[0].mxu0
  %v1889 = vadd.f32 0.0, %v1888
  %v1890 = vpop.f32.mrb[0].mxu0
  %1891 = vmatprep.mubr.bf16.mxu0 0
  %1892 = vmatmul.mubr.bf16.gmra.mrb[0].mxu0 %v1694
  %v1893 = vpop.f32.mrb[0].mxu0
  %v1894 = vadd.f32 0.0, %v1893
  %v1895 = vpop.f32.mrb[0].mxu0
  %v1896 = vpop.f32.mrb[0].mxu0
  %v1897 = vadd.f32 0.0, %v1896
  %v1898 = vpop.f32.mrb[0].mxu0
  %1899 = vmatprep.mubr.bf16.mxu0 0
  %1900 = vmatmul.mubr.bf16.gmra.mrb[0].mxu0 %v1697
  %v1901 = vpop.f32.mrb[0].mxu0
  %v1902 = vadd.f32 0.0, %v1901
  %v1903 = vpop.f32.mrb[0].mxu0
  %v1904 = vpop.f32.mrb[0].mxu0
  %v1905 = vadd.f32 0.0, %v1904
  %v1906 = vpop.f32.mrb[0].mxu0
  %1907 = vmatprep.mubr.bf16.mxu0 0
  %1908 = vmatmul.mubr.bf16.gmra.mrb[0].mxu0 %v1700
  %v1909 = vpop.f32.mrb[0].mxu0
  %v1910 = vadd.f32 0.0, %v1909
  %v1911 = vpop.f32.mrb[0].mxu0
  %v1912 = vpop.f32.mrb[0].mxu0
  %v1913 = vadd.f32 0.0, %v1912
  %v1914 = vpop.f32.mrb[0].mxu0
  %1915 = vmatprep.mubr.bf16.mxu0 0
  %1916 = vmatmul.mubr.bf16.gmra.mrb[0].mxu0 %v1703
  %v1917 = vpop.f32.mrb[0].mxu0
  %v1918 = vadd.f32 0.0, %v1917
  %v1919 = vpop.f32.mrb[0].mxu0
  %v1920 = vpop.f32.mrb[0].mxu0
  %v1921 = vadd.f32 0.0, %v1920
  %v1922 = vpop.f32.mrb[0].mxu0
  %1923 = vmatprep.mubr.bf16.mxu0 0
  %1924 = vmatmul.mubr.bf16.gmra.mrb[0].mxu0 %v1706
  %v1925 = vpop.f32.mrb[0].mxu0
  %v1926 = vadd.f32 0.0, %v1925
  %v1927 = vpop.f32.mrb[0].mxu0
  %v1928 = vpop.f32.mrb[0].mxu0
  %v1929 = vadd.f32 0.0, %v1928
  %v1930 = vpop.f32.mrb[0].mxu0
  %1931 = vmatprep.mubr.bf16.mxu0 0
  %1932 = vmatmul.mubr.bf16.gmra.mrb[0].mxu0 %v1709
  %v1933 = vpop.f32.mrb[0].mxu0
  %v1934 = vadd.f32 0.0, %v1933
  %v1935 = vpop.f32.mrb[0].mxu0
  %v1936 = vpop.f32.mrb[0].mxu0
  %v1937 = vadd.f32 0.0, %v1936
  %v1938 = vpop.f32.mrb[0].mxu0
  %1939 = vmatprep.mubr.bf16.mxu0 0
  %1940 = vmatmul.mubr.bf16.gmra.mrb[0].mxu0 %v1712
  %v1941 = vpop.f32.mrb[0].mxu0
  %v1942 = vadd.f32 0.0, %v1941
  %v1943 = vpop.f32.mrb[0].mxu0
  %v1944 = vpop.f32.mrb[0].mxu0
  %v1945 = vadd.f32 0.0, %v1944
  %v1946 = vpop.f32.mrb[0].mxu0
  %1947 = vmatprep.mubr.bf16.mxu0 0
  %1948 = vmatmul.mubr.bf16.gmra.mrb[0].mxu0 %v1715
  %v1949 = vpop.f32.mrb[0].mxu0
  %v1950 = vadd.f32 0.0, %v1949
  %v1951 = vpop.f32.mrb[0].mxu0
  %v1952 = vpop.f32.mrb[0].mxu0
  %v1953 = vadd.f32 0.0, %v1952
  %v1954 = vpop.f32.mrb[0].mxu0
  %1955 = vmatprep.mubr.bf16.mxu0 0
  %1956 = vmatmul.mubr.bf16.gmra.mrb[0].mxu0 %v1718
  %v1957 = vpop.f32.mrb[0].mxu0
  %v1958 = vadd.f32 0.0, %v1957
  %v1959 = vpop.f32.mrb[0].mxu0
  %v1960 = vpop.f32.mrb[0].mxu0
  %v1961 = vadd.f32 0.0, %v1960
  %v1962 = vpop.f32.mrb[0].mxu0
  %1963 = vmatprep.mubr.bf16.mxu0 0
  %1964 = vmatmul.mubr.bf16.gmra.mrb[0].mxu0 %v1721
  %v1965 = vpop.f32.mrb[0].mxu0
  %v1966 = vadd.f32 0.0, %v1965
  %v1967 = vpop.f32.mrb[0].mxu0
  %v1968 = vpop.f32.mrb[0].mxu0
  %v1969 = vadd.f32 0.0, %v1968
  %v1970 = vpop.f32.mrb[0].mxu0
  %1971 = vmatprep.mubr.bf16.mxu0 0
  %1972 = vmatmul.mubr.bf16.gmra.mrb[0].mxu0 %v1724
  %v1973 = vpop.f32.mrb[0].mxu0
  %v1974 = vadd.f32 0.0, %v1973
  %v1975 = vpop.f32.mrb[0].mxu0
  %v1976 = vpop.f32.mrb[0].mxu0
  %v1977 = vadd.f32 0.0, %v1976
  %v1978 = vpop.f32.mrb[0].mxu0
  %1979 = vmatprep.mubr.bf16.mxu0 0
  %1980 = vmatmul.mubr.bf16.gmra.mrb[0].mxu0 %v1727
  %v1981 = vpop.f32.mrb[0].mxu0
  %v1982 = vadd.f32 0.0, %v1981
  %v1983 = vpop.f32.mrb[0].mxu0
  %v1984 = vpop.f32.mrb[0].mxu0
  %v1985 = vadd.f32 0.0, %v1984
  %v1986 = vpop.f32.mrb[0].mxu0
  %1987 = vmatprep.mubr.bf16.mxu0 0
  %1988 = vmatmul.mubr.bf16.gmra.mrb[0].mxu0 %v1730
  %v1989 = vpop.f32.mrb[0].mxu0
  %v1990 = vadd.f32 0.0, %v1989
  %v1991 = vpop.f32.mrb[0].mxu0
  %v1992 = vpop.f32.mrb[0].mxu0
  %v1993 = vadd.f32 0.0, %v1992
  %v1994 = vpop.f32.mrb[0].mxu0
  %1995 = vmatprep.mubr.bf16.mxu0 0
  %1996 = vmatmul.mubr.bf16.gmra.mrb[0].mxu0 %v1733
  %v1997 = vpop.f32.mrb[0].mxu0
  %v1998 = vadd.f32 0.0, %v1997
  %v1999 = vpop.f32.mrb[0].mxu0
  %v2000 = vpop.f32.mrb[0].mxu0
  %v2001 = vadd.f32 0.0, %v2000
  %v2002 = vpop.f32.mrb[0].mxu0
  %2003 = vmatprep.mubr.bf16.mxu0 0
  %2004 = vmatmul.mubr.bf16.gmra.mrb[0].mxu0 %v1736
  %v2005 = vpop.f32.mrb[0].mxu0
  %v2006 = vadd.f32 0.0, %v2005
  %v2007 = vpop.f32.mrb[0].mxu0
  %v2008 = vpop.f32.mrb[0].mxu0
  %v2009 = vadd.f32 0.0, %v2008
  %v2010 = vpop.f32.mrb[0].mxu0
  %2011 = vmatprep.mubr.bf16.mxu0 0
  %2012 = vmatmul.mubr.bf16.gmra.mrb[0].mxu0 %v1739
  %v2013 = vpop.f32.mrb[0].mxu0
  %v2014 = vadd.f32 0.0, %v2013
  %v2015 = vpop.f32.mrb[0].mxu0
  %v2016 = vpop.f32.mrb[0].mxu0
  %v2017 = vadd.f32 0.0, %v2016
  %v2018 = vpop.f32.mrb[0].mxu0
  %2019 = vmatprep.mubr.bf16.mxu0 0
  %2020 = vmatmul.mubr.bf16.gmra.mrb[0].mxu0 %v1742
  %v2021 = vpop.f32.mrb[0].mxu0
  %v2022 = vadd.f32 0.0, %v2021
  %v2023 = vpop.f32.mrb[0].mxu0
  %v2024 = vpop.f32.mrb[0].mxu0
  %v2025 = vadd.f32 0.0, %v2024
  %v2026 = vpop.f32.mrb[0].mxu0
  %2027 = vmatprep.mubr.bf16.mxu0 0
  %2028 = vmatmul.mubr.bf16.gmra.mrb[0].mxu0 %v1745
  %v2029 = vpop.f32.mrb[0].mxu0
  %v2030 = vadd.f32 0.0, %v2029
  %v2031 = vpop.f32.mrb[0].mxu0
  %v2032 = vpop.f32.mrb[0].mxu0
  %v2033 = vadd.f32 0.0, %v2032
  %v2034 = vpop.f32.mrb[0].mxu0
  %2035 = vdwg.mxu0
  %v2036 = vld [vmem:[%s12] sm:$0x3]
  %v2101 = vunpack.c.l.b16 %v240
  %v2102 = vunpack.c.l.b16 %v241
  %v2103 = vunpack.c.l.b16 %v242
  %v2104 = vunpack.c.l.b16 %v243
  %v2105 = vunpack.c.l.b16 %v244
  %v2106 = vunpack.c.l.b16 %v245
  %v2107 = vunpack.c.l.b16 %v246
  %v2108 = vunpack.c.l.b16 %v247
  %v2109 = vunpack.c.l.b16 %v248
  %v2110 = vunpack.c.l.b16 %v249
  %v2111 = vunpack.c.l.b16 %v250
  %v2112 = vunpack.c.l.b16 %v251
  %v2113 = vunpack.c.l.b16 %v252
  %v2114 = vunpack.c.l.b16 %v253
  %v2115 = vunpack.c.l.b16 %v254
  %v2116 = vunpack.c.l.b16 %v255
  %v2117 = vunpack.c.l.b16 %v256
  %v2118 = vunpack.c.l.b16 %v257
  %v2119 = vunpack.c.l.b16 %v258
  %v2120 = vunpack.c.l.b16 %v259
  %v2121 = vunpack.c.l.b16 %v260
  %v2122 = vunpack.c.l.b16 %v261
  %v2123 = vunpack.c.l.b16 %v262
  %v2124 = vunpack.c.l.b16 %v263
  %v2125 = vunpack.c.l.b16 %v264
  %v2126 = vunpack.c.l.b16 %v265
  %v2127 = vunpack.c.l.b16 %v266
  %v2128 = vunpack.c.l.b16 %v267
  %v2129 = vunpack.c.l.b16 %v268
  %v2130 = vunpack.c.l.b16 %v269
  %v2131 = vunpack.c.l.b16 %v270
  %v2132 = vunpack.c.l.b16 %v271
  %v2133 = vunpack.c.l.b16 %v272
  %v2134 = vunpack.c.l.b16 %v273
  %v2135 = vunpack.c.l.b16 %v274
  %v2136 = vunpack.c.l.b16 %v275
  %v2137 = vunpack.c.l.b16 %v276
  %v2138 = vunpack.c.l.b16 %v277
  %v2139 = vunpack.c.l.b16 %v278
  %v2140 = vunpack.c.l.b16 %v279
  %v2141 = vunpack.c.l.b16 %v280
  %v2142 = vunpack.c.l.b16 %v281
  %v2143 = vunpack.c.l.b16 %v282
  %v2144 = vunpack.c.l.b16 %v283
  %v2145 = vunpack.c.l.b16 %v284
  %v2146 = vunpack.c.l.b16 %v285
  %v2147 = vunpack.c.l.b16 %v286
  %v2148 = vunpack.c.l.b16 %v287
  %v2149 = vunpack.c.l.b16 %v288
  %v2150 = vunpack.c.l.b16 %v289
  %v2151 = vunpack.c.l.b16 %v290
  %v2152 = vunpack.c.l.b16 %v291
  %v2153 = vunpack.c.l.b16 %v292
  %v2154 = vunpack.c.l.b16 %v293
  %v2155 = vunpack.c.l.b16 %v294
  %v2156 = vunpack.c.l.b16 %v295
  %v2157 = vunpack.c.l.b16 %v296
  %v2158 = vunpack.c.l.b16 %v297
  %v2159 = vunpack.c.l.b16 %v298
  %v2160 = vunpack.c.l.b16 %v299
  %v2161 = vunpack.c.l.b16 %v300
  %v2162 = vunpack.c.l.b16 %v301
  %v2163 = vunpack.c.l.b16 %v302
  %v2164 = vunpack.c.l.b16 %v303
  %v2165 = vpack.c.b16 %v2102, %v2101
  %v2166 = vpack.c.b16 %v2104, %v2103
  %v2167 = vpack.c.b16 %v2106, %v2105
  %v2168 = vpack.c.b16 %v2108, %v2107
  %v2169 = vpack.c.b16 %v2110, %v2109
  %v2170 = vpack.c.b16 %v2112, %v2111
  %v2171 = vpack.c.b16 %v2114, %v2113
  %v2172 = vpack.c.b16 %v2116, %v2115
  %v2173 = vpack.c.b16 %v2118, %v2117
  %v2174 = vpack.c.b16 %v2120, %v2119
  %v2175 = vpack.c.b16 %v2122, %v2121
  %v2176 = vpack.c.b16 %v2124, %v2123
  %v2177 = vpack.c.b16 %v2126, %v2125
  %v2178 = vpack.c.b16 %v2128, %v2127
  %v2179 = vpack.c.b16 %v2130, %v2129
  %v2180 = vpack.c.b16 %v2132, %v2131
  %v2181 = vpack.c.b16 %v2134, %v2133
  %v2182 = vpack.c.b16 %v2136, %v2135
  %v2183 = vpack.c.b16 %v2138, %v2137
  %v2184 = vpack.c.b16 %v2140, %v2139
  %v2185 = vpack.c.b16 %v2142, %v2141
  %v2186 = vpack.c.b16 %v2144, %v2143
  %v2187 = vpack.c.b16 %v2146, %v2145
  %v2188 = vpack.c.b16 %v2148, %v2147
  %v2189 = vpack.c.b16 %v2150, %v2149
  %v2190 = vpack.c.b16 %v2152, %v2151
  %v2191 = vpack.c.b16 %v2154, %v2153
  %v2192 = vpack.c.b16 %v2156, %v2155
  %v2193 = vpack.c.b16 %v2158, %v2157
  %v2194 = vpack.c.b16 %v2160, %v2159
  %v2195 = vpack.c.b16 %v2162, %v2161
  %v2196 = vpack.c.b16 %v2164, %v2163
  %vm2197 = vcmask 31744
  %v2199 = vsel %vm2197, %v2165, 0
  %v2202 = vsel %vm2197, %v2166, 0
  %v2205 = vsel %vm2197, %v2167, 0
  %v2208 = vsel %vm2197, %v2168, 0
  %v2211 = vsel %vm2197, %v2169, 0
  %v2214 = vsel %vm2197, %v2170, 0
  %v2217 = vsel %vm2197, %v2171, 0
  %v2220 = vsel %vm2197, %v2172, 0
  %v2223 = vsel %vm2197, %v2173, 0
  %v2226 = vsel %vm2197, %v2174, 0
  %v2229 = vsel %vm2197, %v2175, 0
  %v2232 = vsel %vm2197, %v2176, 0
  %v2235 = vsel %vm2197, %v2177, 0
  %v2238 = vsel %vm2197, %v2178, 0
  %v2241 = vsel %vm2197, %v2179, 0
  %v2244 = vsel %vm2197, %v2180, 0
  %v2247 = vsel %vm2197, %v2181, 0
  %v2250 = vsel %vm2197, %v2182, 0
  %v2253 = vsel %vm2197, %v2183, 0
  %v2256 = vsel %vm2197, %v2184, 0
  %v2259 = vsel %vm2197, %v2185, 0
  %v2262 = vsel %vm2197, %v2186, 0
  %v2265 = vsel %vm2197, %v2187, 0
  %v2268 = vsel %vm2197, %v2188, 0
  %v2271 = vsel %vm2197, %v2189, 0
  %v2274 = vsel %vm2197, %v2190, 0
  %v2277 = vsel %vm2197, %v2191, 0
  %v2280 = vsel %vm2197, %v2192, 0
  %v2283 = vsel %vm2197, %v2193, 0
  %v2286 = vsel %vm2197, %v2194, 0
  %v2289 = vsel %vm2197, %v2195, 0
  %v2292 = vsel %vm2197, %v2196, 0
  %vm2294 = vcmask 1041408
  %v2296 = vsel %vm2294, %v2036, 0
  %2298 = vmatprep.subr.bf16.mxu0 0
  %2299 = vmatpush1.bf16.msra.mxu0 %v2296
  %2300 = vmatprep.subr.bf16.mxu0 0
  %2301 = vmatpush1.bf16.msra.mxu0 0
  %2302 = vmatprep.subr.bf16.mxu0 0
  %2303 = vmatpush1.bf16.msra.mxu0 0
  %2304 = vmatprep.subr.bf16.mxu0 0
  %2305 = vmatpush1.bf16.msra.mxu0 0
  %2306 = vmatprep.subr.bf16.mxu0 0
  %2307 = vmatpush1.bf16.msra.mxu0 0
  %2308 = vmatprep.subr.bf16.mxu0 0
  %2309 = vmatpush1.bf16.msra.mxu0 0
  %2310 = vmatprep.subr.bf16.mxu0 0
  %2311 = vmatpush1.bf16.msra.mxu0 0
  %2312 = vmatprep.subr.bf16.mxu0 0
  %2313 = vmatpush1.bf16.msra.mxu0 0
  %2314 = vmatprep.subr.bf16.mxu0 0
  %2315 = vmatpush1.bf16.msra.mxu0 0
  %2316 = vmatprep.subr.bf16.mxu0 0
  %2317 = vmatpush1.bf16.msra.mxu0 0
  %2318 = vmatprep.subr.bf16.mxu0 0
  %2319 = vmatpush1.bf16.msra.mxu0 0
  %2320 = vmatprep.subr.bf16.mxu0 0
  %2321 = vmatpush1.bf16.msra.mxu0 0
  %2322 = vmatprep.subr.bf16.mxu0 0
  %2323 = vmatpush1.bf16.msra.mxu0 0
  %2324 = vmatprep.subr.bf16.mxu0 0
  %2325 = vmatpush1.bf16.msra.mxu0 0
  %2326 = vmatprep.subr.bf16.mxu0 0
  %2327 = vmatpush1.bf16.msra.mxu0 0
  %2328 = vmatprep.subr.bf16.mxu0 0
  %2329 = vmatpush1.bf16.msra.mxu0 0
  %2330 = vmatprep.mubr.bf16.mxu0 0
  %2331 = vmatmul.mubr.bf16.gmra.mrb[0].mxu0 %v2199
  %v2332 = vpop.f32.mrb[0].mxu0
  %v2333 = vadd.f32 0.0, %v2332
  %v2334 = vpop.f32.mrb[0].mxu0
  %v2335 = vpop.f32.mrb[0].mxu0
  %v2336 = vadd.f32 0.0, %v2335
  %v2337 = vpop.f32.mrb[0].mxu0
  %2338 = vmatprep.mubr.bf16.mxu0 0
  %2339 = vmatmul.mubr.bf16.gmra.mrb[0].mxu0 %v2202
  %v2340 = vpop.f32.mrb[0].mxu0
  %v2341 = vadd.f32 0.0, %v2340
  %v2342 = vpop.f32.mrb[0].mxu0
  %v2343 = vpop.f32.mrb[0].mxu0
  %v2344 = vadd.f32 0.0, %v2343
  %v2345 = vpop.f32.mrb[0].mxu0
  %2346 = vmatprep.mubr.bf16.mxu0 0
  %2347 = vmatmul.mubr.bf16.gmra.mrb[0].mxu0 %v2205
  %v2348 = vpop.f32.mrb[0].mxu0
  %v2349 = vadd.f32 0.0, %v2348
  %v2350 = vpop.f32.mrb[0].mxu0
  %v2351 = vpop.f32.mrb[0].mxu0
  %v2352 = vadd.f32 0.0, %v2351
  %v2353 = vpop.f32.mrb[0].mxu0
  %2354 = vmatprep.mubr.bf16.mxu0 0
  %2355 = vmatmul.mubr.bf16.gmra.mrb[0].mxu0 %v2208
  %v2356 = vpop.f32.mrb[0].mxu0
  %v2357 = vadd.f32 0.0, %v2356
  %v2358 = vpop.f32.mrb[0].mxu0
  %v2359 = vpop.f32.mrb[0].mxu0
  %v2360 = vadd.f32 0.0, %v2359
  %v2361 = vpop.f32.mrb[0].mxu0
  %2362 = vmatprep.mubr.bf16.mxu0 0
  %2363 = vmatmul.mubr.bf16.gmra.mrb[0].mxu0 %v2211
  %v2364 = vpop.f32.mrb[0].mxu0
  %v2365 = vadd.f32 0.0, %v2364
  %v2366 = vpop.f32.mrb[0].mxu0
  %v2367 = vpop.f32.mrb[0].mxu0
  %v2368 = vadd.f32 0.0, %v2367
  %v2369 = vpop.f32.mrb[0].mxu0
  %2370 = vmatprep.mubr.bf16.mxu0 0
  %2371 = vmatmul.mubr.bf16.gmra.mrb[0].mxu0 %v2214
  %v2372 = vpop.f32.mrb[0].mxu0
  %v2373 = vadd.f32 0.0, %v2372
  %v2374 = vpop.f32.mrb[0].mxu0
  %v2375 = vpop.f32.mrb[0].mxu0
  %v2376 = vadd.f32 0.0, %v2375
  %v2377 = vpop.f32.mrb[0].mxu0
  %2378 = vmatprep.mubr.bf16.mxu0 0
  %2379 = vmatmul.mubr.bf16.gmra.mrb[0].mxu0 %v2217
  %v2380 = vpop.f32.mrb[0].mxu0
  %v2381 = vadd.f32 0.0, %v2380
  %v2382 = vpop.f32.mrb[0].mxu0
  %v2383 = vpop.f32.mrb[0].mxu0
  %v2384 = vadd.f32 0.0, %v2383
  %v2385 = vpop.f32.mrb[0].mxu0
  %2386 = vmatprep.mubr.bf16.mxu0 0
  %2387 = vmatmul.mubr.bf16.gmra.mrb[0].mxu0 %v2220
  %v2388 = vpop.f32.mrb[0].mxu0
  %v2389 = vadd.f32 0.0, %v2388
  %v2390 = vpop.f32.mrb[0].mxu0
  %v2391 = vpop.f32.mrb[0].mxu0
  %v2392 = vadd.f32 0.0, %v2391
  %v2393 = vpop.f32.mrb[0].mxu0
  %2394 = vmatprep.mubr.bf16.mxu0 0
  %2395 = vmatmul.mubr.bf16.gmra.mrb[0].mxu0 %v2223
  %v2396 = vpop.f32.mrb[0].mxu0
  %v2397 = vadd.f32 0.0, %v2396
  %v2398 = vpop.f32.mrb[0].mxu0
  %v2399 = vpop.f32.mrb[0].mxu0
  %v2400 = vadd.f32 0.0, %v2399
  %v2401 = vpop.f32.mrb[0].mxu0
  %2402 = vmatprep.mubr.bf16.mxu0 0
  %2403 = vmatmul.mubr.bf16.gmra.mrb[0].mxu0 %v2226
  %v2404 = vpop.f32.mrb[0].mxu0
  %v2405 = vadd.f32 0.0, %v2404
  %v2406 = vpop.f32.mrb[0].mxu0
  %v2407 = vpop.f32.mrb[0].mxu0
  %v2408 = vadd.f32 0.0, %v2407
  %v2409 = vpop.f32.mrb[0].mxu0
  %2410 = vmatprep.mubr.bf16.mxu0 0
  %2411 = vmatmul.mubr.bf16.gmra.mrb[0].mxu0 %v2229
  %v2412 = vpop.f32.mrb[0].mxu0
  %v2413 = vadd.f32 0.0, %v2412
  %v2414 = vpop.f32.mrb[0].mxu0
  %v2415 = vpop.f32.mrb[0].mxu0
  %v2416 = vadd.f32 0.0, %v2415
  %v2417 = vpop.f32.mrb[0].mxu0
  %2418 = vmatprep.mubr.bf16.mxu0 0
  %2419 = vmatmul.mubr.bf16.gmra.mrb[0].mxu0 %v2232
  %v2420 = vpop.f32.mrb[0].mxu0
  %v2421 = vadd.f32 0.0, %v2420
  %v2422 = vpop.f32.mrb[0].mxu0
  %v2423 = vpop.f32.mrb[0].mxu0
  %v2424 = vadd.f32 0.0, %v2423
  %v2425 = vpop.f32.mrb[0].mxu0
  %2426 = vmatprep.mubr.bf16.mxu0 0
  %2427 = vmatmul.mubr.bf16.gmra.mrb[0].mxu0 %v2235
  %v2428 = vpop.f32.mrb[0].mxu0
  %v2429 = vadd.f32 0.0, %v2428
  %v2430 = vpop.f32.mrb[0].mxu0
  %v2431 = vpop.f32.mrb[0].mxu0
  %v2432 = vadd.f32 0.0, %v2431
  %v2433 = vpop.f32.mrb[0].mxu0
  %2434 = vmatprep.mubr.bf16.mxu0 0
  %2435 = vmatmul.mubr.bf16.gmra.mrb[0].mxu0 %v2238
  %v2436 = vpop.f32.mrb[0].mxu0
  %v2437 = vadd.f32 0.0, %v2436
  %v2438 = vpop.f32.mrb[0].mxu0
  %v2439 = vpop.f32.mrb[0].mxu0
  %v2440 = vadd.f32 0.0, %v2439
  %v2441 = vpop.f32.mrb[0].mxu0
  %2442 = vmatprep.mubr.bf16.mxu0 0
  %2443 = vmatmul.mubr.bf16.gmra.mrb[0].mxu0 %v2241
  %v2444 = vpop.f32.mrb[0].mxu0
  %v2445 = vadd.f32 0.0, %v2444
  %v2446 = vpop.f32.mrb[0].mxu0
  %v2447 = vpop.f32.mrb[0].mxu0
  %v2448 = vadd.f32 0.0, %v2447
  %v2449 = vpop.f32.mrb[0].mxu0
  %2450 = vmatprep.mubr.bf16.mxu0 0
  %2451 = vmatmul.mubr.bf16.gmra.mrb[0].mxu0 %v2244
  %v2452 = vpop.f32.mrb[0].mxu0
  %v2453 = vadd.f32 0.0, %v2452
  %v2454 = vpop.f32.mrb[0].mxu0
  %v2455 = vpop.f32.mrb[0].mxu0
  %v2456 = vadd.f32 0.0, %v2455
  %v2457 = vpop.f32.mrb[0].mxu0
  %2458 = vmatprep.mubr.bf16.mxu0 0
  %2459 = vmatmul.mubr.bf16.gmra.mrb[0].mxu0 %v2247
  %v2460 = vpop.f32.mrb[0].mxu0
  %v2461 = vadd.f32 0.0, %v2460
  %v2462 = vpop.f32.mrb[0].mxu0
  %v2463 = vpop.f32.mrb[0].mxu0
  %v2464 = vadd.f32 0.0, %v2463
  %v2465 = vpop.f32.mrb[0].mxu0
  %2466 = vmatprep.mubr.bf16.mxu0 0
  %2467 = vmatmul.mubr.bf16.gmra.mrb[0].mxu0 %v2250
  %v2468 = vpop.f32.mrb[0].mxu0
  %v2469 = vadd.f32 0.0, %v2468
  %v2470 = vpop.f32.mrb[0].mxu0
  %v2471 = vpop.f32.mrb[0].mxu0
  %v2472 = vadd.f32 0.0, %v2471
  %v2473 = vpop.f32.mrb[0].mxu0
  %2474 = vmatprep.mubr.bf16.mxu0 0
  %2475 = vmatmul.mubr.bf16.gmra.mrb[0].mxu0 %v2253
  %v2476 = vpop.f32.mrb[0].mxu0
  %v2477 = vadd.f32 0.0, %v2476
  %v2478 = vpop.f32.mrb[0].mxu0
  %v2479 = vpop.f32.mrb[0].mxu0
  %v2480 = vadd.f32 0.0, %v2479
  %v2481 = vpop.f32.mrb[0].mxu0
  %2482 = vmatprep.mubr.bf16.mxu0 0
  %2483 = vmatmul.mubr.bf16.gmra.mrb[0].mxu0 %v2256
  %v2484 = vpop.f32.mrb[0].mxu0
  %v2485 = vadd.f32 0.0, %v2484
  %v2486 = vpop.f32.mrb[0].mxu0
  %v2487 = vpop.f32.mrb[0].mxu0
  %v2488 = vadd.f32 0.0, %v2487
  %v2489 = vpop.f32.mrb[0].mxu0
  %2490 = vmatprep.mubr.bf16.mxu0 0
  %2491 = vmatmul.mubr.bf16.gmra.mrb[0].mxu0 %v2259
  %v2492 = vpop.f32.mrb[0].mxu0
  %v2493 = vadd.f32 0.0, %v2492
  %v2494 = vpop.f32.mrb[0].mxu0
  %v2495 = vpop.f32.mrb[0].mxu0
  %v2496 = vadd.f32 0.0, %v2495
  %v2497 = vpop.f32.mrb[0].mxu0
  %2498 = vmatprep.mubr.bf16.mxu0 0
  %2499 = vmatmul.mubr.bf16.gmra.mrb[0].mxu0 %v2262
  %v2500 = vpop.f32.mrb[0].mxu0
  %v2501 = vadd.f32 0.0, %v2500
  %v2502 = vpop.f32.mrb[0].mxu0
  %v2503 = vpop.f32.mrb[0].mxu0
  %v2504 = vadd.f32 0.0, %v2503
  %v2505 = vpop.f32.mrb[0].mxu0
  %2506 = vmatprep.mubr.bf16.mxu0 0
  %2507 = vmatmul.mubr.bf16.gmra.mrb[0].mxu0 %v2265
  %v2508 = vpop.f32.mrb[0].mxu0
  %v2509 = vadd.f32 0.0, %v2508
  %v2510 = vpop.f32.mrb[0].mxu0
  %v2511 = vpop.f32.mrb[0].mxu0
  %v2512 = vadd.f32 0.0, %v2511
  %v2513 = vpop.f32.mrb[0].mxu0
  %2514 = vmatprep.mubr.bf16.mxu0 0
  %2515 = vmatmul.mubr.bf16.gmra.mrb[0].mxu0 %v2268
  %v2516 = vpop.f32.mrb[0].mxu0
  %v2517 = vadd.f32 0.0, %v2516
  %v2518 = vpop.f32.mrb[0].mxu0
  %v2519 = vpop.f32.mrb[0].mxu0
  %v2520 = vadd.f32 0.0, %v2519
  %v2521 = vpop.f32.mrb[0].mxu0
  %2522 = vmatprep.mubr.bf16.mxu0 0
  %2523 = vmatmul.mubr.bf16.gmra.mrb[0].mxu0 %v2271
  %v2524 = vpop.f32.mrb[0].mxu0
  %v2525 = vadd.f32 0.0, %v2524
  %v2526 = vpop.f32.mrb[0].mxu0
  %v2527 = vpop.f32.mrb[0].mxu0
  %v2528 = vadd.f32 0.0, %v2527
  %v2529 = vpop.f32.mrb[0].mxu0
  %2530 = vmatprep.mubr.bf16.mxu0 0
  %2531 = vmatmul.mubr.bf16.gmra.mrb[0].mxu0 %v2274
  %v2532 = vpop.f32.mrb[0].mxu0
  %v2533 = vadd.f32 0.0, %v2532
  %v2534 = vpop.f32.mrb[0].mxu0
  %v2535 = vpop.f32.mrb[0].mxu0
  %v2536 = vadd.f32 0.0, %v2535
  %v2537 = vpop.f32.mrb[0].mxu0
  %2538 = vmatprep.mubr.bf16.mxu0 0
  %2539 = vmatmul.mubr.bf16.gmra.mrb[0].mxu0 %v2277
  %v2540 = vpop.f32.mrb[0].mxu0
  %v2541 = vadd.f32 0.0, %v2540
  %v2542 = vpop.f32.mrb[0].mxu0
  %v2543 = vpop.f32.mrb[0].mxu0
  %v2544 = vadd.f32 0.0, %v2543
  %v2545 = vpop.f32.mrb[0].mxu0
  %2546 = vmatprep.mubr.bf16.mxu0 0
  %2547 = vmatmul.mubr.bf16.gmra.mrb[0].mxu0 %v2280
  %v2548 = vpop.f32.mrb[0].mxu0
  %v2549 = vadd.f32 0.0, %v2548
  %v2550 = vpop.f32.mrb[0].mxu0
  %v2551 = vpop.f32.mrb[0].mxu0
  %v2552 = vadd.f32 0.0, %v2551
  %v2553 = vpop.f32.mrb[0].mxu0
  %2554 = vmatprep.mubr.bf16.mxu0 0
  %2555 = vmatmul.mubr.bf16.gmra.mrb[0].mxu0 %v2283
  %v2556 = vpop.f32.mrb[0].mxu0
  %v2557 = vadd.f32 0.0, %v2556
  %v2558 = vpop.f32.mrb[0].mxu0
  %v2559 = vpop.f32.mrb[0].mxu0
  %v2560 = vadd.f32 0.0, %v2559
  %v2561 = vpop.f32.mrb[0].mxu0
  %2562 = vmatprep.mubr.bf16.mxu0 0
  %2563 = vmatmul.mubr.bf16.gmra.mrb[0].mxu0 %v2286
  %v2564 = vpop.f32.mrb[0].mxu0
  %v2565 = vadd.f32 0.0, %v2564
  %v2566 = vpop.f32.mrb[0].mxu0
  %v2567 = vpop.f32.mrb[0].mxu0
  %v2568 = vadd.f32 0.0, %v2567
  %v2569 = vpop.f32.mrb[0].mxu0
  %2570 = vmatprep.mubr.bf16.mxu0 0
  %2571 = vmatmul.mubr.bf16.gmra.mrb[0].mxu0 %v2289
  %v2572 = vpop.f32.mrb[0].mxu0
  %v2573 = vadd.f32 0.0, %v2572
  %v2574 = vpop.f32.mrb[0].mxu0
  %v2575 = vpop.f32.mrb[0].mxu0
  %v2576 = vadd.f32 0.0, %v2575
  %v2577 = vpop.f32.mrb[0].mxu0
  %2578 = vmatprep.mubr.bf16.mxu0 0
  %2579 = vmatmul.mubr.bf16.gmra.mrb[0].mxu0 %v2292
  %v2580 = vpop.f32.mrb[0].mxu0
  %v2581 = vadd.f32 0.0, %v2580
  %v2582 = vpop.f32.mrb[0].mxu0
  %v2583 = vpop.f32.mrb[0].mxu0
  %v2584 = vadd.f32 0.0, %v2583
  %v2585 = vpop.f32.mrb[0].mxu0
  %2586 = vdwg.mxu0
  %v2587 = vld [vmem:[%s4] sm:$0xf]
  %v2588 = vld [vmem:[%s4 + $0x4] sm:$0xf]
  %v2589 = vld [vmem:[%s4 + $0x8] sm:$0xf]
  %v2590 = vld [vmem:[%s4 + $0xc] sm:$0xf]
  %v2591 = vld [vmem:[%s4 + $0x10] sm:$0xf]
  %v2592 = vld [vmem:[%s4 + $0x14] sm:$0xf]
  %v2593 = vld [vmem:[%s4 + $0x18] sm:$0xf]
  %v2594 = vld [vmem:[%s4 + $0x1c] sm:$0xf]
  %v2595 = vld [vmem:[%s5] sm:$0xf]
  %v2596 = vld [vmem:[%s5 + $0x4] sm:$0xf]
  %v2597 = vld [vmem:[%s5 + $0x8] sm:$0xf]
  %v2598 = vld [vmem:[%s5 + $0xc] sm:$0xf]
  %v2599 = vld [vmem:[%s5 + $0x10] sm:$0xf]
  %v2600 = vld [vmem:[%s5 + $0x14] sm:$0xf]
  %v2601 = vld [vmem:[%s5 + $0x18] sm:$0xf]
  %v2602 = vld [vmem:[%s5 + $0x1c] sm:$0xf]
  %v2611 = vunpack.c.l.b16 %v2595
  %v2612 = vunpack.c.l.b16 %v2596
  %v2613 = vunpack.c.l.b16 %v2597
  %v2614 = vunpack.c.l.b16 %v2598
  %v2615 = vunpack.c.l.b16 %v2599
  %v2616 = vunpack.c.l.b16 %v2600
  %v2617 = vunpack.c.l.b16 %v2601
  %v2618 = vunpack.c.l.b16 %v2602
  %v2619 = vpack.c.b16 %v2612, %v2611
  %v2620 = vpack.c.b16 %v2614, %v2613
  %v2621 = vpack.c.b16 %v2616, %v2615
  %v2622 = vpack.c.b16 %v2618, %v2617
  %2627 = vmatprep.subr.bf16.mxu0 0
  %2628 = vmatpush1.bf16.msra.mxu0 %v2619
  %2629 = vmatprep.subr.bf16.mxu0 0
  %2630 = vmatpush1.bf16.msra.mxu0 %v2620
  %2631 = vmatprep.subr.bf16.mxu0 0
  %2632 = vmatpush1.bf16.msra.mxu0 %v2621
  %2633 = vmatprep.subr.bf16.mxu0 0
  %2634 = vmatpush1.bf16.msra.mxu0 %v2622
  %2635 = vmatprep.subr.bf16.mxu0 0
  %2636 = vmatpush1.bf16.msra.mxu0 0
  %2637 = vmatprep.subr.bf16.mxu0 0
  %2638 = vmatpush1.bf16.msra.mxu0 0
  %2639 = vmatprep.subr.bf16.mxu0 0
  %2640 = vmatpush1.bf16.msra.mxu0 0
  %2641 = vmatprep.subr.bf16.mxu0 0
  %2642 = vmatpush1.bf16.msra.mxu0 0
  %2643 = vmatprep.subr.bf16.mxu0 0
  %2644 = vmatpush1.bf16.msra.mxu0 0
  %2645 = vmatprep.subr.bf16.mxu0 0
  %2646 = vmatpush1.bf16.msra.mxu0 0
  %2647 = vmatprep.subr.bf16.mxu0 0
  %2648 = vmatpush1.bf16.msra.mxu0 0
  %2649 = vmatprep.subr.bf16.mxu0 0
  %2650 = vmatpush1.bf16.msra.mxu0 0
  %2651 = vmatprep.subr.bf16.mxu0 0
  %2652 = vmatpush1.bf16.msra.mxu0 0
  %2653 = vmatprep.subr.bf16.mxu0 0
  %2654 = vmatpush1.bf16.msra.mxu0 0
  %2655 = vmatprep.subr.bf16.mxu0 0
  %2656 = vmatpush1.bf16.msra.mxu0 0
  %2657 = vmatprep.subr.bf16.mxu0 0
  %2658 = vmatpush1.bf16.msra.mxu0 0
  %2659 = vmatprep.mubr.bf16.mxu0 0
  %2660 = vmatmul.mubr.bf16.gmra.mrb[0].mxu0 %v1075
  %v2661 = vpop.f32.mrb[0].mxu0
  %v2662 = vadd.f32 0.0, %v2661
  %v2663 = vpop.f32.mrb[0].mxu0
  %v2664 = vpop.f32.mrb[0].mxu0
  %v2665 = vadd.f32 0.0, %v2664
  %v2666 = vpop.f32.mrb[0].mxu0
  %2667 = vmatprep.mubr.bf16.mxu0 0
  %2668 = vmatmul.mubr.bf16.gmra.mrb[0].mxu0 %v1078
  %v2669 = vpop.f32.mrb[0].mxu0
  %v2670 = vadd.f32 0.0, %v2669
  %v2671 = vpop.f32.mrb[0].mxu0
  %v2672 = vpop.f32.mrb[0].mxu0
  %v2673 = vadd.f32 0.0, %v2672
  %v2674 = vpop.f32.mrb[0].mxu0
  %2675 = vmatprep.mubr.bf16.mxu0 0
  %2676 = vmatmul.mubr.bf16.gmra.mrb[0].mxu0 %v1081
  %v2677 = vpop.f32.mrb[0].mxu0
  %v2678 = vadd.f32 0.0, %v2677
  %v2679 = vpop.f32.mrb[0].mxu0
  %v2680 = vpop.f32.mrb[0].mxu0
  %v2681 = vadd.f32 0.0, %v2680
  %v2682 = vpop.f32.mrb[0].mxu0
  %2683 = vmatprep.mubr.bf16.mxu0 0
  %2684 = vmatmul.mubr.bf16.gmra.mrb[0].mxu0 %v1084
  %v2685 = vpop.f32.mrb[0].mxu0
  %v2686 = vadd.f32 0.0, %v2685
  %v2687 = vpop.f32.mrb[0].mxu0
  %v2688 = vpop.f32.mrb[0].mxu0
  %v2689 = vadd.f32 0.0, %v2688
  %v2690 = vpop.f32.mrb[0].mxu0
  %2691 = vmatprep.mubr.bf16.mxu0 0
  %2692 = vmatmul.mubr.bf16.gmra.mrb[0].mxu0 %v1087
  %v2693 = vpop.f32.mrb[0].mxu0
  %v2694 = vadd.f32 0.0, %v2693
  %v2695 = vpop.f32.mrb[0].mxu0
  %v2696 = vpop.f32.mrb[0].mxu0
  %v2697 = vadd.f32 0.0, %v2696
  %v2698 = vpop.f32.mrb[0].mxu0
  %2699 = vmatprep.mubr.bf16.mxu0 0
  %2700 = vmatmul.mubr.bf16.gmra.mrb[0].mxu0 %v1090
  %v2701 = vpop.f32.mrb[0].mxu0
  %v2702 = vadd.f32 0.0, %v2701
  %v2703 = vpop.f32.mrb[0].mxu0
  %v2704 = vpop.f32.mrb[0].mxu0
  %v2705 = vadd.f32 0.0, %v2704
  %v2706 = vpop.f32.mrb[0].mxu0
  %2707 = vmatprep.mubr.bf16.mxu0 0
  %2708 = vmatmul.mubr.bf16.gmra.mrb[0].mxu0 %v1093
  %v2709 = vpop.f32.mrb[0].mxu0
  %v2710 = vadd.f32 0.0, %v2709
  %v2711 = vpop.f32.mrb[0].mxu0
  %v2712 = vpop.f32.mrb[0].mxu0
  %v2713 = vadd.f32 0.0, %v2712
  %v2714 = vpop.f32.mrb[0].mxu0
  %2715 = vmatprep.mubr.bf16.mxu0 0
  %2716 = vmatmul.mubr.bf16.gmra.mrb[0].mxu0 %v1096
  %v2717 = vpop.f32.mrb[0].mxu0
  %v2718 = vadd.f32 0.0, %v2717
  %v2719 = vpop.f32.mrb[0].mxu0
  %v2720 = vpop.f32.mrb[0].mxu0
  %v2721 = vadd.f32 0.0, %v2720
  %v2722 = vpop.f32.mrb[0].mxu0
  %2723 = vmatprep.mubr.bf16.mxu0 0
  %2724 = vmatmul.mubr.bf16.gmra.mrb[0].mxu0 %v1099
  %v2725 = vpop.f32.mrb[0].mxu0
  %v2726 = vadd.f32 0.0, %v2725
  %v2727 = vpop.f32.mrb[0].mxu0
  %v2728 = vpop.f32.mrb[0].mxu0
  %v2729 = vadd.f32 0.0, %v2728
  %v2730 = vpop.f32.mrb[0].mxu0
  %2731 = vmatprep.mubr.bf16.mxu0 0
  %2732 = vmatmul.mubr.bf16.gmra.mrb[0].mxu0 %v1102
  %v2733 = vpop.f32.mrb[0].mxu0
  %v2734 = vadd.f32 0.0, %v2733
  %v2735 = vpop.f32.mrb[0].mxu0
  %v2736 = vpop.f32.mrb[0].mxu0
  %v2737 = vadd.f32 0.0, %v2736
  %v2738 = vpop.f32.mrb[0].mxu0
  %2739 = vmatprep.mubr.bf16.mxu0 0
  %2740 = vmatmul.mubr.bf16.gmra.mrb[0].mxu0 %v1105
  %v2741 = vpop.f32.mrb[0].mxu0
  %v2742 = vadd.f32 0.0, %v2741
  %v2743 = vpop.f32.mrb[0].mxu0
  %v2744 = vpop.f32.mrb[0].mxu0
  %v2745 = vadd.f32 0.0, %v2744
  %v2746 = vpop.f32.mrb[0].mxu0
  %2747 = vmatprep.mubr.bf16.mxu0 0
  %2748 = vmatmul.mubr.bf16.gmra.mrb[0].mxu0 %v1108
  %v2749 = vpop.f32.mrb[0].mxu0
  %v2750 = vadd.f32 0.0, %v2749
  %v2751 = vpop.f32.mrb[0].mxu0
  %v2752 = vpop.f32.mrb[0].mxu0
  %v2753 = vadd.f32 0.0, %v2752
  %v2754 = vpop.f32.mrb[0].mxu0
  %2755 = vmatprep.mubr.bf16.mxu0 0
  %2756 = vmatmul.mubr.bf16.gmra.mrb[0].mxu0 %v1111
  %v2757 = vpop.f32.mrb[0].mxu0
  %v2758 = vadd.f32 0.0, %v2757
  %v2759 = vpop.f32.mrb[0].mxu0
  %v2760 = vpop.f32.mrb[0].mxu0
  %v2761 = vadd.f32 0.0, %v2760
  %v2762 = vpop.f32.mrb[0].mxu0
  %2763 = vmatprep.mubr.bf16.mxu0 0
  %2764 = vmatmul.mubr.bf16.gmra.mrb[0].mxu0 %v1114
  %v2765 = vpop.f32.mrb[0].mxu0
  %v2766 = vadd.f32 0.0, %v2765
  %v2767 = vpop.f32.mrb[0].mxu0
  %v2768 = vpop.f32.mrb[0].mxu0
  %v2769 = vadd.f32 0.0, %v2768
  %v2770 = vpop.f32.mrb[0].mxu0
  %2771 = vmatprep.mubr.bf16.mxu0 0
  %2772 = vmatmul.mubr.bf16.gmra.mrb[0].mxu0 %v1117
  %v2773 = vpop.f32.mrb[0].mxu0
  %v2774 = vadd.f32 0.0, %v2773
  %v2775 = vpop.f32.mrb[0].mxu0
  %v2776 = vpop.f32.mrb[0].mxu0
  %v2777 = vadd.f32 0.0, %v2776
  %v2778 = vpop.f32.mrb[0].mxu0
  %2779 = vmatprep.mubr.bf16.mxu0 0
  %2780 = vmatmul.mubr.bf16.gmra.mrb[0].mxu0 %v1120
  %v2781 = vpop.f32.mrb[0].mxu0
  %v2782 = vadd.f32 0.0, %v2781
  %v2783 = vpop.f32.mrb[0].mxu0
  %v2784 = vpop.f32.mrb[0].mxu0
  %v2785 = vadd.f32 0.0, %v2784
  %v2786 = vpop.f32.mrb[0].mxu0
  %2787 = vmatprep.mubr.bf16.mxu0 0
  %2788 = vmatmul.mubr.bf16.gmra.mrb[0].mxu0 %v1123
  %v2789 = vpop.f32.mrb[0].mxu0
  %v2790 = vadd.f32 0.0, %v2789
  %v2791 = vpop.f32.mrb[0].mxu0
  %v2792 = vpop.f32.mrb[0].mxu0
  %v2793 = vadd.f32 0.0, %v2792
  %v2794 = vpop.f32.mrb[0].mxu0
  %2795 = vmatprep.mubr.bf16.mxu0 0
  %2796 = vmatmul.mubr.bf16.gmra.mrb[0].mxu0 %v1126
  %v2797 = vpop.f32.mrb[0].mxu0
  %v2798 = vadd.f32 0.0, %v2797
  %v2799 = vpop.f32.mrb[0].mxu0
  %v2800 = vpop.f32.mrb[0].mxu0
  %v2801 = vadd.f32 0.0, %v2800
  %v2802 = vpop.f32.mrb[0].mxu0
  %2803 = vmatprep.mubr.bf16.mxu0 0
  %2804 = vmatmul.mubr.bf16.gmra.mrb[0].mxu0 %v1129
  %v2805 = vpop.f32.mrb[0].mxu0
  %v2806 = vadd.f32 0.0, %v2805
  %v2807 = vpop.f32.mrb[0].mxu0
  %v2808 = vpop.f32.mrb[0].mxu0
  %v2809 = vadd.f32 0.0, %v2808
  %v2810 = vpop.f32.mrb[0].mxu0
  %2811 = vmatprep.mubr.bf16.mxu0 0
  %2812 = vmatmul.mubr.bf16.gmra.mrb[0].mxu0 %v1132
  %v2813 = vpop.f32.mrb[0].mxu0
  %v2814 = vadd.f32 0.0, %v2813
  %v2815 = vpop.f32.mrb[0].mxu0
  %v2816 = vpop.f32.mrb[0].mxu0
  %v2817 = vadd.f32 0.0, %v2816
  %v2818 = vpop.f32.mrb[0].mxu0
  %2819 = vmatprep.mubr.bf16.mxu0 0
  %2820 = vmatmul.mubr.bf16.gmra.mrb[0].mxu0 %v1135
  %v2821 = vpop.f32.mrb[0].mxu0
  %v2822 = vadd.f32 0.0, %v2821
  %v2823 = vpop.f32.mrb[0].mxu0
  %v2824 = vpop.f32.mrb[0].mxu0
  %v2825 = vadd.f32 0.0, %v2824
  %v2826 = vpop.f32.mrb[0].mxu0
  %2827 = vmatprep.mubr.bf16.mxu0 0
  %2828 = vmatmul.mubr.bf16.gmra.mrb[0].mxu0 %v1138
  %v2829 = vpop.f32.mrb[0].mxu0
  %v2830 = vadd.f32 0.0, %v2829
  %v2831 = vpop.f32.mrb[0].mxu0
  %v2832 = vpop.f32.mrb[0].mxu0
  %v2833 = vadd.f32 0.0, %v2832
  %v2834 = vpop.f32.mrb[0].mxu0
  %2835 = vmatprep.mubr.bf16.mxu0 0
  %2836 = vmatmul.mubr.bf16.gmra.mrb[0].mxu0 %v1141
  %v2837 = vpop.f32.mrb[0].mxu0
  %v2838 = vadd.f32 0.0, %v2837
  %v2839 = vpop.f32.mrb[0].mxu0
  %v2840 = vpop.f32.mrb[0].mxu0
  %v2841 = vadd.f32 0.0, %v2840
  %v2842 = vpop.f32.mrb[0].mxu0
  %2843 = vmatprep.mubr.bf16.mxu0 0
  %2844 = vmatmul.mubr.bf16.gmra.mrb[0].mxu0 %v1144
  %v2845 = vpop.f32.mrb[0].mxu0
  %v2846 = vadd.f32 0.0, %v2845
  %v2847 = vpop.f32.mrb[0].mxu0
  %v2848 = vpop.f32.mrb[0].mxu0
  %v2849 = vadd.f32 0.0, %v2848
  %v2850 = vpop.f32.mrb[0].mxu0
  %2851 = vmatprep.mubr.bf16.mxu0 0
  %2852 = vmatmul.mubr.bf16.gmra.mrb[0].mxu0 %v1147
  %v2853 = vpop.f32.mrb[0].mxu0
  %v2854 = vadd.f32 0.0, %v2853
  %v2855 = vpop.f32.mrb[0].mxu0
  %v2856 = vpop.f32.mrb[0].mxu0
  %v2857 = vadd.f32 0.0, %v2856
  %v2858 = vpop.f32.mrb[0].mxu0
  %2859 = vmatprep.mubr.bf16.mxu0 0
  %2860 = vmatmul.mubr.bf16.gmra.mrb[0].mxu0 %v1150
  %v2861 = vpop.f32.mrb[0].mxu0
  %v2862 = vadd.f32 0.0, %v2861
  %v2863 = vpop.f32.mrb[0].mxu0
  %v2864 = vpop.f32.mrb[0].mxu0
  %v2865 = vadd.f32 0.0, %v2864
  %v2866 = vpop.f32.mrb[0].mxu0
  %2867 = vmatprep.mubr.bf16.mxu0 0
  %2868 = vmatmul.mubr.bf16.gmra.mrb[0].mxu0 %v1153
  %v2869 = vpop.f32.mrb[0].mxu0
  %v2870 = vadd.f32 0.0, %v2869
  %v2871 = vpop.f32.mrb[0].mxu0
  %v2872 = vpop.f32.mrb[0].mxu0
  %v2873 = vadd.f32 0.0, %v2872
  %v2874 = vpop.f32.mrb[0].mxu0
  %2875 = vmatprep.mubr.bf16.mxu0 0
  %2876 = vmatmul.mubr.bf16.gmra.mrb[0].mxu0 %v1156
  %v2877 = vpop.f32.mrb[0].mxu0
  %v2878 = vadd.f32 0.0, %v2877
  %v2879 = vpop.f32.mrb[0].mxu0
  %v2880 = vpop.f32.mrb[0].mxu0
  %v2881 = vadd.f32 0.0, %v2880
  %v2882 = vpop.f32.mrb[0].mxu0
  %2883 = vmatprep.mubr.bf16.mxu0 0
  %2884 = vmatmul.mubr.bf16.gmra.mrb[0].mxu0 %v1159
  %v2885 = vpop.f32.mrb[0].mxu0
  %v2886 = vadd.f32 0.0, %v2885
  %v2887 = vpop.f32.mrb[0].mxu0
  %v2888 = vpop.f32.mrb[0].mxu0
  %v2889 = vadd.f32 0.0, %v2888
  %v2890 = vpop.f32.mrb[0].mxu0
  %2891 = vmatprep.mubr.bf16.mxu0 0
  %2892 = vmatmul.mubr.bf16.gmra.mrb[0].mxu0 %v1162
  %v2893 = vpop.f32.mrb[0].mxu0
  %v2894 = vadd.f32 0.0, %v2893
  %v2895 = vpop.f32.mrb[0].mxu0
  %v2896 = vpop.f32.mrb[0].mxu0
  %v2897 = vadd.f32 0.0, %v2896
  %v2898 = vpop.f32.mrb[0].mxu0
  %2899 = vmatprep.mubr.bf16.mxu0 0
  %2900 = vmatmul.mubr.bf16.gmra.mrb[0].mxu0 %v1165
  %v2901 = vpop.f32.mrb[0].mxu0
  %v2902 = vadd.f32 0.0, %v2901
  %v2903 = vpop.f32.mrb[0].mxu0
  %v2904 = vpop.f32.mrb[0].mxu0
  %v2905 = vadd.f32 0.0, %v2904
  %v2906 = vpop.f32.mrb[0].mxu0
  %2907 = vmatprep.mubr.bf16.mxu0 0
  %2908 = vmatmul.mubr.bf16.gmra.mrb[0].mxu0 %v1168
  %v2909 = vpop.f32.mrb[0].mxu0
  %v2910 = vadd.f32 0.0, %v2909
  %v2911 = vpop.f32.mrb[0].mxu0
  %v2912 = vpop.f32.mrb[0].mxu0
  %v2913 = vadd.f32 0.0, %v2912
  %v2914 = vpop.f32.mrb[0].mxu0
  %2915 = vdwg.mxu0
  %v2924 = vunpack.c.l.b16 %v2587
  %v2925 = vunpack.c.l.b16 %v2588
  %v2926 = vunpack.c.l.b16 %v2589
  %v2927 = vunpack.c.l.b16 %v2590
  %v2928 = vunpack.c.l.b16 %v2591
  %v2929 = vunpack.c.l.b16 %v2592
  %v2930 = vunpack.c.l.b16 %v2593
  %v2931 = vunpack.c.l.b16 %v2594
  %v2932 = vpack.c.b16 %v2925, %v2924
  %v2933 = vpack.c.b16 %v2927, %v2926
  %v2934 = vpack.c.b16 %v2929, %v2928
  %v2935 = vpack.c.b16 %v2931, %v2930
  %2940 = vmatprep.subr.bf16.mxu0 0
  %2941 = vmatpush1.bf16.msra.mxu0 %v2932
  %2942 = vmatprep.subr.bf16.mxu0 0
  %2943 = vmatpush1.bf16.msra.mxu0 %v2933
  %2944 = vmatprep.subr.bf16.mxu0 0
  %2945 = vmatpush1.bf16.msra.mxu0 %v2934
  %2946 = vmatprep.subr.bf16.mxu0 0
  %2947 = vmatpush1.bf16.msra.mxu0 %v2935
  %2948 = vmatprep.subr.bf16.mxu0 0
  %2949 = vmatpush1.bf16.msra.mxu0 0
  %2950 = vmatprep.subr.bf16.mxu0 0
  %2951 = vmatpush1.bf16.msra.mxu0 0
  %2952 = vmatprep.subr.bf16.mxu0 0
  %2953 = vmatpush1.bf16.msra.mxu0 0
  %2954 = vmatprep.subr.bf16.mxu0 0
  %2955 = vmatpush1.bf16.msra.mxu0 0
  %2956 = vmatprep.subr.bf16.mxu0 0
  %2957 = vmatpush1.bf16.msra.mxu0 0
  %2958 = vmatprep.subr.bf16.mxu0 0
  %2959 = vmatpush1.bf16.msra.mxu0 0
  %2960 = vmatprep.subr.bf16.mxu0 0
  %2961 = vmatpush1.bf16.msra.mxu0 0
  %2962 = vmatprep.subr.bf16.mxu0 0
  %2963 = vmatpush1.bf16.msra.mxu0 0
  %2964 = vmatprep.subr.bf16.mxu0 0
  %2965 = vmatpush1.bf16.msra.mxu0 0
  %2966 = vmatprep.subr.bf16.mxu0 0
  %2967 = vmatpush1.bf16.msra.mxu0 0
  %2968 = vmatprep.subr.bf16.mxu0 0
  %2969 = vmatpush1.bf16.msra.mxu0 0
  %2970 = vmatprep.subr.bf16.mxu0 0
  %2971 = vmatpush1.bf16.msra.mxu0 0
  %2972 = vmatprep.mubr.bf16.mxu0 0
  %2973 = vmatmul.mubr.bf16.gmra.mrb[0].mxu0 %v498
  %v2974 = vpop.f32.mrb[0].mxu0
  %v2975 = vadd.f32 %v2662, %v2974
  %v2976 = vpop.f32.mrb[0].mxu0
  %v2977 = vpop.f32.mrb[0].mxu0
  %v2978 = vadd.f32 %v2665, %v2977
  %v2979 = vpop.f32.mrb[0].mxu0
  %2980 = vmatprep.mubr.bf16.mxu0 0
  %2981 = vmatmul.mubr.bf16.gmra.mrb[0].mxu0 %v501
  %v2982 = vpop.f32.mrb[0].mxu0
  %v2983 = vadd.f32 %v2670, %v2982
  %v2984 = vpop.f32.mrb[0].mxu0
  %v2985 = vpop.f32.mrb[0].mxu0
  %v2986 = vadd.f32 %v2673, %v2985
  %v2987 = vpop.f32.mrb[0].mxu0
  %2988 = vmatprep.mubr.bf16.mxu0 0
  %2989 = vmatmul.mubr.bf16.gmra.mrb[0].mxu0 %v504
  %v2990 = vpop.f32.mrb[0].mxu0
  %v2991 = vadd.f32 %v2678, %v2990
  %v2992 = vpop.f32.mrb[0].mxu0
  %v2993 = vpop.f32.mrb[0].mxu0
  %v2994 = vadd.f32 %v2681, %v2993
  %v2995 = vpop.f32.mrb[0].mxu0
  %2996 = vmatprep.mubr.bf16.mxu0 0
  %2997 = vmatmul.mubr.bf16.gmra.mrb[0].mxu0 %v507
  %v2998 = vpop.f32.mrb[0].mxu0
  %v2999 = vadd.f32 %v2686, %v2998
  %v3000 = vpop.f32.mrb[0].mxu0
  %v3001 = vpop.f32.mrb[0].mxu0
  %v3002 = vadd.f32 %v2689, %v3001
  %v3003 = vpop.f32.mrb[0].mxu0
  %3004 = vmatprep.mubr.bf16.mxu0 0
  %3005 = vmatmul.mubr.bf16.gmra.mrb[0].mxu0 %v510
  %v3006 = vpop.f32.mrb[0].mxu0
  %v3007 = vadd.f32 %v2694, %v3006
  %v3008 = vpop.f32.mrb[0].mxu0
  %v3009 = vpop.f32.mrb[0].mxu0
  %v3010 = vadd.f32 %v2697, %v3009
  %v3011 = vpop.f32.mrb[0].mxu0
  %3012 = vmatprep.mubr.bf16.mxu0 0
  %3013 = vmatmul.mubr.bf16.gmra.mrb[0].mxu0 %v513
  %v3014 = vpop.f32.mrb[0].mxu0
  %v3015 = vadd.f32 %v2702, %v3014
  %v3016 = vpop.f32.mrb[0].mxu0
  %v3017 = vpop.f32.mrb[0].mxu0
  %v3018 = vadd.f32 %v2705, %v3017
  %v3019 = vpop.f32.mrb[0].mxu0
  %3020 = vmatprep.mubr.bf16.mxu0 0
  %3021 = vmatmul.mubr.bf16.gmra.mrb[0].mxu0 %v516
  %v3022 = vpop.f32.mrb[0].mxu0
  %v3023 = vadd.f32 %v2710, %v3022
  %v3024 = vpop.f32.mrb[0].mxu0
  %v3025 = vpop.f32.mrb[0].mxu0
  %v3026 = vadd.f32 %v2713, %v3025
  %v3027 = vpop.f32.mrb[0].mxu0
  %3028 = vmatprep.mubr.bf16.mxu0 0
  %3029 = vmatmul.mubr.bf16.gmra.mrb[0].mxu0 %v519
  %v3030 = vpop.f32.mrb[0].mxu0
  %v3031 = vadd.f32 %v2718, %v3030
  %v3032 = vpop.f32.mrb[0].mxu0
  %v3033 = vpop.f32.mrb[0].mxu0
  %v3034 = vadd.f32 %v2721, %v3033
  %v3035 = vpop.f32.mrb[0].mxu0
  %3036 = vmatprep.mubr.bf16.mxu0 0
  %3037 = vmatmul.mubr.bf16.gmra.mrb[0].mxu0 %v522
  %v3038 = vpop.f32.mrb[0].mxu0
  %v3039 = vadd.f32 %v2726, %v3038
  %v3040 = vpop.f32.mrb[0].mxu0
  %v3041 = vpop.f32.mrb[0].mxu0
  %v3042 = vadd.f32 %v2729, %v3041
  %v3043 = vpop.f32.mrb[0].mxu0
  %3044 = vmatprep.mubr.bf16.mxu0 0
  %3045 = vmatmul.mubr.bf16.gmra.mrb[0].mxu0 %v525
  %v3046 = vpop.f32.mrb[0].mxu0
  %v3047 = vadd.f32 %v2734, %v3046
  %v3048 = vpop.f32.mrb[0].mxu0
  %v3049 = vpop.f32.mrb[0].mxu0
  %v3050 = vadd.f32 %v2737, %v3049
  %v3051 = vpop.f32.mrb[0].mxu0
  %3052 = vmatprep.mubr.bf16.mxu0 0
  %3053 = vmatmul.mubr.bf16.gmra.mrb[0].mxu0 %v528
  %v3054 = vpop.f32.mrb[0].mxu0
  %v3055 = vadd.f32 %v2742, %v3054
  %v3056 = vpop.f32.mrb[0].mxu0
  %v3057 = vpop.f32.mrb[0].mxu0
  %v3058 = vadd.f32 %v2745, %v3057
  %v3059 = vpop.f32.mrb[0].mxu0
  %3060 = vmatprep.mubr.bf16.mxu0 0
  %3061 = vmatmul.mubr.bf16.gmra.mrb[0].mxu0 %v531
  %v3062 = vpop.f32.mrb[0].mxu0
  %v3063 = vadd.f32 %v2750, %v3062
  %v3064 = vpop.f32.mrb[0].mxu0
  %v3065 = vpop.f32.mrb[0].mxu0
  %v3066 = vadd.f32 %v2753, %v3065
  %v3067 = vpop.f32.mrb[0].mxu0
  %3068 = vmatprep.mubr.bf16.mxu0 0
  %3069 = vmatmul.mubr.bf16.gmra.mrb[0].mxu0 %v534
  %v3070 = vpop.f32.mrb[0].mxu0
  %v3071 = vadd.f32 %v2758, %v3070
  %v3072 = vpop.f32.mrb[0].mxu0
  %v3073 = vpop.f32.mrb[0].mxu0
  %v3074 = vadd.f32 %v2761, %v3073
  %v3075 = vpop.f32.mrb[0].mxu0
  %3076 = vmatprep.mubr.bf16.mxu0 0
  %3077 = vmatmul.mubr.bf16.gmra.mrb[0].mxu0 %v537
  %v3078 = vpop.f32.mrb[0].mxu0
  %v3079 = vadd.f32 %v2766, %v3078
  %v3080 = vpop.f32.mrb[0].mxu0
  %v3081 = vpop.f32.mrb[0].mxu0
  %v3082 = vadd.f32 %v2769, %v3081
  %v3083 = vpop.f32.mrb[0].mxu0
  %3084 = vmatprep.mubr.bf16.mxu0 0
  %3085 = vmatmul.mubr.bf16.gmra.mrb[0].mxu0 %v540
  %v3086 = vpop.f32.mrb[0].mxu0
  %v3087 = vadd.f32 %v2774, %v3086
  %v3088 = vpop.f32.mrb[0].mxu0
  %v3089 = vpop.f32.mrb[0].mxu0
  %v3090 = vadd.f32 %v2777, %v3089
  %v3091 = vpop.f32.mrb[0].mxu0
  %3092 = vmatprep.mubr.bf16.mxu0 0
  %3093 = vmatmul.mubr.bf16.gmra.mrb[0].mxu0 %v543
  %v3094 = vpop.f32.mrb[0].mxu0
  %v3095 = vadd.f32 %v2782, %v3094
  %v3096 = vpop.f32.mrb[0].mxu0
  %v3097 = vpop.f32.mrb[0].mxu0
  %v3098 = vadd.f32 %v2785, %v3097
  %v3099 = vpop.f32.mrb[0].mxu0
  %3100 = vmatprep.mubr.bf16.mxu0 0
  %3101 = vmatmul.mubr.bf16.gmra.mrb[0].mxu0 %v546
  %v3102 = vpop.f32.mrb[0].mxu0
  %v3103 = vadd.f32 %v2790, %v3102
  %v3104 = vpop.f32.mrb[0].mxu0
  %v3105 = vpop.f32.mrb[0].mxu0
  %v3106 = vadd.f32 %v2793, %v3105
  %v3107 = vpop.f32.mrb[0].mxu0
  %3108 = vmatprep.mubr.bf16.mxu0 0
  %3109 = vmatmul.mubr.bf16.gmra.mrb[0].mxu0 %v549
  %v3110 = vpop.f32.mrb[0].mxu0
  %v3111 = vadd.f32 %v2798, %v3110
  %v3112 = vpop.f32.mrb[0].mxu0
  %v3113 = vpop.f32.mrb[0].mxu0
  %v3114 = vadd.f32 %v2801, %v3113
  %v3115 = vpop.f32.mrb[0].mxu0
  %3116 = vmatprep.mubr.bf16.mxu0 0
  %3117 = vmatmul.mubr.bf16.gmra.mrb[0].mxu0 %v552
  %v3118 = vpop.f32.mrb[0].mxu0
  %v3119 = vadd.f32 %v2806, %v3118
  %v3120 = vpop.f32.mrb[0].mxu0
  %v3121 = vpop.f32.mrb[0].mxu0
  %v3122 = vadd.f32 %v2809, %v3121
  %v3123 = vpop.f32.mrb[0].mxu0
  %3124 = vmatprep.mubr.bf16.mxu0 0
  %3125 = vmatmul.mubr.bf16.gmra.mrb[0].mxu0 %v555
  %v3126 = vpop.f32.mrb[0].mxu0
  %v3127 = vadd.f32 %v2814, %v3126
  %v3128 = vpop.f32.mrb[0].mxu0
  %v3129 = vpop.f32.mrb[0].mxu0
  %v3130 = vadd.f32 %v2817, %v3129
  %v3131 = vpop.f32.mrb[0].mxu0
  %3132 = vmatprep.mubr.bf16.mxu0 0
  %3133 = vmatmul.mubr.bf16.gmra.mrb[0].mxu0 %v558
  %v3134 = vpop.f32.mrb[0].mxu0
  %v3135 = vadd.f32 %v2822, %v3134
  %v3136 = vpop.f32.mrb[0].mxu0
  %v3137 = vpop.f32.mrb[0].mxu0
  %v3138 = vadd.f32 %v2825, %v3137
  %v3139 = vpop.f32.mrb[0].mxu0
  %3140 = vmatprep.mubr.bf16.mxu0 0
  %3141 = vmatmul.mubr.bf16.gmra.mrb[0].mxu0 %v561
  %v3142 = vpop.f32.mrb[0].mxu0
  %v3143 = vadd.f32 %v2830, %v3142
  %v3144 = vpop.f32.mrb[0].mxu0
  %v3145 = vpop.f32.mrb[0].mxu0
  %v3146 = vadd.f32 %v2833, %v3145
  %v3147 = vpop.f32.mrb[0].mxu0
  %3148 = vmatprep.mubr.bf16.mxu0 0
  %3149 = vmatmul.mubr.bf16.gmra.mrb[0].mxu0 %v564
  %v3150 = vpop.f32.mrb[0].mxu0
  %v3151 = vadd.f32 %v2838, %v3150
  %v3152 = vpop.f32.mrb[0].mxu0
  %v3153 = vpop.f32.mrb[0].mxu0
  %v3154 = vadd.f32 %v2841, %v3153
  %v3155 = vpop.f32.mrb[0].mxu0
  %3156 = vmatprep.mubr.bf16.mxu0 0
  %3157 = vmatmul.mubr.bf16.gmra.mrb[0].mxu0 %v567
  %v3158 = vpop.f32.mrb[0].mxu0
  %v3159 = vadd.f32 %v2846, %v3158
  %v3160 = vpop.f32.mrb[0].mxu0
  %v3161 = vpop.f32.mrb[0].mxu0
  %v3162 = vadd.f32 %v2849, %v3161
  %v3163 = vpop.f32.mrb[0].mxu0
  %3164 = vmatprep.mubr.bf16.mxu0 0
  %3165 = vmatmul.mubr.bf16.gmra.mrb[0].mxu0 %v570
  %v3166 = vpop.f32.mrb[0].mxu0
  %v3167 = vadd.f32 %v2854, %v3166
  %v3168 = vpop.f32.mrb[0].mxu0
  %v3169 = vpop.f32.mrb[0].mxu0
  %v3170 = vadd.f32 %v2857, %v3169
  %v3171 = vpop.f32.mrb[0].mxu0
  %3172 = vmatprep.mubr.bf16.mxu0 0
  %3173 = vmatmul.mubr.bf16.gmra.mrb[0].mxu0 %v573
  %v3174 = vpop.f32.mrb[0].mxu0
  %v3175 = vadd.f32 %v2862, %v3174
  %v3176 = vpop.f32.mrb[0].mxu0
  %v3177 = vpop.f32.mrb[0].mxu0
  %v3178 = vadd.f32 %v2865, %v3177
  %v3179 = vpop.f32.mrb[0].mxu0
  %3180 = vmatprep.mubr.bf16.mxu0 0
  %3181 = vmatmul.mubr.bf16.gmra.mrb[0].mxu0 %v576
  %v3182 = vpop.f32.mrb[0].mxu0
  %v3183 = vadd.f32 %v2870, %v3182
  %v3184 = vpop.f32.mrb[0].mxu0
  %v3185 = vpop.f32.mrb[0].mxu0
  %v3186 = vadd.f32 %v2873, %v3185
  %v3187 = vpop.f32.mrb[0].mxu0
  %3188 = vmatprep.mubr.bf16.mxu0 0
  %3189 = vmatmul.mubr.bf16.gmra.mrb[0].mxu0 %v579
  %v3190 = vpop.f32.mrb[0].mxu0
  %v3191 = vadd.f32 %v2878, %v3190
  %v3192 = vpop.f32.mrb[0].mxu0
  %v3193 = vpop.f32.mrb[0].mxu0
  %v3194 = vadd.f32 %v2881, %v3193
  %v3195 = vpop.f32.mrb[0].mxu0
  %3196 = vmatprep.mubr.bf16.mxu0 0
  %3197 = vmatmul.mubr.bf16.gmra.mrb[0].mxu0 %v582
  %v3198 = vpop.f32.mrb[0].mxu0
  %v3199 = vadd.f32 %v2886, %v3198
  %v3200 = vpop.f32.mrb[0].mxu0
  %v3201 = vpop.f32.mrb[0].mxu0
  %v3202 = vadd.f32 %v2889, %v3201
  %v3203 = vpop.f32.mrb[0].mxu0
  %3204 = vmatprep.mubr.bf16.mxu0 0
  %3205 = vmatmul.mubr.bf16.gmra.mrb[0].mxu0 %v585
  %v3206 = vpop.f32.mrb[0].mxu0
  %v3207 = vadd.f32 %v2894, %v3206
  %v3208 = vpop.f32.mrb[0].mxu0
  %v3209 = vpop.f32.mrb[0].mxu0
  %v3210 = vadd.f32 %v2897, %v3209
  %v3211 = vpop.f32.mrb[0].mxu0
  %3212 = vmatprep.mubr.bf16.mxu0 0
  %3213 = vmatmul.mubr.bf16.gmra.mrb[0].mxu0 %v588
  %v3214 = vpop.f32.mrb[0].mxu0
  %v3215 = vadd.f32 %v2902, %v3214
  %v3216 = vpop.f32.mrb[0].mxu0
  %v3217 = vpop.f32.mrb[0].mxu0
  %v3218 = vadd.f32 %v2905, %v3217
  %v3219 = vpop.f32.mrb[0].mxu0
  %3220 = vmatprep.mubr.bf16.mxu0 0
  %3221 = vmatmul.mubr.bf16.gmra.mrb[0].mxu0 %v591
  %v3222 = vpop.f32.mrb[0].mxu0
  %v3223 = vadd.f32 %v2910, %v3222
  %v3224 = vpop.f32.mrb[0].mxu0
  %v3225 = vpop.f32.mrb[0].mxu0
  %v3226 = vadd.f32 %v2913, %v3225
  %v3227 = vpop.f32.mrb[0].mxu0
  %3228 = vdwg.mxu0
  %v3229 = vld [vmem:[%s6] sm:$0xf]
  %v3230 = vld [vmem:[%s6 + $0x4] sm:$0xf]
  %v3231 = vld [vmem:[%s6 + $0x8] sm:$0xf]
  %v3232 = vld [vmem:[%s6 + $0xc] sm:$0xf]
  %v3233 = vld [vmem:[%s6 + $0x10] sm:$0xf]
  %v3234 = vld [vmem:[%s6 + $0x14] sm:$0xf]
  %v3235 = vld [vmem:[%s6 + $0x18] sm:$0xf]
  %v3236 = vld [vmem:[%s6 + $0x1c] sm:$0xf]
  %v3245 = vunpack.c.l.b16 %v3229
  %v3246 = vunpack.c.l.b16 %v3230
  %v3247 = vunpack.c.l.b16 %v3231
  %v3248 = vunpack.c.l.b16 %v3232
  %v3249 = vunpack.c.l.b16 %v3233
  %v3250 = vunpack.c.l.b16 %v3234
  %v3251 = vunpack.c.l.b16 %v3235
  %v3252 = vunpack.c.l.b16 %v3236
  %v3253 = vpack.c.b16 %v3246, %v3245
  %v3254 = vpack.c.b16 %v3248, %v3247
  %v3255 = vpack.c.b16 %v3250, %v3249
  %v3256 = vpack.c.b16 %v3252, %v3251
  %3261 = vmatprep.subr.bf16.mxu0 0
  %3262 = vmatpush1.bf16.msra.mxu0 %v3253
  %3263 = vmatprep.subr.bf16.mxu0 0
  %3264 = vmatpush1.bf16.msra.mxu0 %v3254
  %3265 = vmatprep.subr.bf16.mxu0 0
  %3266 = vmatpush1.bf16.msra.mxu0 %v3255
  %3267 = vmatprep.subr.bf16.mxu0 0
  %3268 = vmatpush1.bf16.msra.mxu0 %v3256
  %3269 = vmatprep.subr.bf16.mxu0 0
  %3270 = vmatpush1.bf16.msra.mxu0 0
  %3271 = vmatprep.subr.bf16.mxu0 0
  %3272 = vmatpush1.bf16.msra.mxu0 0
  %3273 = vmatprep.subr.bf16.mxu0 0
  %3274 = vmatpush1.bf16.msra.mxu0 0
  %3275 = vmatprep.subr.bf16.mxu0 0
  %3276 = vmatpush1.bf16.msra.mxu0 0
  %3277 = vmatprep.subr.bf16.mxu0 0
  %3278 = vmatpush1.bf16.msra.mxu0 0
  %3279 = vmatprep.subr.bf16.mxu0 0
  %3280 = vmatpush1.bf16.msra.mxu0 0
  %3281 = vmatprep.subr.bf16.mxu0 0
  %3282 = vmatpush1.bf16.msra.mxu0 0
  %3283 = vmatprep.subr.bf16.mxu0 0
  %3284 = vmatpush1.bf16.msra.mxu0 0
  %3285 = vmatprep.subr.bf16.mxu0 0
  %3286 = vmatpush1.bf16.msra.mxu0 0
  %3287 = vmatprep.subr.bf16.mxu0 0
  %3288 = vmatpush1.bf16.msra.mxu0 0
  %3289 = vmatprep.subr.bf16.mxu0 0
  %3290 = vmatpush1.bf16.msra.mxu0 0
  %3291 = vmatprep.subr.bf16.mxu0 0
  %3292 = vmatpush1.bf16.msra.mxu0 0
  %3293 = vmatprep.mubr.bf16.mxu0 0
  %3294 = vmatmul.mubr.bf16.gmra.mrb[0].mxu0 %v1652
  %v3295 = vpop.f32.mrb[0].mxu0
  %v3296 = vadd.f32 0.0, %v3295
  %v3297 = vpop.f32.mrb[0].mxu0
  %v3298 = vpop.f32.mrb[0].mxu0
  %v3299 = vadd.f32 0.0, %v3298
  %v3300 = vpop.f32.mrb[0].mxu0
  %3301 = vmatprep.mubr.bf16.mxu0 0
  %3302 = vmatmul.mubr.bf16.gmra.mrb[0].mxu0 %v1655
  %v3303 = vpop.f32.mrb[0].mxu0
  %v3304 = vadd.f32 0.0, %v3303
  %v3305 = vpop.f32.mrb[0].mxu0
  %v3306 = vpop.f32.mrb[0].mxu0
  %v3307 = vadd.f32 0.0, %v3306
  %v3308 = vpop.f32.mrb[0].mxu0
  %3309 = vmatprep.mubr.bf16.mxu0 0
  %3310 = vmatmul.mubr.bf16.gmra.mrb[0].mxu0 %v1658
  %v3311 = vpop.f32.mrb[0].mxu0
  %v3312 = vadd.f32 0.0, %v3311
  %v3313 = vpop.f32.mrb[0].mxu0
  %v3314 = vpop.f32.mrb[0].mxu0
  %v3315 = vadd.f32 0.0, %v3314
  %v3316 = vpop.f32.mrb[0].mxu0
  %3317 = vmatprep.mubr.bf16.mxu0 0
  %3318 = vmatmul.mubr.bf16.gmra.mrb[0].mxu0 %v1661
  %v3319 = vpop.f32.mrb[0].mxu0
  %v3320 = vadd.f32 0.0, %v3319
  %v3321 = vpop.f32.mrb[0].mxu0
  %v3322 = vpop.f32.mrb[0].mxu0
  %v3323 = vadd.f32 0.0, %v3322
  %v3324 = vpop.f32.mrb[0].mxu0
  %3325 = vmatprep.mubr.bf16.mxu0 0
  %3326 = vmatmul.mubr.bf16.gmra.mrb[0].mxu0 %v1664
  %v3327 = vpop.f32.mrb[0].mxu0
  %v3328 = vadd.f32 0.0, %v3327
  %v3329 = vpop.f32.mrb[0].mxu0
  %v3330 = vpop.f32.mrb[0].mxu0
  %v3331 = vadd.f32 0.0, %v3330
  %v3332 = vpop.f32.mrb[0].mxu0
  %3333 = vmatprep.mubr.bf16.mxu0 0
  %3334 = vmatmul.mubr.bf16.gmra.mrb[0].mxu0 %v1667
  %v3335 = vpop.f32.mrb[0].mxu0
  %v3336 = vadd.f32 0.0, %v3335
  %v3337 = vpop.f32.mrb[0].mxu0
  %v3338 = vpop.f32.mrb[0].mxu0
  %v3339 = vadd.f32 0.0, %v3338
  %v3340 = vpop.f32.mrb[0].mxu0
  %3341 = vmatprep.mubr.bf16.mxu0 0
  %3342 = vmatmul.mubr.bf16.gmra.mrb[0].mxu0 %v1670
  %v3343 = vpop.f32.mrb[0].mxu0
  %v3344 = vadd.f32 0.0, %v3343
  %v3345 = vpop.f32.mrb[0].mxu0
  %v3346 = vpop.f32.mrb[0].mxu0
  %v3347 = vadd.f32 0.0, %v3346
  %v3348 = vpop.f32.mrb[0].mxu0
  %3349 = vmatprep.mubr.bf16.mxu0 0
  %3350 = vmatmul.mubr.bf16.gmra.mrb[0].mxu0 %v1673
  %v3351 = vpop.f32.mrb[0].mxu0
  %v3352 = vadd.f32 0.0, %v3351
  %v3353 = vpop.f32.mrb[0].mxu0
  %v3354 = vpop.f32.mrb[0].mxu0
  %v3355 = vadd.f32 0.0, %v3354
  %v3356 = vpop.f32.mrb[0].mxu0
  %3357 = vmatprep.mubr.bf16.mxu0 0
  %3358 = vmatmul.mubr.bf16.gmra.mrb[0].mxu0 %v1676
  %v3359 = vpop.f32.mrb[0].mxu0
  %v3360 = vadd.f32 0.0, %v3359
  %v3361 = vpop.f32.mrb[0].mxu0
  %v3362 = vpop.f32.mrb[0].mxu0
  %v3363 = vadd.f32 0.0, %v3362
  %v3364 = vpop.f32.mrb[0].mxu0
  %3365 = vmatprep.mubr.bf16.mxu0 0
  %3366 = vmatmul.mubr.bf16.gmra.mrb[0].mxu0 %v1679
  %v3367 = vpop.f32.mrb[0].mxu0
  %v3368 = vadd.f32 0.0, %v3367
  %v3369 = vpop.f32.mrb[0].mxu0
  %v3370 = vpop.f32.mrb[0].mxu0
  %v3371 = vadd.f32 0.0, %v3370
  %v3372 = vpop.f32.mrb[0].mxu0
  %3373 = vmatprep.mubr.bf16.mxu0 0
  %3374 = vmatmul.mubr.bf16.gmra.mrb[0].mxu0 %v1682
  %v3375 = vpop.f32.mrb[0].mxu0
  %v3376 = vadd.f32 0.0, %v3375
  %v3377 = vpop.f32.mrb[0].mxu0
  %v3378 = vpop.f32.mrb[0].mxu0
  %v3379 = vadd.f32 0.0, %v3378
  %v3380 = vpop.f32.mrb[0].mxu0
  %3381 = vmatprep.mubr.bf16.mxu0 0
  %3382 = vmatmul.mubr.bf16.gmra.mrb[0].mxu0 %v1685
  %v3383 = vpop.f32.mrb[0].mxu0
  %v3384 = vadd.f32 0.0, %v3383
  %v3385 = vpop.f32.mrb[0].mxu0
  %v3386 = vpop.f32.mrb[0].mxu0
  %v3387 = vadd.f32 0.0, %v3386
  %v3388 = vpop.f32.mrb[0].mxu0
  %3389 = vmatprep.mubr.bf16.mxu0 0
  %3390 = vmatmul.mubr.bf16.gmra.mrb[0].mxu0 %v1688
  %v3391 = vpop.f32.mrb[0].mxu0
  %v3392 = vadd.f32 0.0, %v3391
  %v3393 = vpop.f32.mrb[0].mxu0
  %v3394 = vpop.f32.mrb[0].mxu0
  %v3395 = vadd.f32 0.0, %v3394
  %v3396 = vpop.f32.mrb[0].mxu0
  %3397 = vmatprep.mubr.bf16.mxu0 0
  %3398 = vmatmul.mubr.bf16.gmra.mrb[0].mxu0 %v1691
  %v3399 = vpop.f32.mrb[0].mxu0
  %v3400 = vadd.f32 0.0, %v3399
  %v3401 = vpop.f32.mrb[0].mxu0
  %v3402 = vpop.f32.mrb[0].mxu0
  %v3403 = vadd.f32 0.0, %v3402
  %v3404 = vpop.f32.mrb[0].mxu0
  %3405 = vmatprep.mubr.bf16.mxu0 0
  %3406 = vmatmul.mubr.bf16.gmra.mrb[0].mxu0 %v1694
  %v3407 = vpop.f32.mrb[0].mxu0
  %v3408 = vadd.f32 0.0, %v3407
  %v3409 = vpop.f32.mrb[0].mxu0
  %v3410 = vpop.f32.mrb[0].mxu0
  %v3411 = vadd.f32 0.0, %v3410
  %v3412 = vpop.f32.mrb[0].mxu0
  %3413 = vmatprep.mubr.bf16.mxu0 0
  %3414 = vmatmul.mubr.bf16.gmra.mrb[0].mxu0 %v1697
  %v3415 = vpop.f32.mrb[0].mxu0
  %v3416 = vadd.f32 0.0, %v3415
  %v3417 = vpop.f32.mrb[0].mxu0
  %v3418 = vpop.f32.mrb[0].mxu0
  %v3419 = vadd.f32 0.0, %v3418
  %v3420 = vpop.f32.mrb[0].mxu0
  %3421 = vmatprep.mubr.bf16.mxu0 0
  %3422 = vmatmul.mubr.bf16.gmra.mrb[0].mxu0 %v1700
  %v3423 = vpop.f32.mrb[0].mxu0
  %v3424 = vadd.f32 0.0, %v3423
  %v3425 = vpop.f32.mrb[0].mxu0
  %v3426 = vpop.f32.mrb[0].mxu0
  %v3427 = vadd.f32 0.0, %v3426
  %v3428 = vpop.f32.mrb[0].mxu0
  %3429 = vmatprep.mubr.bf16.mxu0 0
  %3430 = vmatmul.mubr.bf16.gmra.mrb[0].mxu0 %v1703
  %v3431 = vpop.f32.mrb[0].mxu0
  %v3432 = vadd.f32 0.0, %v3431
  %v3433 = vpop.f32.mrb[0].mxu0
  %v3434 = vpop.f32.mrb[0].mxu0
  %v3435 = vadd.f32 0.0, %v3434
  %v3436 = vpop.f32.mrb[0].mxu0
  %3437 = vmatprep.mubr.bf16.mxu0 0
  %3438 = vmatmul.mubr.bf16.gmra.mrb[0].mxu0 %v1706
  %v3439 = vpop.f32.mrb[0].mxu0
  %v3440 = vadd.f32 0.0, %v3439
  %v3441 = vpop.f32.mrb[0].mxu0
  %v3442 = vpop.f32.mrb[0].mxu0
  %v3443 = vadd.f32 0.0, %v3442
  %v3444 = vpop.f32.mrb[0].mxu0
  %3445 = vmatprep.mubr.bf16.mxu0 0
  %3446 = vmatmul.mubr.bf16.gmra.mrb[0].mxu0 %v1709
  %v3447 = vpop.f32.mrb[0].mxu0
  %v3448 = vadd.f32 0.0, %v3447
  %v3449 = vpop.f32.mrb[0].mxu0
  %v3450 = vpop.f32.mrb[0].mxu0
  %v3451 = vadd.f32 0.0, %v3450
  %v3452 = vpop.f32.mrb[0].mxu0
  %3453 = vmatprep.mubr.bf16.mxu0 0
  %3454 = vmatmul.mubr.bf16.gmra.mrb[0].mxu0 %v1712
  %v3455 = vpop.f32.mrb[0].mxu0
  %v3456 = vadd.f32 0.0, %v3455
  %v3457 = vpop.f32.mrb[0].mxu0
  %v3458 = vpop.f32.mrb[0].mxu0
  %v3459 = vadd.f32 0.0, %v3458
  %v3460 = vpop.f32.mrb[0].mxu0
  %3461 = vmatprep.mubr.bf16.mxu0 0
  %3462 = vmatmul.mubr.bf16.gmra.mrb[0].mxu0 %v1715
  %v3463 = vpop.f32.mrb[0].mxu0
  %v3464 = vadd.f32 0.0, %v3463
  %v3465 = vpop.f32.mrb[0].mxu0
  %v3466 = vpop.f32.mrb[0].mxu0
  %v3467 = vadd.f32 0.0, %v3466
  %v3468 = vpop.f32.mrb[0].mxu0
  %3469 = vmatprep.mubr.bf16.mxu0 0
  %3470 = vmatmul.mubr.bf16.gmra.mrb[0].mxu0 %v1718
  %v3471 = vpop.f32.mrb[0].mxu0
  %v3472 = vadd.f32 0.0, %v3471
  %v3473 = vpop.f32.mrb[0].mxu0
  %v3474 = vpop.f32.mrb[0].mxu0
  %v3475 = vadd.f32 0.0, %v3474
  %v3476 = vpop.f32.mrb[0].mxu0
  %3477 = vmatprep.mubr.bf16.mxu0 0
  %3478 = vmatmul.mubr.bf16.gmra.mrb[0].mxu0 %v1721
  %v3479 = vpop.f32.mrb[0].mxu0
  %v3480 = vadd.f32 0.0, %v3479
  %v3481 = vpop.f32.mrb[0].mxu0
  %v3482 = vpop.f32.mrb[0].mxu0
  %v3483 = vadd.f32 0.0, %v3482
  %v3484 = vpop.f32.mrb[0].mxu0
  %3485 = vmatprep.mubr.bf16.mxu0 0
  %3486 = vmatmul.mubr.bf16.gmra.mrb[0].mxu0 %v1724
  %v3487 = vpop.f32.mrb[0].mxu0
  %v3488 = vadd.f32 0.0, %v3487
  %v3489 = vpop.f32.mrb[0].mxu0
  %v3490 = vpop.f32.mrb[0].mxu0
  %v3491 = vadd.f32 0.0, %v3490
  %v3492 = vpop.f32.mrb[0].mxu0
  %3493 = vmatprep.mubr.bf16.mxu0 0
  %3494 = vmatmul.mubr.bf16.gmra.mrb[0].mxu0 %v1727
  %v3495 = vpop.f32.mrb[0].mxu0
  %v3496 = vadd.f32 0.0, %v3495
  %v3497 = vpop.f32.mrb[0].mxu0
  %v3498 = vpop.f32.mrb[0].mxu0
  %v3499 = vadd.f32 0.0, %v3498
  %v3500 = vpop.f32.mrb[0].mxu0
  %3501 = vmatprep.mubr.bf16.mxu0 0
  %3502 = vmatmul.mubr.bf16.gmra.mrb[0].mxu0 %v1730
  %v3503 = vpop.f32.mrb[0].mxu0
  %v3504 = vadd.f32 0.0, %v3503
  %v3505 = vpop.f32.mrb[0].mxu0
  %v3506 = vpop.f32.mrb[0].mxu0
  %v3507 = vadd.f32 0.0, %v3506
  %v3508 = vpop.f32.mrb[0].mxu0
  %3509 = vmatprep.mubr.bf16.mxu0 0
  %3510 = vmatmul.mubr.bf16.gmra.mrb[0].mxu0 %v1733
  %v3511 = vpop.f32.mrb[0].mxu0
  %v3512 = vadd.f32 0.0, %v3511
  %v3513 = vpop.f32.mrb[0].mxu0
  %v3514 = vpop.f32.mrb[0].mxu0
  %v3515 = vadd.f32 0.0, %v3514
  %v3516 = vpop.f32.mrb[0].mxu0
  %3517 = vmatprep.mubr.bf16.mxu0 0
  %3518 = vmatmul.mubr.bf16.gmra.mrb[0].mxu0 %v1736
  %v3519 = vpop.f32.mrb[0].mxu0
  %v3520 = vadd.f32 0.0, %v3519
  %v3521 = vpop.f32.mrb[0].mxu0
  %v3522 = vpop.f32.mrb[0].mxu0
  %v3523 = vadd.f32 0.0, %v3522
  %v3524 = vpop.f32.mrb[0].mxu0
  %3525 = vmatprep.mubr.bf16.mxu0 0
  %3526 = vmatmul.mubr.bf16.gmra.mrb[0].mxu0 %v1739
  %v3527 = vpop.f32.mrb[0].mxu0
  %v3528 = vadd.f32 0.0, %v3527
  %v3529 = vpop.f32.mrb[0].mxu0
  %v3530 = vpop.f32.mrb[0].mxu0
  %v3531 = vadd.f32 0.0, %v3530
  %v3532 = vpop.f32.mrb[0].mxu0
  %3533 = vmatprep.mubr.bf16.mxu0 0
  %3534 = vmatmul.mubr.bf16.gmra.mrb[0].mxu0 %v1742
  %v3535 = vpop.f32.mrb[0].mxu0
  %v3536 = vadd.f32 0.0, %v3535
  %v3537 = vpop.f32.mrb[0].mxu0
  %v3538 = vpop.f32.mrb[0].mxu0
  %v3539 = vadd.f32 0.0, %v3538
  %v3540 = vpop.f32.mrb[0].mxu0
  %3541 = vmatprep.mubr.bf16.mxu0 0
  %3542 = vmatmul.mubr.bf16.gmra.mrb[0].mxu0 %v1745
  %v3543 = vpop.f32.mrb[0].mxu0
  %v3544 = vadd.f32 0.0, %v3543
  %v3545 = vpop.f32.mrb[0].mxu0
  %v3546 = vpop.f32.mrb[0].mxu0
  %v3547 = vadd.f32 0.0, %v3546
  %v3548 = vpop.f32.mrb[0].mxu0
  %3549 = vdwg.mxu0
  %v3550 = vadd.f32 %v2975, %v3296
  %v3551 = vadd.f32 %v2978, %v3299
  %v3552 = vadd.f32 %v2983, %v3304
  %v3553 = vadd.f32 %v2986, %v3307
  %v3554 = vadd.f32 %v2991, %v3312
  %v3555 = vadd.f32 %v2994, %v3315
  %v3556 = vadd.f32 %v2999, %v3320
  %v3557 = vadd.f32 %v3002, %v3323
  %v3558 = vadd.f32 %v3007, %v3328
  %v3559 = vadd.f32 %v3010, %v3331
  %v3560 = vadd.f32 %v3015, %v3336
  %v3561 = vadd.f32 %v3018, %v3339
  %v3562 = vadd.f32 %v3023, %v3344
  %v3563 = vadd.f32 %v3026, %v3347
  %v3564 = vadd.f32 %v3031, %v3352
  %v3565 = vadd.f32 %v3034, %v3355
  %v3566 = vadd.f32 %v3039, %v3360
  %v3567 = vadd.f32 %v3042, %v3363
  %v3568 = vadd.f32 %v3047, %v3368
  %v3569 = vadd.f32 %v3050, %v3371
  %v3570 = vadd.f32 %v3055, %v3376
  %v3571 = vadd.f32 %v3058, %v3379
  %v3572 = vadd.f32 %v3063, %v3384
  %v3573 = vadd.f32 %v3066, %v3387
  %v3574 = vadd.f32 %v3071, %v3392
  %v3575 = vadd.f32 %v3074, %v3395
  %v3576 = vadd.f32 %v3079, %v3400
  %v3577 = vadd.f32 %v3082, %v3403
  %v3578 = vadd.f32 %v3087, %v3408
  %v3579 = vadd.f32 %v3090, %v3411
  %v3580 = vadd.f32 %v3095, %v3416
  %v3581 = vadd.f32 %v3098, %v3419
  %v3582 = vadd.f32 %v3103, %v3424
  %v3583 = vadd.f32 %v3106, %v3427
  %v3584 = vadd.f32 %v3111, %v3432
  %v3585 = vadd.f32 %v3114, %v3435
  %v3586 = vadd.f32 %v3119, %v3440
  %v3587 = vadd.f32 %v3122, %v3443
  %v3588 = vadd.f32 %v3127, %v3448
  %v3589 = vadd.f32 %v3130, %v3451
  %v3590 = vadd.f32 %v3135, %v3456
  %v3591 = vadd.f32 %v3138, %v3459
  %v3592 = vadd.f32 %v3143, %v3464
  %v3593 = vadd.f32 %v3146, %v3467
  %v3594 = vadd.f32 %v3151, %v3472
  %v3595 = vadd.f32 %v3154, %v3475
  %v3596 = vadd.f32 %v3159, %v3480
  %v3597 = vadd.f32 %v3162, %v3483
  %v3598 = vadd.f32 %v3167, %v3488
  %v3599 = vadd.f32 %v3170, %v3491
  %v3600 = vadd.f32 %v3175, %v3496
  %v3601 = vadd.f32 %v3178, %v3499
  %v3602 = vadd.f32 %v3183, %v3504
  %v3603 = vadd.f32 %v3186, %v3507
  %v3604 = vadd.f32 %v3191, %v3512
  %v3605 = vadd.f32 %v3194, %v3515
  %v3606 = vadd.f32 %v3199, %v3520
  %v3607 = vadd.f32 %v3202, %v3523
  %v3608 = vadd.f32 %v3207, %v3528
  %v3609 = vadd.f32 %v3210, %v3531
  %v3610 = vadd.f32 %v3215, %v3536
  %v3611 = vadd.f32 %v3218, %v3539
  %v3612 = vadd.f32 %v3223, %v3544
  %v3613 = vadd.f32 %v3226, %v3547
  %v3614 = vld [vmem:[%s7] sm:$0x3]
  %v3616 = vsel %vm2294, %v3614, 0
  %3618 = vmatprep.subr.bf16.mxu0 0
  %3619 = vmatpush1.bf16.msra.mxu0 %v3616
  %3620 = vmatprep.subr.bf16.mxu0 0
  %3621 = vmatpush1.bf16.msra.mxu0 0
  %3622 = vmatprep.subr.bf16.mxu0 0
  %3623 = vmatpush1.bf16.msra.mxu0 0
  %3624 = vmatprep.subr.bf16.mxu0 0
  %3625 = vmatpush1.bf16.msra.mxu0 0
  %3626 = vmatprep.subr.bf16.mxu0 0
  %3627 = vmatpush1.bf16.msra.mxu0 0
  %3628 = vmatprep.subr.bf16.mxu0 0
  %3629 = vmatpush1.bf16.msra.mxu0 0
  %3630 = vmatprep.subr.bf16.mxu0 0
  %3631 = vmatpush1.bf16.msra.mxu0 0
  %3632 = vmatprep.subr.bf16.mxu0 0
  %3633 = vmatpush1.bf16.msra.mxu0 0
  %3634 = vmatprep.subr.bf16.mxu0 0
  %3635 = vmatpush1.bf16.msra.mxu0 0
  %3636 = vmatprep.subr.bf16.mxu0 0
  %3637 = vmatpush1.bf16.msra.mxu0 0
  %3638 = vmatprep.subr.bf16.mxu0 0
  %3639 = vmatpush1.bf16.msra.mxu0 0
  %3640 = vmatprep.subr.bf16.mxu0 0
  %3641 = vmatpush1.bf16.msra.mxu0 0
  %3642 = vmatprep.subr.bf16.mxu0 0
  %3643 = vmatpush1.bf16.msra.mxu0 0
  %3644 = vmatprep.subr.bf16.mxu0 0
  %3645 = vmatpush1.bf16.msra.mxu0 0
  %3646 = vmatprep.subr.bf16.mxu0 0
  %3647 = vmatpush1.bf16.msra.mxu0 0
  %3648 = vmatprep.subr.bf16.mxu0 0
  %3649 = vmatpush1.bf16.msra.mxu0 0
  %3650 = vmatprep.mubr.bf16.mxu0 0
  %3651 = vmatmul.mubr.bf16.gmra.mrb[0].mxu0 %v2199
  %v3652 = vpop.f32.mrb[0].mxu0
  %v3653 = vadd.f32 0.0, %v3652
  %v3654 = vpop.f32.mrb[0].mxu0
  %v3655 = vpop.f32.mrb[0].mxu0
  %v3656 = vadd.f32 0.0, %v3655
  %v3657 = vpop.f32.mrb[0].mxu0
  %3658 = vmatprep.mubr.bf16.mxu0 0
  %3659 = vmatmul.mubr.bf16.gmra.mrb[0].mxu0 %v2202
  %v3660 = vpop.f32.mrb[0].mxu0
  %v3661 = vadd.f32 0.0, %v3660
  %v3662 = vpop.f32.mrb[0].mxu0
  %v3663 = vpop.f32.mrb[0].mxu0
  %v3664 = vadd.f32 0.0, %v3663
  %v3665 = vpop.f32.mrb[0].mxu0
  %3666 = vmatprep.mubr.bf16.mxu0 0
  %3667 = vmatmul.mubr.bf16.gmra.mrb[0].mxu0 %v2205
  %v3668 = vpop.f32.mrb[0].mxu0
  %v3669 = vadd.f32 0.0, %v3668
  %v3670 = vpop.f32.mrb[0].mxu0
  %v3671 = vpop.f32.mrb[0].mxu0
  %v3672 = vadd.f32 0.0, %v3671
  %v3673 = vpop.f32.mrb[0].mxu0
  %3674 = vmatprep.mubr.bf16.mxu0 0
  %3675 = vmatmul.mubr.bf16.gmra.mrb[0].mxu0 %v2208
  %v3676 = vpop.f32.mrb[0].mxu0
  %v3677 = vadd.f32 0.0, %v3676
  %v3678 = vpop.f32.mrb[0].mxu0
  %v3679 = vpop.f32.mrb[0].mxu0
  %v3680 = vadd.f32 0.0, %v3679
  %v3681 = vpop.f32.mrb[0].mxu0
  %3682 = vmatprep.mubr.bf16.mxu0 0
  %3683 = vmatmul.mubr.bf16.gmra.mrb[0].mxu0 %v2211
  %v3684 = vpop.f32.mrb[0].mxu0
  %v3685 = vadd.f32 0.0, %v3684
  %v3686 = vpop.f32.mrb[0].mxu0
  %v3687 = vpop.f32.mrb[0].mxu0
  %v3688 = vadd.f32 0.0, %v3687
  %v3689 = vpop.f32.mrb[0].mxu0
  %3690 = vmatprep.mubr.bf16.mxu0 0
  %3691 = vmatmul.mubr.bf16.gmra.mrb[0].mxu0 %v2214
  %v3692 = vpop.f32.mrb[0].mxu0
  %v3693 = vadd.f32 0.0, %v3692
  %v3694 = vpop.f32.mrb[0].mxu0
  %v3695 = vpop.f32.mrb[0].mxu0
  %v3696 = vadd.f32 0.0, %v3695
  %v3697 = vpop.f32.mrb[0].mxu0
  %3698 = vmatprep.mubr.bf16.mxu0 0
  %3699 = vmatmul.mubr.bf16.gmra.mrb[0].mxu0 %v2217
  %v3700 = vpop.f32.mrb[0].mxu0
  %v3701 = vadd.f32 0.0, %v3700
  %v3702 = vpop.f32.mrb[0].mxu0
  %v3703 = vpop.f32.mrb[0].mxu0
  %v3704 = vadd.f32 0.0, %v3703
  %v3705 = vpop.f32.mrb[0].mxu0
  %3706 = vmatprep.mubr.bf16.mxu0 0
  %3707 = vmatmul.mubr.bf16.gmra.mrb[0].mxu0 %v2220
  %v3708 = vpop.f32.mrb[0].mxu0
  %v3709 = vadd.f32 0.0, %v3708
  %v3710 = vpop.f32.mrb[0].mxu0
  %v3711 = vpop.f32.mrb[0].mxu0
  %v3712 = vadd.f32 0.0, %v3711
  %v3713 = vpop.f32.mrb[0].mxu0
  %3714 = vmatprep.mubr.bf16.mxu0 0
  %3715 = vmatmul.mubr.bf16.gmra.mrb[0].mxu0 %v2223
  %v3716 = vpop.f32.mrb[0].mxu0
  %v3717 = vadd.f32 0.0, %v3716
  %v3718 = vpop.f32.mrb[0].mxu0
  %v3719 = vpop.f32.mrb[0].mxu0
  %v3720 = vadd.f32 0.0, %v3719
  %v3721 = vpop.f32.mrb[0].mxu0
  %3722 = vmatprep.mubr.bf16.mxu0 0
  %3723 = vmatmul.mubr.bf16.gmra.mrb[0].mxu0 %v2226
  %v3724 = vpop.f32.mrb[0].mxu0
  %v3725 = vadd.f32 0.0, %v3724
  %v3726 = vpop.f32.mrb[0].mxu0
  %v3727 = vpop.f32.mrb[0].mxu0
  %v3728 = vadd.f32 0.0, %v3727
  %v3729 = vpop.f32.mrb[0].mxu0
  %3730 = vmatprep.mubr.bf16.mxu0 0
  %3731 = vmatmul.mubr.bf16.gmra.mrb[0].mxu0 %v2229
  %v3732 = vpop.f32.mrb[0].mxu0
  %v3733 = vadd.f32 0.0, %v3732
  %v3734 = vpop.f32.mrb[0].mxu0
  %v3735 = vpop.f32.mrb[0].mxu0
  %v3736 = vadd.f32 0.0, %v3735
  %v3737 = vpop.f32.mrb[0].mxu0
  %3738 = vmatprep.mubr.bf16.mxu0 0
  %3739 = vmatmul.mubr.bf16.gmra.mrb[0].mxu0 %v2232
  %v3740 = vpop.f32.mrb[0].mxu0
  %v3741 = vadd.f32 0.0, %v3740
  %v3742 = vpop.f32.mrb[0].mxu0
  %v3743 = vpop.f32.mrb[0].mxu0
  %v3744 = vadd.f32 0.0, %v3743
  %v3745 = vpop.f32.mrb[0].mxu0
  %3746 = vmatprep.mubr.bf16.mxu0 0
  %3747 = vmatmul.mubr.bf16.gmra.mrb[0].mxu0 %v2235
  %v3748 = vpop.f32.mrb[0].mxu0
  %v3749 = vadd.f32 0.0, %v3748
  %v3750 = vpop.f32.mrb[0].mxu0
  %v3751 = vpop.f32.mrb[0].mxu0
  %v3752 = vadd.f32 0.0, %v3751
  %v3753 = vpop.f32.mrb[0].mxu0
  %3754 = vmatprep.mubr.bf16.mxu0 0
  %3755 = vmatmul.mubr.bf16.gmra.mrb[0].mxu0 %v2238
  %v3756 = vpop.f32.mrb[0].mxu0
  %v3757 = vadd.f32 0.0, %v3756
  %v3758 = vpop.f32.mrb[0].mxu0
  %v3759 = vpop.f32.mrb[0].mxu0
  %v3760 = vadd.f32 0.0, %v3759
  %v3761 = vpop.f32.mrb[0].mxu0
  %3762 = vmatprep.mubr.bf16.mxu0 0
  %3763 = vmatmul.mubr.bf16.gmra.mrb[0].mxu0 %v2241
  %v3764 = vpop.f32.mrb[0].mxu0
  %v3765 = vadd.f32 0.0, %v3764
  %v3766 = vpop.f32.mrb[0].mxu0
  %v3767 = vpop.f32.mrb[0].mxu0
  %v3768 = vadd.f32 0.0, %v3767
  %v3769 = vpop.f32.mrb[0].mxu0
  %3770 = vmatprep.mubr.bf16.mxu0 0
  %3771 = vmatmul.mubr.bf16.gmra.mrb[0].mxu0 %v2244
  %v3772 = vpop.f32.mrb[0].mxu0
  %v3773 = vadd.f32 0.0, %v3772
  %v3774 = vpop.f32.mrb[0].mxu0
  %v3775 = vpop.f32.mrb[0].mxu0
  %v3776 = vadd.f32 0.0, %v3775
  %v3777 = vpop.f32.mrb[0].mxu0
  %3778 = vmatprep.mubr.bf16.mxu0 0
  %3779 = vmatmul.mubr.bf16.gmra.mrb[0].mxu0 %v2247
  %v3780 = vpop.f32.mrb[0].mxu0
  %v3781 = vadd.f32 0.0, %v3780
  %v3782 = vpop.f32.mrb[0].mxu0
  %v3783 = vpop.f32.mrb[0].mxu0
  %v3784 = vadd.f32 0.0, %v3783
  %v3785 = vpop.f32.mrb[0].mxu0
  %3786 = vmatprep.mubr.bf16.mxu0 0
  %3787 = vmatmul.mubr.bf16.gmra.mrb[0].mxu0 %v2250
  %v3788 = vpop.f32.mrb[0].mxu0
  %v3789 = vadd.f32 0.0, %v3788
  %v3790 = vpop.f32.mrb[0].mxu0
  %v3791 = vpop.f32.mrb[0].mxu0
  %v3792 = vadd.f32 0.0, %v3791
  %v3793 = vpop.f32.mrb[0].mxu0
  %3794 = vmatprep.mubr.bf16.mxu0 0
  %3795 = vmatmul.mubr.bf16.gmra.mrb[0].mxu0 %v2253
  %v3796 = vpop.f32.mrb[0].mxu0
  %v3797 = vadd.f32 0.0, %v3796
  %v3798 = vpop.f32.mrb[0].mxu0
  %v3799 = vpop.f32.mrb[0].mxu0
  %v3800 = vadd.f32 0.0, %v3799
  %v3801 = vpop.f32.mrb[0].mxu0
  %3802 = vmatprep.mubr.bf16.mxu0 0
  %3803 = vmatmul.mubr.bf16.gmra.mrb[0].mxu0 %v2256
  %v3804 = vpop.f32.mrb[0].mxu0
  %v3805 = vadd.f32 0.0, %v3804
  %v3806 = vpop.f32.mrb[0].mxu0
  %v3807 = vpop.f32.mrb[0].mxu0
  %v3808 = vadd.f32 0.0, %v3807
  %v3809 = vpop.f32.mrb[0].mxu0
  %3810 = vmatprep.mubr.bf16.mxu0 0
  %3811 = vmatmul.mubr.bf16.gmra.mrb[0].mxu0 %v2259
  %v3812 = vpop.f32.mrb[0].mxu0
  %v3813 = vadd.f32 0.0, %v3812
  %v3814 = vpop.f32.mrb[0].mxu0
  %v3815 = vpop.f32.mrb[0].mxu0
  %v3816 = vadd.f32 0.0, %v3815
  %v3817 = vpop.f32.mrb[0].mxu0
  %3818 = vmatprep.mubr.bf16.mxu0 0
  %3819 = vmatmul.mubr.bf16.gmra.mrb[0].mxu0 %v2262
  %v3820 = vpop.f32.mrb[0].mxu0
  %v3821 = vadd.f32 0.0, %v3820
  %v3822 = vpop.f32.mrb[0].mxu0
  %v3823 = vpop.f32.mrb[0].mxu0
  %v3824 = vadd.f32 0.0, %v3823
  %v3825 = vpop.f32.mrb[0].mxu0
  %3826 = vmatprep.mubr.bf16.mxu0 0
  %3827 = vmatmul.mubr.bf16.gmra.mrb[0].mxu0 %v2265
  %v3828 = vpop.f32.mrb[0].mxu0
  %v3829 = vadd.f32 0.0, %v3828
  %v3830 = vpop.f32.mrb[0].mxu0
  %v3831 = vpop.f32.mrb[0].mxu0
  %v3832 = vadd.f32 0.0, %v3831
  %v3833 = vpop.f32.mrb[0].mxu0
  %3834 = vmatprep.mubr.bf16.mxu0 0
  %3835 = vmatmul.mubr.bf16.gmra.mrb[0].mxu0 %v2268
  %v3836 = vpop.f32.mrb[0].mxu0
  %v3837 = vadd.f32 0.0, %v3836
  %v3838 = vpop.f32.mrb[0].mxu0
  %v3839 = vpop.f32.mrb[0].mxu0
  %v3840 = vadd.f32 0.0, %v3839
  %v3841 = vpop.f32.mrb[0].mxu0
  %3842 = vmatprep.mubr.bf16.mxu0 0
  %3843 = vmatmul.mubr.bf16.gmra.mrb[0].mxu0 %v2271
  %v3844 = vpop.f32.mrb[0].mxu0
  %v3845 = vadd.f32 0.0, %v3844
  %v3846 = vpop.f32.mrb[0].mxu0
  %v3847 = vpop.f32.mrb[0].mxu0
  %v3848 = vadd.f32 0.0, %v3847
  %v3849 = vpop.f32.mrb[0].mxu0
  %3850 = vmatprep.mubr.bf16.mxu0 0
  %3851 = vmatmul.mubr.bf16.gmra.mrb[0].mxu0 %v2274
  %v3852 = vpop.f32.mrb[0].mxu0
  %v3853 = vadd.f32 0.0, %v3852
  %v3854 = vpop.f32.mrb[0].mxu0
  %v3855 = vpop.f32.mrb[0].mxu0
  %v3856 = vadd.f32 0.0, %v3855
  %v3857 = vpop.f32.mrb[0].mxu0
  %3858 = vmatprep.mubr.bf16.mxu0 0
  %3859 = vmatmul.mubr.bf16.gmra.mrb[0].mxu0 %v2277
  %v3860 = vpop.f32.mrb[0].mxu0
  %v3861 = vadd.f32 0.0, %v3860
  %v3862 = vpop.f32.mrb[0].mxu0
  %v3863 = vpop.f32.mrb[0].mxu0
  %v3864 = vadd.f32 0.0, %v3863
  %v3865 = vpop.f32.mrb[0].mxu0
  %3866 = vmatprep.mubr.bf16.mxu0 0
  %3867 = vmatmul.mubr.bf16.gmra.mrb[0].mxu0 %v2280
  %v3868 = vpop.f32.mrb[0].mxu0
  %v3869 = vadd.f32 0.0, %v3868
  %v3870 = vpop.f32.mrb[0].mxu0
  %v3871 = vpop.f32.mrb[0].mxu0
  %v3872 = vadd.f32 0.0, %v3871
  %v3873 = vpop.f32.mrb[0].mxu0
  %3874 = vmatprep.mubr.bf16.mxu0 0
  %3875 = vmatmul.mubr.bf16.gmra.mrb[0].mxu0 %v2283
  %v3876 = vpop.f32.mrb[0].mxu0
  %v3877 = vadd.f32 0.0, %v3876
  %v3878 = vpop.f32.mrb[0].mxu0
  %v3879 = vpop.f32.mrb[0].mxu0
  %v3880 = vadd.f32 0.0, %v3879
  %v3881 = vpop.f32.mrb[0].mxu0
  %3882 = vmatprep.mubr.bf16.mxu0 0
  %3883 = vmatmul.mubr.bf16.gmra.mrb[0].mxu0 %v2286
  %v3884 = vpop.f32.mrb[0].mxu0
  %v3885 = vadd.f32 0.0, %v3884
  %v3886 = vpop.f32.mrb[0].mxu0
  %v3887 = vpop.f32.mrb[0].mxu0
  %v3888 = vadd.f32 0.0, %v3887
  %v3889 = vpop.f32.mrb[0].mxu0
  %3890 = vmatprep.mubr.bf16.mxu0 0
  %3891 = vmatmul.mubr.bf16.gmra.mrb[0].mxu0 %v2289
  %v3892 = vpop.f32.mrb[0].mxu0
  %v3893 = vadd.f32 0.0, %v3892
  %v3894 = vpop.f32.mrb[0].mxu0
  %v3895 = vpop.f32.mrb[0].mxu0
  %v3896 = vadd.f32 0.0, %v3895
  %v3897 = vpop.f32.mrb[0].mxu0
  %3898 = vmatprep.mubr.bf16.mxu0 0
  %3899 = vmatmul.mubr.bf16.gmra.mrb[0].mxu0 %v2292
  %v3900 = vpop.f32.mrb[0].mxu0
  %v3901 = vadd.f32 0.0, %v3900
  %v3902 = vpop.f32.mrb[0].mxu0
  %v3903 = vpop.f32.mrb[0].mxu0
  %v3904 = vadd.f32 0.0, %v3903
  %v3905 = vpop.f32.mrb[0].mxu0
  %3906 = vdwg.mxu0
  %v3907 = vadd.f32 %v3550, %v3653
  %v3908 = vadd.f32 %v3551, %v3656
  %v3909 = vadd.f32 %v3552, %v3661
  %v3910 = vadd.f32 %v3553, %v3664
  %v3911 = vadd.f32 %v3554, %v3669
  %v3912 = vadd.f32 %v3555, %v3672
  %v3913 = vadd.f32 %v3556, %v3677
  %v3914 = vadd.f32 %v3557, %v3680
  %v3915 = vadd.f32 %v3558, %v3685
  %v3916 = vadd.f32 %v3559, %v3688
  %v3917 = vadd.f32 %v3560, %v3693
  %v3918 = vadd.f32 %v3561, %v3696
  %v3919 = vadd.f32 %v3562, %v3701
  %v3920 = vadd.f32 %v3563, %v3704
  %v3921 = vadd.f32 %v3564, %v3709
  %v3922 = vadd.f32 %v3565, %v3712
  %v3923 = vadd.f32 %v3566, %v3717
  %v3924 = vadd.f32 %v3567, %v3720
  %v3925 = vadd.f32 %v3568, %v3725
  %v3926 = vadd.f32 %v3569, %v3728
  %v3927 = vadd.f32 %v3570, %v3733
  %v3928 = vadd.f32 %v3571, %v3736
  %v3929 = vadd.f32 %v3572, %v3741
  %v3930 = vadd.f32 %v3573, %v3744
  %v3931 = vadd.f32 %v3574, %v3749
  %v3932 = vadd.f32 %v3575, %v3752
  %v3933 = vadd.f32 %v3576, %v3757
  %v3934 = vadd.f32 %v3577, %v3760
  %v3935 = vadd.f32 %v3578, %v3765
  %v3936 = vadd.f32 %v3579, %v3768
  %v3937 = vadd.f32 %v3580, %v3773
  %v3938 = vadd.f32 %v3581, %v3776
  %v3939 = vadd.f32 %v3582, %v3781
  %v3940 = vadd.f32 %v3583, %v3784
  %v3941 = vadd.f32 %v3584, %v3789
  %v3942 = vadd.f32 %v3585, %v3792
  %v3943 = vadd.f32 %v3586, %v3797
  %v3944 = vadd.f32 %v3587, %v3800
  %v3945 = vadd.f32 %v3588, %v3805
  %v3946 = vadd.f32 %v3589, %v3808
  %v3947 = vadd.f32 %v3590, %v3813
  %v3948 = vadd.f32 %v3591, %v3816
  %v3949 = vadd.f32 %v3592, %v3821
  %v3950 = vadd.f32 %v3593, %v3824
  %v3951 = vadd.f32 %v3594, %v3829
  %v3952 = vadd.f32 %v3595, %v3832
  %v3953 = vadd.f32 %v3596, %v3837
  %v3954 = vadd.f32 %v3597, %v3840
  %v3955 = vadd.f32 %v3598, %v3845
  %v3956 = vadd.f32 %v3599, %v3848
  %v3957 = vadd.f32 %v3600, %v3853
  %v3958 = vadd.f32 %v3601, %v3856
  %v3959 = vadd.f32 %v3602, %v3861
  %v3960 = vadd.f32 %v3603, %v3864
  %v3961 = vadd.f32 %v3604, %v3869
  %v3962 = vadd.f32 %v3605, %v3872
  %v3963 = vadd.f32 %v3606, %v3877
  %v3964 = vadd.f32 %v3607, %v3880
  %v3965 = vadd.f32 %v3608, %v3885
  %v3966 = vadd.f32 %v3609, %v3888
  %v3967 = vadd.f32 %v3610, %v3893
  %v3968 = vadd.f32 %v3611, %v3896
  %v3969 = vadd.f32 %v3612, %v3901
  %v3970 = vadd.f32 %v3613, %v3904
  %v3971 = vmax.f32 %v3907, 0.0
  %v3972 = vmax.f32 %v3908, 0.0
  %v3973 = vmax.f32 %v3909, 0.0
  %v3974 = vmax.f32 %v3910, 0.0
  %v3975 = vmax.f32 %v3911, 0.0
  %v3976 = vmax.f32 %v3912, 0.0
  %v3977 = vmax.f32 %v3913, 0.0
  %v3978 = vmax.f32 %v3914, 0.0
  %v3979 = vmax.f32 %v3915, 0.0
  %v3980 = vmax.f32 %v3916, 0.0
  %v3981 = vmax.f32 %v3917, 0.0
  %v3982 = vmax.f32 %v3918, 0.0
  %v3983 = vmax.f32 %v3919, 0.0
  %v3984 = vmax.f32 %v3920, 0.0
  %v3985 = vmax.f32 %v3921, 0.0
  %v3986 = vmax.f32 %v3922, 0.0
  %v3987 = vmax.f32 %v3923, 0.0
  %v3988 = vmax.f32 %v3924, 0.0
  %v3989 = vmax.f32 %v3925, 0.0
  %v3990 = vmax.f32 %v3926, 0.0
  %v3991 = vmax.f32 %v3927, 0.0
  %v3992 = vmax.f32 %v3928, 0.0
  %v3993 = vmax.f32 %v3929, 0.0
  %v3994 = vmax.f32 %v3930, 0.0
  %v3995 = vmax.f32 %v3931, 0.0
  %v3996 = vmax.f32 %v3932, 0.0
  %v3997 = vmax.f32 %v3933, 0.0
  %v3998 = vmax.f32 %v3934, 0.0
  %v3999 = vmax.f32 %v3935, 0.0
  %v4000 = vmax.f32 %v3936, 0.0
  %v4001 = vmax.f32 %v3937, 0.0
  %v4002 = vmax.f32 %v3938, 0.0
  %v4003 = vmax.f32 %v3939, 0.0
  %v4004 = vmax.f32 %v3940, 0.0
  %v4005 = vmax.f32 %v3941, 0.0
  %v4006 = vmax.f32 %v3942, 0.0
  %v4007 = vmax.f32 %v3943, 0.0
  %v4008 = vmax.f32 %v3944, 0.0
  %v4009 = vmax.f32 %v3945, 0.0
  %v4010 = vmax.f32 %v3946, 0.0
  %v4011 = vmax.f32 %v3947, 0.0
  %v4012 = vmax.f32 %v3948, 0.0
  %v4013 = vmax.f32 %v3949, 0.0
  %v4014 = vmax.f32 %v3950, 0.0
  %v4015 = vmax.f32 %v3951, 0.0
  %v4016 = vmax.f32 %v3952, 0.0
  %v4017 = vmax.f32 %v3953, 0.0
  %v4018 = vmax.f32 %v3954, 0.0
  %v4019 = vmax.f32 %v3955, 0.0
  %v4020 = vmax.f32 %v3956, 0.0
  %v4021 = vmax.f32 %v3957, 0.0
  %v4022 = vmax.f32 %v3958, 0.0
  %v4023 = vmax.f32 %v3959, 0.0
  %v4024 = vmax.f32 %v3960, 0.0
  %v4025 = vmax.f32 %v3961, 0.0
  %v4026 = vmax.f32 %v3962, 0.0
  %v4027 = vmax.f32 %v3963, 0.0
  %v4028 = vmax.f32 %v3964, 0.0
  %v4029 = vmax.f32 %v3965, 0.0
  %v4030 = vmax.f32 %v3966, 0.0
  %v4031 = vmax.f32 %v3967, 0.0
  %v4032 = vmax.f32 %v3968, 0.0
  %v4033 = vmax.f32 %v3969, 0.0
  %v4034 = vmax.f32 %v3970, 0.0
  %v4035 = vpack.c.bf16 %v3972, %v3971
  %v4036 = vpack.c.bf16 %v3974, %v3973
  %v4037 = vpack.c.bf16 %v3976, %v3975
  %v4038 = vpack.c.bf16 %v3978, %v3977
  %v4039 = vpack.c.bf16 %v3980, %v3979
  %v4040 = vpack.c.bf16 %v3982, %v3981
  %v4041 = vpack.c.bf16 %v3984, %v3983
  %v4042 = vpack.c.bf16 %v3986, %v3985
  %v4043 = vpack.c.bf16 %v3988, %v3987
  %v4044 = vpack.c.bf16 %v3990, %v3989
  %v4045 = vpack.c.bf16 %v3992, %v3991
  %v4046 = vpack.c.bf16 %v3994, %v3993
  %v4047 = vpack.c.bf16 %v3996, %v3995
  %v4048 = vpack.c.bf16 %v3998, %v3997
  %v4049 = vpack.c.bf16 %v4000, %v3999
  %v4050 = vpack.c.bf16 %v4002, %v4001
  %v4051 = vpack.c.bf16 %v4004, %v4003
  %v4052 = vpack.c.bf16 %v4006, %v4005
  %v4053 = vpack.c.bf16 %v4008, %v4007
  %v4054 = vpack.c.bf16 %v4010, %v4009
  %v4055 = vpack.c.bf16 %v4012, %v4011
  %v4056 = vpack.c.bf16 %v4014, %v4013
  %v4057 = vpack.c.bf16 %v4016, %v4015
  %v4058 = vpack.c.bf16 %v4018, %v4017
  %v4059 = vpack.c.bf16 %v4020, %v4019
  %v4060 = vpack.c.bf16 %v4022, %v4021
  %v4061 = vpack.c.bf16 %v4024, %v4023
  %v4062 = vpack.c.bf16 %v4026, %v4025
  %v4063 = vpack.c.bf16 %v4028, %v4027
  %v4064 = vpack.c.bf16 %v4030, %v4029
  %v4065 = vpack.c.bf16 %v4032, %v4031
  %v4066 = vpack.c.bf16 %v4034, %v4033
  %v4067 = vld [vmem:[%s8] sm:$0xf]
  %v4068 = vld [vmem:[%s8 + $0x4] sm:$0x1]
  %v4071 = vunpack.c.l.b16 %v4067
  %v4072 = vunpack.c.l.b16 %v4068
  %v4073 = vpack.c.b16 %v4072, %v4071
  %vm4074 = vcmask 80896
  %v4076 = vsel %vm4074, %v4035, 0
  %v4079 = vsel %vm4074, %v4036, 0
  %v4082 = vsel %vm4074, %v4037, 0
  %v4085 = vsel %vm4074, %v4038, 0
  %v4088 = vsel %vm4074, %v4039, 0
  %v4091 = vsel %vm4074, %v4040, 0
  %v4094 = vsel %vm4074, %v4041, 0
  %v4097 = vsel %vm4074, %v4042, 0
  %v4100 = vsel %vm4074, %v4043, 0
  %v4103 = vsel %vm4074, %v4044, 0
  %v4106 = vsel %vm4074, %v4045, 0
  %v4109 = vsel %vm4074, %v4046, 0
  %v4112 = vsel %vm4074, %v4047, 0
  %v4115 = vsel %vm4074, %v4048, 0
  %v4118 = vsel %vm4074, %v4049, 0
  %v4121 = vsel %vm4074, %v4050, 0
  %v4124 = vsel %vm4074, %v4051, 0
  %v4127 = vsel %vm4074, %v4052, 0
  %v4130 = vsel %vm4074, %v4053, 0
  %v4133 = vsel %vm4074, %v4054, 0
  %v4136 = vsel %vm4074, %v4055, 0
  %v4139 = vsel %vm4074, %v4056, 0
  %v4142 = vsel %vm4074, %v4057, 0
  %v4145 = vsel %vm4074, %v4058, 0
  %v4148 = vsel %vm4074, %v4059, 0
  %v4151 = vsel %vm4074, %v4060, 0
  %v4154 = vsel %vm4074, %v4061, 0
  %v4157 = vsel %vm4074, %v4062, 0
  %v4160 = vsel %vm4074, %v4063, 0
  %v4163 = vsel %vm4074, %v4064, 0
  %v4166 = vsel %vm4074, %v4065, 0
  %v4169 = vsel %vm4074, %v4066, 0
  %vm4171 = vcmask 1044480
  %v4173 = vsel %vm4171, %v4073, 0
  %4175 = vmatprep.subr.bf16.mxu0 0
  %4176 = vmatpush1.bf16.msra.mxu0 %v4173
  %4177 = vmatprep.subr.bf16.mxu0 0
  %4178 = vmatpush1.bf16.msra.mxu0 0
  %4179 = vmatprep.subr.bf16.mxu0 0
  %4180 = vmatpush1.bf16.msra.mxu0 0
  %4181 = vmatprep.subr.bf16.mxu0 0
  %4182 = vmatpush1.bf16.msra.mxu0 0
  %4183 = vmatprep.subr.bf16.mxu0 0
  %4184 = vmatpush1.bf16.msra.mxu0 0
  %4185 = vmatprep.subr.bf16.mxu0 0
  %4186 = vmatpush1.bf16.msra.mxu0 0
  %4187 = vmatprep.subr.bf16.mxu0 0
  %4188 = vmatpush1.bf16.msra.mxu0 0
  %4189 = vmatprep.subr.bf16.mxu0 0
  %4190 = vmatpush1.bf16.msra.mxu0 0
  %4191 = vmatprep.subr.bf16.mxu0 0
  %4192 = vmatpush1.bf16.msra.mxu0 0
  %4193 = vmatprep.subr.bf16.mxu0 0
  %4194 = vmatpush1.bf16.msra.mxu0 0
  %4195 = vmatprep.subr.bf16.mxu0 0
  %4196 = vmatpush1.bf16.msra.mxu0 0
  %4197 = vmatprep.subr.bf16.mxu0 0
  %4198 = vmatpush1.bf16.msra.mxu0 0
  %4199 = vmatprep.subr.bf16.mxu0 0
  %4200 = vmatpush1.bf16.msra.mxu0 0
  %4201 = vmatprep.subr.bf16.mxu0 0
  %4202 = vmatpush1.bf16.msra.mxu0 0
  %4203 = vmatprep.subr.bf16.mxu0 0
  %4204 = vmatpush1.bf16.msra.mxu0 0
  %4205 = vmatprep.subr.bf16.mxu0 0
  %4206 = vmatpush1.bf16.msra.mxu0 0
  %4207 = vmatprep.mubr.bf16.mxu0 0
  %4208 = vmatmul.mubr.bf16.gmra.mrb[0].mxu0 %v4076
  %v4209 = vpop.f32.mrb[0].mxu0
  %v4210 = vadd.f32 0.0, %v4209
  %v4211 = vpop.f32.mrb[0].mxu0
  %v4212 = vpop.f32.mrb[0].mxu0
  %v4213 = vadd.f32 0.0, %v4212
  %v4214 = vpop.f32.mrb[0].mxu0
  %4215 = vmatprep.mubr.bf16.mxu0 0
  %4216 = vmatmul.mubr.bf16.gmra.mrb[0].mxu0 %v4079
  %v4217 = vpop.f32.mrb[0].mxu0
  %v4218 = vadd.f32 0.0, %v4217
  %v4219 = vpop.f32.mrb[0].mxu0
  %v4220 = vpop.f32.mrb[0].mxu0
  %v4221 = vadd.f32 0.0, %v4220
  %v4222 = vpop.f32.mrb[0].mxu0
  %4223 = vmatprep.mubr.bf16.mxu0 0
  %4224 = vmatmul.mubr.bf16.gmra.mrb[0].mxu0 %v4082
  %v4225 = vpop.f32.mrb[0].mxu0
  %v4226 = vadd.f32 0.0, %v4225
  %v4227 = vpop.f32.mrb[0].mxu0
  %v4228 = vpop.f32.mrb[0].mxu0
  %v4229 = vadd.f32 0.0, %v4228
  %v4230 = vpop.f32.mrb[0].mxu0
  %4231 = vmatprep.mubr.bf16.mxu0 0
  %4232 = vmatmul.mubr.bf16.gmra.mrb[0].mxu0 %v4085
  %v4233 = vpop.f32.mrb[0].mxu0
  %v4234 = vadd.f32 0.0, %v4233
  %v4235 = vpop.f32.mrb[0].mxu0
  %v4236 = vpop.f32.mrb[0].mxu0
  %v4237 = vadd.f32 0.0, %v4236
  %v4238 = vpop.f32.mrb[0].mxu0
  %4239 = vmatprep.mubr.bf16.mxu0 0
  %4240 = vmatmul.mubr.bf16.gmra.mrb[0].mxu0 %v4088
  %v4241 = vpop.f32.mrb[0].mxu0
  %v4242 = vadd.f32 0.0, %v4241
  %v4243 = vpop.f32.mrb[0].mxu0
  %v4244 = vpop.f32.mrb[0].mxu0
  %v4245 = vadd.f32 0.0, %v4244
  %v4246 = vpop.f32.mrb[0].mxu0
  %4247 = vmatprep.mubr.bf16.mxu0 0
  %4248 = vmatmul.mubr.bf16.gmra.mrb[0].mxu0 %v4091
  %v4249 = vpop.f32.mrb[0].mxu0
  %v4250 = vadd.f32 0.0, %v4249
  %v4251 = vpop.f32.mrb[0].mxu0
  %v4252 = vpop.f32.mrb[0].mxu0
  %v4253 = vadd.f32 0.0, %v4252
  %v4254 = vpop.f32.mrb[0].mxu0
  %4255 = vmatprep.mubr.bf16.mxu0 0
  %4256 = vmatmul.mubr.bf16.gmra.mrb[0].mxu0 %v4094
  %v4257 = vpop.f32.mrb[0].mxu0
  %v4258 = vadd.f32 0.0, %v4257
  %v4259 = vpop.f32.mrb[0].mxu0
  %v4260 = vpop.f32.mrb[0].mxu0
  %v4261 = vadd.f32 0.0, %v4260
  %v4262 = vpop.f32.mrb[0].mxu0
  %4263 = vmatprep.mubr.bf16.mxu0 0
  %4264 = vmatmul.mubr.bf16.gmra.mrb[0].mxu0 %v4097
  %v4265 = vpop.f32.mrb[0].mxu0
  %v4266 = vadd.f32 0.0, %v4265
  %v4267 = vpop.f32.mrb[0].mxu0
  %v4268 = vpop.f32.mrb[0].mxu0
  %v4269 = vadd.f32 0.0, %v4268
  %v4270 = vpop.f32.mrb[0].mxu0
  %4271 = vmatprep.mubr.bf16.mxu0 0
  %4272 = vmatmul.mubr.bf16.gmra.mrb[0].mxu0 %v4100
  %v4273 = vpop.f32.mrb[0].mxu0
  %v4274 = vadd.f32 0.0, %v4273
  %v4275 = vpop.f32.mrb[0].mxu0
  %v4276 = vpop.f32.mrb[0].mxu0
  %v4277 = vadd.f32 0.0, %v4276
  %v4278 = vpop.f32.mrb[0].mxu0
  %4279 = vmatprep.mubr.bf16.mxu0 0
  %4280 = vmatmul.mubr.bf16.gmra.mrb[0].mxu0 %v4103
  %v4281 = vpop.f32.mrb[0].mxu0
  %v4282 = vadd.f32 0.0, %v4281
  %v4283 = vpop.f32.mrb[0].mxu0
  %v4284 = vpop.f32.mrb[0].mxu0
  %v4285 = vadd.f32 0.0, %v4284
  %v4286 = vpop.f32.mrb[0].mxu0
  %4287 = vmatprep.mubr.bf16.mxu0 0
  %4288 = vmatmul.mubr.bf16.gmra.mrb[0].mxu0 %v4106
  %v4289 = vpop.f32.mrb[0].mxu0
  %v4290 = vadd.f32 0.0, %v4289
  %v4291 = vpop.f32.mrb[0].mxu0
  %v4292 = vpop.f32.mrb[0].mxu0
  %v4293 = vadd.f32 0.0, %v4292
  %v4294 = vpop.f32.mrb[0].mxu0
  %4295 = vmatprep.mubr.bf16.mxu0 0
  %4296 = vmatmul.mubr.bf16.gmra.mrb[0].mxu0 %v4109
  %v4297 = vpop.f32.mrb[0].mxu0
  %v4298 = vadd.f32 0.0, %v4297
  %v4299 = vpop.f32.mrb[0].mxu0
  %v4300 = vpop.f32.mrb[0].mxu0
  %v4301 = vadd.f32 0.0, %v4300
  %v4302 = vpop.f32.mrb[0].mxu0
  %4303 = vmatprep.mubr.bf16.mxu0 0
  %4304 = vmatmul.mubr.bf16.gmra.mrb[0].mxu0 %v4112
  %v4305 = vpop.f32.mrb[0].mxu0
  %v4306 = vadd.f32 0.0, %v4305
  %v4307 = vpop.f32.mrb[0].mxu0
  %v4308 = vpop.f32.mrb[0].mxu0
  %v4309 = vadd.f32 0.0, %v4308
  %v4310 = vpop.f32.mrb[0].mxu0
  %4311 = vmatprep.mubr.bf16.mxu0 0
  %4312 = vmatmul.mubr.bf16.gmra.mrb[0].mxu0 %v4115
  %v4313 = vpop.f32.mrb[0].mxu0
  %v4314 = vadd.f32 0.0, %v4313
  %v4315 = vpop.f32.mrb[0].mxu0
  %v4316 = vpop.f32.mrb[0].mxu0
  %v4317 = vadd.f32 0.0, %v4316
  %v4318 = vpop.f32.mrb[0].mxu0
  %4319 = vmatprep.mubr.bf16.mxu0 0
  %4320 = vmatmul.mubr.bf16.gmra.mrb[0].mxu0 %v4118
  %v4321 = vpop.f32.mrb[0].mxu0
  %v4322 = vadd.f32 0.0, %v4321
  %v4323 = vpop.f32.mrb[0].mxu0
  %v4324 = vpop.f32.mrb[0].mxu0
  %v4325 = vadd.f32 0.0, %v4324
  %v4326 = vpop.f32.mrb[0].mxu0
  %4327 = vmatprep.mubr.bf16.mxu0 0
  %4328 = vmatmul.mubr.bf16.gmra.mrb[0].mxu0 %v4121
  %v4329 = vpop.f32.mrb[0].mxu0
  %v4330 = vadd.f32 0.0, %v4329
  %v4331 = vpop.f32.mrb[0].mxu0
  %v4332 = vpop.f32.mrb[0].mxu0
  %v4333 = vadd.f32 0.0, %v4332
  %v4334 = vpop.f32.mrb[0].mxu0
  %4335 = vmatprep.mubr.bf16.mxu0 0
  %4336 = vmatmul.mubr.bf16.gmra.mrb[0].mxu0 %v4124
  %v4337 = vpop.f32.mrb[0].mxu0
  %v4338 = vadd.f32 0.0, %v4337
  %v4339 = vpop.f32.mrb[0].mxu0
  %v4340 = vpop.f32.mrb[0].mxu0
  %v4341 = vadd.f32 0.0, %v4340
  %v4342 = vpop.f32.mrb[0].mxu0
  %4343 = vmatprep.mubr.bf16.mxu0 0
  %4344 = vmatmul.mubr.bf16.gmra.mrb[0].mxu0 %v4127
  %v4345 = vpop.f32.mrb[0].mxu0
  %v4346 = vadd.f32 0.0, %v4345
  %v4347 = vpop.f32.mrb[0].mxu0
  %v4348 = vpop.f32.mrb[0].mxu0
  %v4349 = vadd.f32 0.0, %v4348
  %v4350 = vpop.f32.mrb[0].mxu0
  %4351 = vmatprep.mubr.bf16.mxu0 0
  %4352 = vmatmul.mubr.bf16.gmra.mrb[0].mxu0 %v4130
  %v4353 = vpop.f32.mrb[0].mxu0
  %v4354 = vadd.f32 0.0, %v4353
  %v4355 = vpop.f32.mrb[0].mxu0
  %v4356 = vpop.f32.mrb[0].mxu0
  %v4357 = vadd.f32 0.0, %v4356
  %v4358 = vpop.f32.mrb[0].mxu0
  %4359 = vmatprep.mubr.bf16.mxu0 0
  %4360 = vmatmul.mubr.bf16.gmra.mrb[0].mxu0 %v4133
  %v4361 = vpop.f32.mrb[0].mxu0
  %v4362 = vadd.f32 0.0, %v4361
  %v4363 = vpop.f32.mrb[0].mxu0
  %v4364 = vpop.f32.mrb[0].mxu0
  %v4365 = vadd.f32 0.0, %v4364
  %v4366 = vpop.f32.mrb[0].mxu0
  %4367 = vmatprep.mubr.bf16.mxu0 0
  %4368 = vmatmul.mubr.bf16.gmra.mrb[0].mxu0 %v4136
  %v4369 = vpop.f32.mrb[0].mxu0
  %v4370 = vadd.f32 0.0, %v4369
  %v4371 = vpop.f32.mrb[0].mxu0
  %v4372 = vpop.f32.mrb[0].mxu0
  %v4373 = vadd.f32 0.0, %v4372
  %v4374 = vpop.f32.mrb[0].mxu0
  %4375 = vmatprep.mubr.bf16.mxu0 0
  %4376 = vmatmul.mubr.bf16.gmra.mrb[0].mxu0 %v4139
  %v4377 = vpop.f32.mrb[0].mxu0
  %v4378 = vadd.f32 0.0, %v4377
  %v4379 = vpop.f32.mrb[0].mxu0
  %v4380 = vpop.f32.mrb[0].mxu0
  %v4381 = vadd.f32 0.0, %v4380
  %v4382 = vpop.f32.mrb[0].mxu0
  %4383 = vmatprep.mubr.bf16.mxu0 0
  %4384 = vmatmul.mubr.bf16.gmra.mrb[0].mxu0 %v4142
  %v4385 = vpop.f32.mrb[0].mxu0
  %v4386 = vadd.f32 0.0, %v4385
  %v4387 = vpop.f32.mrb[0].mxu0
  %v4388 = vpop.f32.mrb[0].mxu0
  %v4389 = vadd.f32 0.0, %v4388
  %v4390 = vpop.f32.mrb[0].mxu0
  %4391 = vmatprep.mubr.bf16.mxu0 0
  %4392 = vmatmul.mubr.bf16.gmra.mrb[0].mxu0 %v4145
  %v4393 = vpop.f32.mrb[0].mxu0
  %v4394 = vadd.f32 0.0, %v4393
  %v4395 = vpop.f32.mrb[0].mxu0
  %v4396 = vpop.f32.mrb[0].mxu0
  %v4397 = vadd.f32 0.0, %v4396
  %v4398 = vpop.f32.mrb[0].mxu0
  %4399 = vmatprep.mubr.bf16.mxu0 0
  %4400 = vmatmul.mubr.bf16.gmra.mrb[0].mxu0 %v4148
  %v4401 = vpop.f32.mrb[0].mxu0
  %v4402 = vadd.f32 0.0, %v4401
  %v4403 = vpop.f32.mrb[0].mxu0
  %v4404 = vpop.f32.mrb[0].mxu0
  %v4405 = vadd.f32 0.0, %v4404
  %v4406 = vpop.f32.mrb[0].mxu0
  %4407 = vmatprep.mubr.bf16.mxu0 0
  %4408 = vmatmul.mubr.bf16.gmra.mrb[0].mxu0 %v4151
  %v4409 = vpop.f32.mrb[0].mxu0
  %v4410 = vadd.f32 0.0, %v4409
  %v4411 = vpop.f32.mrb[0].mxu0
  %v4412 = vpop.f32.mrb[0].mxu0
  %v4413 = vadd.f32 0.0, %v4412
  %v4414 = vpop.f32.mrb[0].mxu0
  %4415 = vmatprep.mubr.bf16.mxu0 0
  %4416 = vmatmul.mubr.bf16.gmra.mrb[0].mxu0 %v4154
  %v4417 = vpop.f32.mrb[0].mxu0
  %v4418 = vadd.f32 0.0, %v4417
  %v4419 = vpop.f32.mrb[0].mxu0
  %v4420 = vpop.f32.mrb[0].mxu0
  %v4421 = vadd.f32 0.0, %v4420
  %v4422 = vpop.f32.mrb[0].mxu0
  %4423 = vmatprep.mubr.bf16.mxu0 0
  %4424 = vmatmul.mubr.bf16.gmra.mrb[0].mxu0 %v4157
  %v4425 = vpop.f32.mrb[0].mxu0
  %v4426 = vadd.f32 0.0, %v4425
  %v4427 = vpop.f32.mrb[0].mxu0
  %v4428 = vpop.f32.mrb[0].mxu0
  %v4429 = vadd.f32 0.0, %v4428
  %v4430 = vpop.f32.mrb[0].mxu0
  %4431 = vmatprep.mubr.bf16.mxu0 0
  %4432 = vmatmul.mubr.bf16.gmra.mrb[0].mxu0 %v4160
  %v4433 = vpop.f32.mrb[0].mxu0
  %v4434 = vadd.f32 0.0, %v4433
  %v4435 = vpop.f32.mrb[0].mxu0
  %v4436 = vpop.f32.mrb[0].mxu0
  %v4437 = vadd.f32 0.0, %v4436
  %v4438 = vpop.f32.mrb[0].mxu0
  %4439 = vmatprep.mubr.bf16.mxu0 0
  %4440 = vmatmul.mubr.bf16.gmra.mrb[0].mxu0 %v4163
  %v4441 = vpop.f32.mrb[0].mxu0
  %v4442 = vadd.f32 0.0, %v4441
  %v4443 = vpop.f32.mrb[0].mxu0
  %v4444 = vpop.f32.mrb[0].mxu0
  %v4445 = vadd.f32 0.0, %v4444
  %v4446 = vpop.f32.mrb[0].mxu0
  %4447 = vmatprep.mubr.bf16.mxu0 0
  %4448 = vmatmul.mubr.bf16.gmra.mrb[0].mxu0 %v4166
  %v4449 = vpop.f32.mrb[0].mxu0
  %v4450 = vadd.f32 0.0, %v4449
  %v4451 = vpop.f32.mrb[0].mxu0
  %v4452 = vpop.f32.mrb[0].mxu0
  %v4453 = vadd.f32 0.0, %v4452
  %v4454 = vpop.f32.mrb[0].mxu0
  %4455 = vmatprep.mubr.bf16.mxu0 0
  %4456 = vmatmul.mubr.bf16.gmra.mrb[0].mxu0 %v4169
  %v4457 = vpop.f32.mrb[0].mxu0
  %v4458 = vadd.f32 0.0, %v4457
  %v4459 = vpop.f32.mrb[0].mxu0
  %v4460 = vpop.f32.mrb[0].mxu0
  %v4461 = vadd.f32 0.0, %v4460
  %v4462 = vpop.f32.mrb[0].mxu0
  %4463 = vdwg.mxu0
  %v4464 = vsub.f32 0.0, %v4210
  %v4465 = vsub.f32 0.0, %v4213
  %v4466 = vsub.f32 0.0, %v4218
  %v4467 = vsub.f32 0.0, %v4221
  %v4468 = vsub.f32 0.0, %v4226
  %v4469 = vsub.f32 0.0, %v4229
  %v4470 = vsub.f32 0.0, %v4234
  %v4471 = vsub.f32 0.0, %v4237
  %v4472 = vsub.f32 0.0, %v4242
  %v4473 = vsub.f32 0.0, %v4245
  %v4474 = vsub.f32 0.0, %v4250
  %v4475 = vsub.f32 0.0, %v4253
  %v4476 = vsub.f32 0.0, %v4258
  %v4477 = vsub.f32 0.0, %v4261
  %v4478 = vsub.f32 0.0, %v4266
  %v4479 = vsub.f32 0.0, %v4269
  %v4480 = vsub.f32 0.0, %v4274
  %v4481 = vsub.f32 0.0, %v4277
  %v4482 = vsub.f32 0.0, %v4282
  %v4483 = vsub.f32 0.0, %v4285
  %v4484 = vsub.f32 0.0, %v4290
  %v4485 = vsub.f32 0.0, %v4293
  %v4486 = vsub.f32 0.0, %v4298
  %v4487 = vsub.f32 0.0, %v4301
  %v4488 = vsub.f32 0.0, %v4306
  %v4489 = vsub.f32 0.0, %v4309
  %v4490 = vsub.f32 0.0, %v4314
  %v4491 = vsub.f32 0.0, %v4317
  %v4492 = vsub.f32 0.0, %v4322
  %v4493 = vsub.f32 0.0, %v4325
  %v4494 = vsub.f32 0.0, %v4330
  %v4495 = vsub.f32 0.0, %v4333
  %v4496 = vsub.f32 0.0, %v4338
  %v4497 = vsub.f32 0.0, %v4341
  %v4498 = vsub.f32 0.0, %v4346
  %v4499 = vsub.f32 0.0, %v4349
  %v4500 = vsub.f32 0.0, %v4354
  %v4501 = vsub.f32 0.0, %v4357
  %v4502 = vsub.f32 0.0, %v4362
  %v4503 = vsub.f32 0.0, %v4365
  %v4504 = vsub.f32 0.0, %v4370
  %v4505 = vsub.f32 0.0, %v4373
  %v4506 = vsub.f32 0.0, %v4378
  %v4507 = vsub.f32 0.0, %v4381
  %v4508 = vsub.f32 0.0, %v4386
  %v4509 = vsub.f32 0.0, %v4389
  %v4510 = vsub.f32 0.0, %v4394
  %v4511 = vsub.f32 0.0, %v4397
  %v4512 = vsub.f32 0.0, %v4402
  %v4513 = vsub.f32 0.0, %v4405
  %v4514 = vsub.f32 0.0, %v4410
  %v4515 = vsub.f32 0.0, %v4413
  %v4516 = vsub.f32 0.0, %v4418
  %v4517 = vsub.f32 0.0, %v4421
  %v4518 = vsub.f32 0.0, %v4426
  %v4519 = vsub.f32 0.0, %v4429
  %v4520 = vsub.f32 0.0, %v4434
  %v4521 = vsub.f32 0.0, %v4437
  %v4522 = vsub.f32 0.0, %v4442
  %v4523 = vsub.f32 0.0, %v4445
  %v4524 = vsub.f32 0.0, %v4450
  %v4525 = vsub.f32 0.0, %v4453
  %v4526 = vsub.f32 0.0, %v4458
  %v4527 = vsub.f32 0.0, %v4461
  %v4528 = vmul.f32 %v4464, 1.442695
  %v4529 = vpow.pop %v4528
  %v4530 = vmul.f32 %v4465, 1.442695
  %v4531 = vpow.pop %v4530
  %v4532 = vmul.f32 %v4466, 1.442695
  %v4533 = vpow.pop %v4532
  %v4534 = vmul.f32 %v4467, 1.442695
  %v4535 = vpow.pop %v4534
  %v4536 = vmul.f32 %v4468, 1.442695
  %v4537 = vpow.pop %v4536
  %v4538 = vmul.f32 %v4469, 1.442695
  %v4539 = vpow.pop %v4538
  %v4540 = vmul.f32 %v4470, 1.442695
  %v4541 = vpow.pop %v4540
  %v4542 = vmul.f32 %v4471, 1.442695
  %v4543 = vpow.pop %v4542
  %v4544 = vmul.f32 %v4472, 1.442695
  %v4545 = vpow.pop %v4544
  %v4546 = vmul.f32 %v4473, 1.442695
  %v4547 = vpow.pop %v4546
  %v4548 = vmul.f32 %v4474, 1.442695
  %v4549 = vpow.pop %v4548
  %v4550 = vmul.f32 %v4475, 1.442695
  %v4551 = vpow.pop %v4550
  %v4552 = vmul.f32 %v4476, 1.442695
  %v4553 = vpow.pop %v4552
  %v4554 = vmul.f32 %v4477, 1.442695
  %v4555 = vpow.pop %v4554
  %v4556 = vmul.f32 %v4478, 1.442695
  %v4557 = vpow.pop %v4556
  %v4558 = vmul.f32 %v4479, 1.442695
  %v4559 = vpow.pop %v4558
  %v4560 = vmul.f32 %v4480, 1.442695
  %v4561 = vpow.pop %v4560
  %v4562 = vmul.f32 %v4481, 1.442695
  %v4563 = vpow.pop %v4562
  %v4564 = vmul.f32 %v4482, 1.442695
  %v4565 = vpow.pop %v4564
  %v4566 = vmul.f32 %v4483, 1.442695
  %v4567 = vpow.pop %v4566
  %v4568 = vmul.f32 %v4484, 1.442695
  %v4569 = vpow.pop %v4568
  %v4570 = vmul.f32 %v4485, 1.442695
  %v4571 = vpow.pop %v4570
  %v4572 = vmul.f32 %v4486, 1.442695
  %v4573 = vpow.pop %v4572
  %v4574 = vmul.f32 %v4487, 1.442695
  %v4575 = vpow.pop %v4574
  %v4576 = vmul.f32 %v4488, 1.442695
  %v4577 = vpow.pop %v4576
  %v4578 = vmul.f32 %v4489, 1.442695
  %v4579 = vpow.pop %v4578
  %v4580 = vmul.f32 %v4490, 1.442695
  %v4581 = vpow.pop %v4580
  %v4582 = vmul.f32 %v4491, 1.442695
  %v4583 = vpow.pop %v4582
  %v4584 = vmul.f32 %v4492, 1.442695
  %v4585 = vpow.pop %v4584
  %v4586 = vmul.f32 %v4493, 1.442695
  %v4587 = vpow.pop %v4586
  %v4588 = vmul.f32 %v4494, 1.442695
  %v4589 = vpow.pop %v4588
  %v4590 = vmul.f32 %v4495, 1.442695
  %v4591 = vpow.pop %v4590
  %v4592 = vmul.f32 %v4496, 1.442695
  %v4593 = vpow.pop %v4592
  %v4594 = vmul.f32 %v4497, 1.442695
  %v4595 = vpow.pop %v4594
  %v4596 = vmul.f32 %v4498, 1.442695
  %v4597 = vpow.pop %v4596
  %v4598 = vmul.f32 %v4499, 1.442695
  %v4599 = vpow.pop %v4598
  %v4600 = vmul.f32 %v4500, 1.442695
  %v4601 = vpow.pop %v4600
  %v4602 = vmul.f32 %v4501, 1.442695
  %v4603 = vpow.pop %v4602
  %v4604 = vmul.f32 %v4502, 1.442695
  %v4605 = vpow.pop %v4604
  %v4606 = vmul.f32 %v4503, 1.442695
  %v4607 = vpow.pop %v4606
  %v4608 = vmul.f32 %v4504, 1.442695
  %v4609 = vpow.pop %v4608
  %v4610 = vmul.f32 %v4505, 1.442695
  %v4611 = vpow.pop %v4610
  %v4612 = vmul.f32 %v4506, 1.442695
  %v4613 = vpow.pop %v4612
  %v4614 = vmul.f32 %v4507, 1.442695
  %v4615 = vpow.pop %v4614
  %v4616 = vmul.f32 %v4508, 1.442695
  %v4617 = vpow.pop %v4616
  %v4618 = vmul.f32 %v4509, 1.442695
  %v4619 = vpow.pop %v4618
  %v4620 = vmul.f32 %v4510, 1.442695
  %v4621 = vpow.pop %v4620
  %v4622 = vmul.f32 %v4511, 1.442695
  %v4623 = vpow.pop %v4622
  %v4624 = vmul.f32 %v4512, 1.442695
  %v4625 = vpow.pop %v4624
  %v4626 = vmul.f32 %v4513, 1.442695
  %v4627 = vpow.pop %v4626
  %v4628 = vmul.f32 %v4514, 1.442695
  %v4629 = vpow.pop %v4628
  %v4630 = vmul.f32 %v4515, 1.442695
  %v4631 = vpow.pop %v4630
  %v4632 = vmul.f32 %v4516, 1.442695
  %v4633 = vpow.pop %v4632
  %v4634 = vmul.f32 %v4517, 1.442695
  %v4635 = vpow.pop %v4634
  %v4636 = vmul.f32 %v4518, 1.442695
  %v4637 = vpow.pop %v4636
  %v4638 = vmul.f32 %v4519, 1.442695
  %v4639 = vpow.pop %v4638
  %v4640 = vmul.f32 %v4520, 1.442695
  %v4641 = vpow.pop %v4640
  %v4642 = vmul.f32 %v4521, 1.442695
  %v4643 = vpow.pop %v4642
  %v4644 = vmul.f32 %v4522, 1.442695
  %v4645 = vpow.pop %v4644
  %v4646 = vmul.f32 %v4523, 1.442695
  %v4647 = vpow.pop %v4646
  %v4648 = vmul.f32 %v4524, 1.442695
  %v4649 = vpow.pop %v4648
  %v4650 = vmul.f32 %v4525, 1.442695
  %v4651 = vpow.pop %v4650
  %v4652 = vmul.f32 %v4526, 1.442695
  %v4653 = vpow.pop %v4652
  %v4654 = vmul.f32 %v4527, 1.442695
  %v4655 = vpow.pop %v4654
  %v4656 = vadd.f32 %v4529, 1.0
  %v4657 = vadd.f32 %v4531, 1.0
  %v4658 = vadd.f32 %v4533, 1.0
  %v4659 = vadd.f32 %v4535, 1.0
  %v4660 = vadd.f32 %v4537, 1.0
  %v4661 = vadd.f32 %v4539, 1.0
  %v4662 = vadd.f32 %v4541, 1.0
  %v4663 = vadd.f32 %v4543, 1.0
  %v4664 = vadd.f32 %v4545, 1.0
  %v4665 = vadd.f32 %v4547, 1.0
  %v4666 = vadd.f32 %v4549, 1.0
  %v4667 = vadd.f32 %v4551, 1.0
  %v4668 = vadd.f32 %v4553, 1.0
  %v4669 = vadd.f32 %v4555, 1.0
  %v4670 = vadd.f32 %v4557, 1.0
  %v4671 = vadd.f32 %v4559, 1.0
  %v4672 = vadd.f32 %v4561, 1.0
  %v4673 = vadd.f32 %v4563, 1.0
  %v4674 = vadd.f32 %v4565, 1.0
  %v4675 = vadd.f32 %v4567, 1.0
  %v4676 = vadd.f32 %v4569, 1.0
  %v4677 = vadd.f32 %v4571, 1.0
  %v4678 = vadd.f32 %v4573, 1.0
  %v4679 = vadd.f32 %v4575, 1.0
  %v4680 = vadd.f32 %v4577, 1.0
  %v4681 = vadd.f32 %v4579, 1.0
  %v4682 = vadd.f32 %v4581, 1.0
  %v4683 = vadd.f32 %v4583, 1.0
  %v4684 = vadd.f32 %v4585, 1.0
  %v4685 = vadd.f32 %v4587, 1.0
  %v4686 = vadd.f32 %v4589, 1.0
  %v4687 = vadd.f32 %v4591, 1.0
  %v4688 = vadd.f32 %v4593, 1.0
  %v4689 = vadd.f32 %v4595, 1.0
  %v4690 = vadd.f32 %v4597, 1.0
  %v4691 = vadd.f32 %v4599, 1.0
  %v4692 = vadd.f32 %v4601, 1.0
  %v4693 = vadd.f32 %v4603, 1.0
  %v4694 = vadd.f32 %v4605, 1.0
  %v4695 = vadd.f32 %v4607, 1.0
  %v4696 = vadd.f32 %v4609, 1.0
  %v4697 = vadd.f32 %v4611, 1.0
  %v4698 = vadd.f32 %v4613, 1.0
  %v4699 = vadd.f32 %v4615, 1.0
  %v4700 = vadd.f32 %v4617, 1.0
  %v4701 = vadd.f32 %v4619, 1.0
  %v4702 = vadd.f32 %v4621, 1.0
  %v4703 = vadd.f32 %v4623, 1.0
  %v4704 = vadd.f32 %v4625, 1.0
  %v4705 = vadd.f32 %v4627, 1.0
  %v4706 = vadd.f32 %v4629, 1.0
  %v4707 = vadd.f32 %v4631, 1.0
  %v4708 = vadd.f32 %v4633, 1.0
  %v4709 = vadd.f32 %v4635, 1.0
  %v4710 = vadd.f32 %v4637, 1.0
  %v4711 = vadd.f32 %v4639, 1.0
  %v4712 = vadd.f32 %v4641, 1.0
  %v4713 = vadd.f32 %v4643, 1.0
  %v4714 = vadd.f32 %v4645, 1.0
  %v4715 = vadd.f32 %v4647, 1.0
  %v4716 = vadd.f32 %v4649, 1.0
  %v4717 = vadd.f32 %v4651, 1.0
  %v4718 = vadd.f32 %v4653, 1.0
  %v4719 = vadd.f32 %v4655, 1.0
  %v4720 = vrcp.pop %v4656
  %v4721 = vrcp.pop %v4657
  %v4722 = vrcp.pop %v4658
  %v4723 = vrcp.pop %v4659
  %v4724 = vrcp.pop %v4660
  %v4725 = vrcp.pop %v4661
  %v4726 = vrcp.pop %v4662
  %v4727 = vrcp.pop %v4663
  %v4728 = vrcp.pop %v4664
  %v4729 = vrcp.pop %v4665
  %v4730 = vrcp.pop %v4666
  %v4731 = vrcp.pop %v4667
  %v4732 = vrcp.pop %v4668
  %v4733 = vrcp.pop %v4669
  %v4734 = vrcp.pop %v4670
  %v4735 = vrcp.pop %v4671
  %v4736 = vrcp.pop %v4672
  %v4737 = vrcp.pop %v4673
  %v4738 = vrcp.pop %v4674
  %v4739 = vrcp.pop %v4675
  %v4740 = vrcp.pop %v4676
  %v4741 = vrcp.pop %v4677
  %v4742 = vrcp.pop %v4678
  %v4743 = vrcp.pop %v4679
  %v4744 = vrcp.pop %v4680
  %v4745 = vrcp.pop %v4681
  %v4746 = vrcp.pop %v4682
  %v4747 = vrcp.pop %v4683
  %v4748 = vrcp.pop %v4684
  %v4749 = vrcp.pop %v4685
  %v4750 = vrcp.pop %v4686
  %v4751 = vrcp.pop %v4687
  %v4752 = vrcp.pop %v4688
  %v4753 = vrcp.pop %v4689
  %v4754 = vrcp.pop %v4690
  %v4755 = vrcp.pop %v4691
  %v4756 = vrcp.pop %v4692
  %v4757 = vrcp.pop %v4693
  %v4758 = vrcp.pop %v4694
  %v4759 = vrcp.pop %v4695
  %v4760 = vrcp.pop %v4696
  %v4761 = vrcp.pop %v4697
  %v4762 = vrcp.pop %v4698
  %v4763 = vrcp.pop %v4699
  %v4764 = vrcp.pop %v4700
  %v4765 = vrcp.pop %v4701
  %v4766 = vrcp.pop %v4702
  %v4767 = vrcp.pop %v4703
  %v4768 = vrcp.pop %v4704
  %v4769 = vrcp.pop %v4705
  %v4770 = vrcp.pop %v4706
  %v4771 = vrcp.pop %v4707
  %v4772 = vrcp.pop %v4708
  %v4773 = vrcp.pop %v4709
  %v4774 = vrcp.pop %v4710
  %v4775 = vrcp.pop %v4711
  %v4776 = vrcp.pop %v4712
  %v4777 = vrcp.pop %v4713
  %v4778 = vrcp.pop %v4714
  %v4779 = vrcp.pop %v4715
  %v4780 = vrcp.pop %v4716
  %v4781 = vrcp.pop %v4717
  %v4782 = vrcp.pop %v4718
  %v4783 = vrcp.pop %v4719
  %4785 = vset.pattern.permute.xlu0 0
  %4786 = vperm.xlu0 %4785, %v4720
  %v4787 = vpop.permute.xlu0 %4786
  %4790 = vset.pattern.permute.xlu0 0
  %4791 = vperm.xlu0 %4790, %v4721
  %v4792 = vpop.permute.xlu0 %4791
  %4795 = vset.pattern.permute.xlu0 0
  %4796 = vperm.xlu0 %4795, %v4722
  %v4797 = vpop.permute.xlu0 %4796
  %4800 = vset.pattern.permute.xlu0 0
  %4801 = vperm.xlu0 %4800, %v4723
  %v4802 = vpop.permute.xlu0 %4801
  %4805 = vset.pattern.permute.xlu0 0
  %4806 = vperm.xlu0 %4805, %v4724
  %v4807 = vpop.permute.xlu0 %4806
  %4810 = vset.pattern.permute.xlu0 0
  %4811 = vperm.xlu0 %4810, %v4725
  %v4812 = vpop.permute.xlu0 %4811
  %4815 = vset.pattern.permute.xlu0 0
  %4816 = vperm.xlu0 %4815, %v4726
  %v4817 = vpop.permute.xlu0 %4816
  %4820 = vset.pattern.permute.xlu0 0
  %4821 = vperm.xlu0 %4820, %v4727
  %v4822 = vpop.permute.xlu0 %4821
  %4825 = vset.pattern.permute.xlu0 0
  %4826 = vperm.xlu0 %4825, %v4728
  %v4827 = vpop.permute.xlu0 %4826
  %4830 = vset.pattern.permute.xlu0 0
  %4831 = vperm.xlu0 %4830, %v4729
  %v4832 = vpop.permute.xlu0 %4831
  %4835 = vset.pattern.permute.xlu0 0
  %4836 = vperm.xlu0 %4835, %v4730
  %v4837 = vpop.permute.xlu0 %4836
  %4840 = vset.pattern.permute.xlu0 0
  %4841 = vperm.xlu0 %4840, %v4731
  %v4842 = vpop.permute.xlu0 %4841
  %4845 = vset.pattern.permute.xlu0 0
  %4846 = vperm.xlu0 %4845, %v4732
  %v4847 = vpop.permute.xlu0 %4846
  %4850 = vset.pattern.permute.xlu0 0
  %4851 = vperm.xlu0 %4850, %v4733
  %v4852 = vpop.permute.xlu0 %4851
  %4855 = vset.pattern.permute.xlu0 0
  %4856 = vperm.xlu0 %4855, %v4734
  %v4857 = vpop.permute.xlu0 %4856
  %4860 = vset.pattern.permute.xlu0 0
  %4861 = vperm.xlu0 %4860, %v4735
  %v4862 = vpop.permute.xlu0 %4861
  %4865 = vset.pattern.permute.xlu0 0
  %4866 = vperm.xlu0 %4865, %v4736
  %v4867 = vpop.permute.xlu0 %4866
  %4870 = vset.pattern.permute.xlu0 0
  %4871 = vperm.xlu0 %4870, %v4737
  %v4872 = vpop.permute.xlu0 %4871
  %4875 = vset.pattern.permute.xlu0 0
  %4876 = vperm.xlu0 %4875, %v4738
  %v4877 = vpop.permute.xlu0 %4876
  %4880 = vset.pattern.permute.xlu0 0
  %4881 = vperm.xlu0 %4880, %v4739
  %v4882 = vpop.permute.xlu0 %4881
  %4885 = vset.pattern.permute.xlu0 0
  %4886 = vperm.xlu0 %4885, %v4740
  %v4887 = vpop.permute.xlu0 %4886
  %4890 = vset.pattern.permute.xlu0 0
  %4891 = vperm.xlu0 %4890, %v4741
  %v4892 = vpop.permute.xlu0 %4891
  %4895 = vset.pattern.permute.xlu0 0
  %4896 = vperm.xlu0 %4895, %v4742
  %v4897 = vpop.permute.xlu0 %4896
  %4900 = vset.pattern.permute.xlu0 0
  %4901 = vperm.xlu0 %4900, %v4743
  %v4902 = vpop.permute.xlu0 %4901
  %4905 = vset.pattern.permute.xlu0 0
  %4906 = vperm.xlu0 %4905, %v4744
  %v4907 = vpop.permute.xlu0 %4906
  %4910 = vset.pattern.permute.xlu0 0
  %4911 = vperm.xlu0 %4910, %v4745
  %v4912 = vpop.permute.xlu0 %4911
  %4915 = vset.pattern.permute.xlu0 0
  %4916 = vperm.xlu0 %4915, %v4746
  %v4917 = vpop.permute.xlu0 %4916
  %4920 = vset.pattern.permute.xlu0 0
  %4921 = vperm.xlu0 %4920, %v4747
  %v4922 = vpop.permute.xlu0 %4921
  %4925 = vset.pattern.permute.xlu0 0
  %4926 = vperm.xlu0 %4925, %v4748
  %v4927 = vpop.permute.xlu0 %4926
  %4930 = vset.pattern.permute.xlu0 0
  %4931 = vperm.xlu0 %4930, %v4749
  %v4932 = vpop.permute.xlu0 %4931
  %4935 = vset.pattern.permute.xlu0 0
  %4936 = vperm.xlu0 %4935, %v4750
  %v4937 = vpop.permute.xlu0 %4936
  %4940 = vset.pattern.permute.xlu0 0
  %4941 = vperm.xlu0 %4940, %v4751
  %v4942 = vpop.permute.xlu0 %4941
  %4945 = vset.pattern.permute.xlu0 0
  %4946 = vperm.xlu0 %4945, %v4752
  %v4947 = vpop.permute.xlu0 %4946
  %4950 = vset.pattern.permute.xlu0 0
  %4951 = vperm.xlu0 %4950, %v4753
  %v4952 = vpop.permute.xlu0 %4951
  %4955 = vset.pattern.permute.xlu0 0
  %4956 = vperm.xlu0 %4955, %v4754
  %v4957 = vpop.permute.xlu0 %4956
  %4960 = vset.pattern.permute.xlu0 0
  %4961 = vperm.xlu0 %4960, %v4755
  %v4962 = vpop.permute.xlu0 %4961
  %4965 = vset.pattern.permute.xlu0 0
  %4966 = vperm.xlu0 %4965, %v4756
  %v4967 = vpop.permute.xlu0 %4966
  %4970 = vset.pattern.permute.xlu0 0
  %4971 = vperm.xlu0 %4970, %v4757
  %v4972 = vpop.permute.xlu0 %4971
  %4975 = vset.pattern.permute.xlu0 0
  %4976 = vperm.xlu0 %4975, %v4758
  %v4977 = vpop.permute.xlu0 %4976
  %4980 = vset.pattern.permute.xlu0 0
  %4981 = vperm.xlu0 %4980, %v4759
  %v4982 = vpop.permute.xlu0 %4981
  %4985 = vset.pattern.permute.xlu0 0
  %4986 = vperm.xlu0 %4985, %v4760
  %v4987 = vpop.permute.xlu0 %4986
  %4990 = vset.pattern.permute.xlu0 0
  %4991 = vperm.xlu0 %4990, %v4761
  %v4992 = vpop.permute.xlu0 %4991
  %4995 = vset.pattern.permute.xlu0 0
  %4996 = vperm.xlu0 %4995, %v4762
  %v4997 = vpop.permute.xlu0 %4996
  %5000 = vset.pattern.permute.xlu0 0
  %5001 = vperm.xlu0 %5000, %v4763
  %v5002 = vpop.permute.xlu0 %5001
  %5005 = vset.pattern.permute.xlu0 0
  %5006 = vperm.xlu0 %5005, %v4764
  %v5007 = vpop.permute.xlu0 %5006
  %5010 = vset.pattern.permute.xlu0 0
  %5011 = vperm.xlu0 %5010, %v4765
  %v5012 = vpop.permute.xlu0 %5011
  %5015 = vset.pattern.permute.xlu0 0
  %5016 = vperm.xlu0 %5015, %v4766
  %v5017 = vpop.permute.xlu0 %5016
  %5020 = vset.pattern.permute.xlu0 0
  %5021 = vperm.xlu0 %5020, %v4767
  %v5022 = vpop.permute.xlu0 %5021
  %5025 = vset.pattern.permute.xlu0 0
  %5026 = vperm.xlu0 %5025, %v4768
  %v5027 = vpop.permute.xlu0 %5026
  %5030 = vset.pattern.permute.xlu0 0
  %5031 = vperm.xlu0 %5030, %v4769
  %v5032 = vpop.permute.xlu0 %5031
  %5035 = vset.pattern.permute.xlu0 0
  %5036 = vperm.xlu0 %5035, %v4770
  %v5037 = vpop.permute.xlu0 %5036
  %5040 = vset.pattern.permute.xlu0 0
  %5041 = vperm.xlu0 %5040, %v4771
  %v5042 = vpop.permute.xlu0 %5041
  %5045 = vset.pattern.permute.xlu0 0
  %5046 = vperm.xlu0 %5045, %v4772
  %v5047 = vpop.permute.xlu0 %5046
  %5050 = vset.pattern.permute.xlu0 0
  %5051 = vperm.xlu0 %5050, %v4773
  %v5052 = vpop.permute.xlu0 %5051
  %5055 = vset.pattern.permute.xlu0 0
  %5056 = vperm.xlu0 %5055, %v4774
  %v5057 = vpop.permute.xlu0 %5056
  %5060 = vset.pattern.permute.xlu0 0
  %5061 = vperm.xlu0 %5060, %v4775
  %v5062 = vpop.permute.xlu0 %5061
  %5065 = vset.pattern.permute.xlu0 0
  %5066 = vperm.xlu0 %5065, %v4776
  %v5067 = vpop.permute.xlu0 %5066
  %5070 = vset.pattern.permute.xlu0 0
  %5071 = vperm.xlu0 %5070, %v4777
  %v5072 = vpop.permute.xlu0 %5071
  %5075 = vset.pattern.permute.xlu0 0
  %5076 = vperm.xlu0 %5075, %v4778
  %v5077 = vpop.permute.xlu0 %5076
  %5080 = vset.pattern.permute.xlu0 0
  %5081 = vperm.xlu0 %5080, %v4779
  %v5082 = vpop.permute.xlu0 %5081
  %5085 = vset.pattern.permute.xlu0 0
  %5086 = vperm.xlu0 %5085, %v4780
  %v5087 = vpop.permute.xlu0 %5086
  %5090 = vset.pattern.permute.xlu0 0
  %5091 = vperm.xlu0 %5090, %v4781
  %v5092 = vpop.permute.xlu0 %5091
  %5095 = vset.pattern.permute.xlu0 0
  %5096 = vperm.xlu0 %5095, %v4782
  %v5097 = vpop.permute.xlu0 %5096
  %5100 = vset.pattern.permute.xlu0 0
  %5101 = vperm.xlu0 %5100, %v4783
  %v5102 = vpop.permute.xlu0 %5101
  %v5104 = vmul.f32 %v4787, %v628
  %v5105 = vmul.f32 %v4792, %v631
  %v5106 = vmul.f32 %v4797, %v636
  %v5107 = vmul.f32 %v4802, %v639
  %v5108 = vmul.f32 %v4807, %v644
  %v5109 = vmul.f32 %v4812, %v647
  %v5110 = vmul.f32 %v4817, %v652
  %v5111 = vmul.f32 %v4822, %v655
  %v5112 = vmul.f32 %v4827, %v660
  %v5113 = vmul.f32 %v4832, %v663
  %v5114 = vmul.f32 %v4837, %v668
  %v5115 = vmul.f32 %v4842, %v671
  %v5116 = vmul.f32 %v4847, %v676
  %v5117 = vmul.f32 %v4852, %v679
  %v5118 = vmul.f32 %v4857, %v684
  %v5119 = vmul.f32 %v4862, %v687
  %v5120 = vmul.f32 %v4867, %v692
  %v5121 = vmul.f32 %v4872, %v695
  %v5122 = vmul.f32 %v4877, %v700
  %v5123 = vmul.f32 %v4882, %v703
  %v5124 = vmul.f32 %v4887, %v708
  %v5125 = vmul.f32 %v4892, %v711
  %v5126 = vmul.f32 %v4897, %v716
  %v5127 = vmul.f32 %v4902, %v719
  %v5128 = vmul.f32 %v4907, %v724
  %v5129 = vmul.f32 %v4912, %v727
  %v5130 = vmul.f32 %v4917, %v732
  %v5131 = vmul.f32 %v4922, %v735
  %v5132 = vmul.f32 %v4927, %v740
  %v5133 = vmul.f32 %v4932, %v743
  %v5134 = vmul.f32 %v4937, %v748
  %v5135 = vmul.f32 %v4942, %v751
  %v5136 = vmul.f32 %v4947, %v756
  %v5137 = vmul.f32 %v4952, %v759
  %v5138 = vmul.f32 %v4957, %v764
  %v5139 = vmul.f32 %v4962, %v767
  %v5140 = vmul.f32 %v4967, %v772
  %v5141 = vmul.f32 %v4972, %v775
  %v5142 = vmul.f32 %v4977, %v780
  %v5143 = vmul.f32 %v4982, %v783
  %v5144 = vmul.f32 %v4987, %v788
  %v5145 = vmul.f32 %v4992, %v791
  %v5146 = vmul.f32 %v4997, %v796
  %v5147 = vmul.f32 %v5002, %v799
  %v5148 = vmul.f32 %v5007, %v804
  %v5149 = vmul.f32 %v5012, %v807
  %v5150 = vmul.f32 %v5017, %v812
  %v5151 = vmul.f32 %v5022, %v815
  %v5152 = vmul.f32 %v5027, %v820
  %v5153 = vmul.f32 %v5032, %v823
  %v5154 = vmul.f32 %v5037, %v828
  %v5155 = vmul.f32 %v5042, %v831
  %v5156 = vmul.f32 %v5047, %v836
  %v5157 = vmul.f32 %v5052, %v839
  %v5158 = vmul.f32 %v5057, %v844
  %v5159 = vmul.f32 %v5062, %v847
  %v5160 = vmul.f32 %v5067, %v852
  %v5161 = vmul.f32 %v5072, %v855
  %v5162 = vmul.f32 %v5077, %v860
  %v5163 = vmul.f32 %v5082, %v863
  %v5164 = vmul.f32 %v5087, %v868
  %v5165 = vmul.f32 %v5092, %v871
  %v5166 = vmul.f32 %v5097, %v876
  %v5167 = vmul.f32 %v5102, %v879
  %5168 = vset.pattern.permute.xlu0 1
  %5169 = vperm.xlu0 %5168, %v4720
  %v5170 = vpop.permute.xlu0 %5169
  %5172 = vset.pattern.permute.xlu0 1
  %5173 = vperm.xlu0 %5172, %v4721
  %v5174 = vpop.permute.xlu0 %5173
  %5176 = vset.pattern.permute.xlu0 1
  %5177 = vperm.xlu0 %5176, %v4722
  %v5178 = vpop.permute.xlu0 %5177
  %5180 = vset.pattern.permute.xlu0 1
  %5181 = vperm.xlu0 %5180, %v4723
  %v5182 = vpop.permute.xlu0 %5181
  %5184 = vset.pattern.permute.xlu0 1
  %5185 = vperm.xlu0 %5184, %v4724
  %v5186 = vpop.permute.xlu0 %5185
  %5188 = vset.pattern.permute.xlu0 1
  %5189 = vperm.xlu0 %5188, %v4725
  %v5190 = vpop.permute.xlu0 %5189
  %5192 = vset.pattern.permute.xlu0 1
  %5193 = vperm.xlu0 %5192, %v4726
  %v5194 = vpop.permute.xlu0 %5193
  %5196 = vset.pattern.permute.xlu0 1
  %5197 = vperm.xlu0 %5196, %v4727
  %v5198 = vpop.permute.xlu0 %5197
  %5200 = vset.pattern.permute.xlu0 1
  %5201 = vperm.xlu0 %5200, %v4728
  %v5202 = vpop.permute.xlu0 %5201
  %5204 = vset.pattern.permute.xlu0 1
  %5205 = vperm.xlu0 %5204, %v4729
  %v5206 = vpop.permute.xlu0 %5205
  %5208 = vset.pattern.permute.xlu0 1
  %5209 = vperm.xlu0 %5208, %v4730
  %v5210 = vpop.permute.xlu0 %5209
  %5212 = vset.pattern.permute.xlu0 1
  %5213 = vperm.xlu0 %5212, %v4731
  %v5214 = vpop.permute.xlu0 %5213
  %5216 = vset.pattern.permute.xlu0 1
  %5217 = vperm.xlu0 %5216, %v4732
  %v5218 = vpop.permute.xlu0 %5217
  %5220 = vset.pattern.permute.xlu0 1
  %5221 = vperm.xlu0 %5220, %v4733
  %v5222 = vpop.permute.xlu0 %5221
  %5224 = vset.pattern.permute.xlu0 1
  %5225 = vperm.xlu0 %5224, %v4734
  %v5226 = vpop.permute.xlu0 %5225
  %5228 = vset.pattern.permute.xlu0 1
  %5229 = vperm.xlu0 %5228, %v4735
  %v5230 = vpop.permute.xlu0 %5229
  %5232 = vset.pattern.permute.xlu0 1
  %5233 = vperm.xlu0 %5232, %v4736
  %v5234 = vpop.permute.xlu0 %5233
  %5236 = vset.pattern.permute.xlu0 1
  %5237 = vperm.xlu0 %5236, %v4737
  %v5238 = vpop.permute.xlu0 %5237
  %5240 = vset.pattern.permute.xlu0 1
  %5241 = vperm.xlu0 %5240, %v4738
  %v5242 = vpop.permute.xlu0 %5241
  %5244 = vset.pattern.permute.xlu0 1
  %5245 = vperm.xlu0 %5244, %v4739
  %v5246 = vpop.permute.xlu0 %5245
  %5248 = vset.pattern.permute.xlu0 1
  %5249 = vperm.xlu0 %5248, %v4740
  %v5250 = vpop.permute.xlu0 %5249
  %5252 = vset.pattern.permute.xlu0 1
  %5253 = vperm.xlu0 %5252, %v4741
  %v5254 = vpop.permute.xlu0 %5253
  %5256 = vset.pattern.permute.xlu0 1
  %5257 = vperm.xlu0 %5256, %v4742
  %v5258 = vpop.permute.xlu0 %5257
  %5260 = vset.pattern.permute.xlu0 1
  %5261 = vperm.xlu0 %5260, %v4743
  %v5262 = vpop.permute.xlu0 %5261
  %5264 = vset.pattern.permute.xlu0 1
  %5265 = vperm.xlu0 %5264, %v4744
  %v5266 = vpop.permute.xlu0 %5265
  %5268 = vset.pattern.permute.xlu0 1
  %5269 = vperm.xlu0 %5268, %v4745
  %v5270 = vpop.permute.xlu0 %5269
  %5272 = vset.pattern.permute.xlu0 1
  %5273 = vperm.xlu0 %5272, %v4746
  %v5274 = vpop.permute.xlu0 %5273
  %5276 = vset.pattern.permute.xlu0 1
  %5277 = vperm.xlu0 %5276, %v4747
  %v5278 = vpop.permute.xlu0 %5277
  %5280 = vset.pattern.permute.xlu0 1
  %5281 = vperm.xlu0 %5280, %v4748
  %v5282 = vpop.permute.xlu0 %5281
  %5284 = vset.pattern.permute.xlu0 1
  %5285 = vperm.xlu0 %5284, %v4749
  %v5286 = vpop.permute.xlu0 %5285
  %5288 = vset.pattern.permute.xlu0 1
  %5289 = vperm.xlu0 %5288, %v4750
  %v5290 = vpop.permute.xlu0 %5289
  %5292 = vset.pattern.permute.xlu0 1
  %5293 = vperm.xlu0 %5292, %v4751
  %v5294 = vpop.permute.xlu0 %5293
  %5296 = vset.pattern.permute.xlu0 1
  %5297 = vperm.xlu0 %5296, %v4752
  %v5298 = vpop.permute.xlu0 %5297
  %5300 = vset.pattern.permute.xlu0 1
  %5301 = vperm.xlu0 %5300, %v4753
  %v5302 = vpop.permute.xlu0 %5301
  %5304 = vset.pattern.permute.xlu0 1
  %5305 = vperm.xlu0 %5304, %v4754
  %v5306 = vpop.permute.xlu0 %5305
  %5308 = vset.pattern.permute.xlu0 1
  %5309 = vperm.xlu0 %5308, %v4755
  %v5310 = vpop.permute.xlu0 %5309
  %5312 = vset.pattern.permute.xlu0 1
  %5313 = vperm.xlu0 %5312, %v4756
  %v5314 = vpop.permute.xlu0 %5313
  %5316 = vset.pattern.permute.xlu0 1
  %5317 = vperm.xlu0 %5316, %v4757
  %v5318 = vpop.permute.xlu0 %5317
  %5320 = vset.pattern.permute.xlu0 1
  %5321 = vperm.xlu0 %5320, %v4758
  %v5322 = vpop.permute.xlu0 %5321
  %5324 = vset.pattern.permute.xlu0 1
  %5325 = vperm.xlu0 %5324, %v4759
  %v5326 = vpop.permute.xlu0 %5325
  %5328 = vset.pattern.permute.xlu0 1
  %5329 = vperm.xlu0 %5328, %v4760
  %v5330 = vpop.permute.xlu0 %5329
  %5332 = vset.pattern.permute.xlu0 1
  %5333 = vperm.xlu0 %5332, %v4761
  %v5334 = vpop.permute.xlu0 %5333
  %5336 = vset.pattern.permute.xlu0 1
  %5337 = vperm.xlu0 %5336, %v4762
  %v5338 = vpop.permute.xlu0 %5337
  %5340 = vset.pattern.permute.xlu0 1
  %5341 = vperm.xlu0 %5340, %v4763
  %v5342 = vpop.permute.xlu0 %5341
  %5344 = vset.pattern.permute.xlu0 1
  %5345 = vperm.xlu0 %5344, %v4764
  %v5346 = vpop.permute.xlu0 %5345
  %5348 = vset.pattern.permute.xlu0 1
  %5349 = vperm.xlu0 %5348, %v4765
  %v5350 = vpop.permute.xlu0 %5349
  %5352 = vset.pattern.permute.xlu0 1
  %5353 = vperm.xlu0 %5352, %v4766
  %v5354 = vpop.permute.xlu0 %5353
  %5356 = vset.pattern.permute.xlu0 1
  %5357 = vperm.xlu0 %5356, %v4767
  %v5358 = vpop.permute.xlu0 %5357
  %5360 = vset.pattern.permute.xlu0 1
  %5361 = vperm.xlu0 %5360, %v4768
  %v5362 = vpop.permute.xlu0 %5361
  %5364 = vset.pattern.permute.xlu0 1
  %5365 = vperm.xlu0 %5364, %v4769
  %v5366 = vpop.permute.xlu0 %5365
  %5368 = vset.pattern.permute.xlu0 1
  %5369 = vperm.xlu0 %5368, %v4770
  %v5370 = vpop.permute.xlu0 %5369
  %5372 = vset.pattern.permute.xlu0 1
  %5373 = vperm.xlu0 %5372, %v4771
  %v5374 = vpop.permute.xlu0 %5373
  %5376 = vset.pattern.permute.xlu0 1
  %5377 = vperm.xlu0 %5376, %v4772
  %v5378 = vpop.permute.xlu0 %5377
  %5380 = vset.pattern.permute.xlu0 1
  %5381 = vperm.xlu0 %5380, %v4773
  %v5382 = vpop.permute.xlu0 %5381
  %5384 = vset.pattern.permute.xlu0 1
  %5385 = vperm.xlu0 %5384, %v4774
  %v5386 = vpop.permute.xlu0 %5385
  %5388 = vset.pattern.permute.xlu0 1
  %5389 = vperm.xlu0 %5388, %v4775
  %v5390 = vpop.permute.xlu0 %5389
  %5392 = vset.pattern.permute.xlu0 1
  %5393 = vperm.xlu0 %5392, %v4776
  %v5394 = vpop.permute.xlu0 %5393
  %5396 = vset.pattern.permute.xlu0 1
  %5397 = vperm.xlu0 %5396, %v4777
  %v5398 = vpop.permute.xlu0 %5397
  %5400 = vset.pattern.permute.xlu0 1
  %5401 = vperm.xlu0 %5400, %v4778
  %v5402 = vpop.permute.xlu0 %5401
  %5404 = vset.pattern.permute.xlu0 1
  %5405 = vperm.xlu0 %5404, %v4779
  %v5406 = vpop.permute.xlu0 %5405
  %5408 = vset.pattern.permute.xlu0 1
  %5409 = vperm.xlu0 %5408, %v4780
  %v5410 = vpop.permute.xlu0 %5409
  %5412 = vset.pattern.permute.xlu0 1
  %5413 = vperm.xlu0 %5412, %v4781
  %v5414 = vpop.permute.xlu0 %5413
  %5416 = vset.pattern.permute.xlu0 1
  %5417 = vperm.xlu0 %5416, %v4782
  %v5418 = vpop.permute.xlu0 %5417
  %5420 = vset.pattern.permute.xlu0 1
  %5421 = vperm.xlu0 %5420, %v4783
  %v5422 = vpop.permute.xlu0 %5421
  %v5424 = vmul.f32 %v5170, %v1205
  %v5425 = vmul.f32 %v5174, %v1208
  %v5426 = vmul.f32 %v5178, %v1213
  %v5427 = vmul.f32 %v5182, %v1216
  %v5428 = vmul.f32 %v5186, %v1221
  %v5429 = vmul.f32 %v5190, %v1224
  %v5430 = vmul.f32 %v5194, %v1229
  %v5431 = vmul.f32 %v5198, %v1232
  %v5432 = vmul.f32 %v5202, %v1237
  %v5433 = vmul.f32 %v5206, %v1240
  %v5434 = vmul.f32 %v5210, %v1245
  %v5435 = vmul.f32 %v5214, %v1248
  %v5436 = vmul.f32 %v5218, %v1253
  %v5437 = vmul.f32 %v5222, %v1256
  %v5438 = vmul.f32 %v5226, %v1261
  %v5439 = vmul.f32 %v5230, %v1264
  %v5440 = vmul.f32 %v5234, %v1269
  %v5441 = vmul.f32 %v5238, %v1272
  %v5442 = vmul.f32 %v5242, %v1277
  %v5443 = vmul.f32 %v5246, %v1280
  %v5444 = vmul.f32 %v5250, %v1285
  %v5445 = vmul.f32 %v5254, %v1288
  %v5446 = vmul.f32 %v5258, %v1293
  %v5447 = vmul.f32 %v5262, %v1296
  %v5448 = vmul.f32 %v5266, %v1301
  %v5449 = vmul.f32 %v5270, %v1304
  %v5450 = vmul.f32 %v5274, %v1309
  %v5451 = vmul.f32 %v5278, %v1312
  %v5452 = vmul.f32 %v5282, %v1317
  %v5453 = vmul.f32 %v5286, %v1320
  %v5454 = vmul.f32 %v5290, %v1325
  %v5455 = vmul.f32 %v5294, %v1328
  %v5456 = vmul.f32 %v5298, %v1333
  %v5457 = vmul.f32 %v5302, %v1336
  %v5458 = vmul.f32 %v5306, %v1341
  %v5459 = vmul.f32 %v5310, %v1344
  %v5460 = vmul.f32 %v5314, %v1349
  %v5461 = vmul.f32 %v5318, %v1352
  %v5462 = vmul.f32 %v5322, %v1357
  %v5463 = vmul.f32 %v5326, %v1360
  %v5464 = vmul.f32 %v5330, %v1365
  %v5465 = vmul.f32 %v5334, %v1368
  %v5466 = vmul.f32 %v5338, %v1373
  %v5467 = vmul.f32 %v5342, %v1376
  %v5468 = vmul.f32 %v5346, %v1381
  %v5469 = vmul.f32 %v5350, %v1384
  %v5470 = vmul.f32 %v5354, %v1389
  %v5471 = vmul.f32 %v5358, %v1392
  %v5472 = vmul.f32 %v5362, %v1397
  %v5473 = vmul.f32 %v5366, %v1400
  %v5474 = vmul.f32 %v5370, %v1405
  %v5475 = vmul.f32 %v5374, %v1408
  %v5476 = vmul.f32 %v5378, %v1413
  %v5477 = vmul.f32 %v5382, %v1416
  %v5478 = vmul.f32 %v5386, %v1421
  %v5479 = vmul.f32 %v5390, %v1424
  %v5480 = vmul.f32 %v5394, %v1429
  %v5481 = vmul.f32 %v5398, %v1432
  %v5482 = vmul.f32 %v5402, %v1437
  %v5483 = vmul.f32 %v5406, %v1440
  %v5484 = vmul.f32 %v5410, %v1445
  %v5485 = vmul.f32 %v5414, %v1448
  %v5486 = vmul.f32 %v5418, %v1453
  %v5487 = vmul.f32 %v5422, %v1456
  %v5488 = vadd.f32 %v5104, %v5424
  %v5489 = vadd.f32 %v5105, %v5425
  %v5490 = vadd.f32 %v5106, %v5426
  %v5491 = vadd.f32 %v5107, %v5427
  %v5492 = vadd.f32 %v5108, %v5428
  %v5493 = vadd.f32 %v5109, %v5429
  %v5494 = vadd.f32 %v5110, %v5430
  %v5495 = vadd.f32 %v5111, %v5431
  %v5496 = vadd.f32 %v5112, %v5432
  %v5497 = vadd.f32 %v5113, %v5433
  %v5498 = vadd.f32 %v5114, %v5434
  %v5499 = vadd.f32 %v5115, %v5435
  %v5500 = vadd.f32 %v5116, %v5436
  %v5501 = vadd.f32 %v5117, %v5437
  %v5502 = vadd.f32 %v5118, %v5438
  %v5503 = vadd.f32 %v5119, %v5439
  %v5504 = vadd.f32 %v5120, %v5440
  %v5505 = vadd.f32 %v5121, %v5441
  %v5506 = vadd.f32 %v5122, %v5442
  %v5507 = vadd.f32 %v5123, %v5443
  %v5508 = vadd.f32 %v5124, %v5444
  %v5509 = vadd.f32 %v5125, %v5445
  %v5510 = vadd.f32 %v5126, %v5446
  %v5511 = vadd.f32 %v5127, %v5447
  %v5512 = vadd.f32 %v5128, %v5448
  %v5513 = vadd.f32 %v5129, %v5449
  %v5514 = vadd.f32 %v5130, %v5450
  %v5515 = vadd.f32 %v5131, %v5451
  %v5516 = vadd.f32 %v5132, %v5452
  %v5517 = vadd.f32 %v5133, %v5453
  %v5518 = vadd.f32 %v5134, %v5454
  %v5519 = vadd.f32 %v5135, %v5455
  %v5520 = vadd.f32 %v5136, %v5456
  %v5521 = vadd.f32 %v5137, %v5457
  %v5522 = vadd.f32 %v5138, %v5458
  %v5523 = vadd.f32 %v5139, %v5459
  %v5524 = vadd.f32 %v5140, %v5460
  %v5525 = vadd.f32 %v5141, %v5461
  %v5526 = vadd.f32 %v5142, %v5462
  %v5527 = vadd.f32 %v5143, %v5463
  %v5528 = vadd.f32 %v5144, %v5464
  %v5529 = vadd.f32 %v5145, %v5465
  %v5530 = vadd.f32 %v5146, %v5466
  %v5531 = vadd.f32 %v5147, %v5467
  %v5532 = vadd.f32 %v5148, %v5468
  %v5533 = vadd.f32 %v5149, %v5469
  %v5534 = vadd.f32 %v5150, %v5470
  %v5535 = vadd.f32 %v5151, %v5471
  %v5536 = vadd.f32 %v5152, %v5472
  %v5537 = vadd.f32 %v5153, %v5473
  %v5538 = vadd.f32 %v5154, %v5474
  %v5539 = vadd.f32 %v5155, %v5475
  %v5540 = vadd.f32 %v5156, %v5476
  %v5541 = vadd.f32 %v5157, %v5477
  %v5542 = vadd.f32 %v5158, %v5478
  %v5543 = vadd.f32 %v5159, %v5479
  %v5544 = vadd.f32 %v5160, %v5480
  %v5545 = vadd.f32 %v5161, %v5481
  %v5546 = vadd.f32 %v5162, %v5482
  %v5547 = vadd.f32 %v5163, %v5483
  %v5548 = vadd.f32 %v5164, %v5484
  %v5549 = vadd.f32 %v5165, %v5485
  %v5550 = vadd.f32 %v5166, %v5486
  %v5551 = vadd.f32 %v5167, %v5487
  %5552 = vset.pattern.permute.xlu0 2
  %5553 = vperm.xlu0 %5552, %v4720
  %v5554 = vpop.permute.xlu0 %5553
  %5556 = vset.pattern.permute.xlu0 2
  %5557 = vperm.xlu0 %5556, %v4721
  %v5558 = vpop.permute.xlu0 %5557
  %5560 = vset.pattern.permute.xlu0 2
  %5561 = vperm.xlu0 %5560, %v4722
  %v5562 = vpop.permute.xlu0 %5561
  %5564 = vset.pattern.permute.xlu0 2
  %5565 = vperm.xlu0 %5564, %v4723
  %v5566 = vpop.permute.xlu0 %5565
  %5568 = vset.pattern.permute.xlu0 2
  %5569 = vperm.xlu0 %5568, %v4724
  %v5570 = vpop.permute.xlu0 %5569
  %5572 = vset.pattern.permute.xlu0 2
  %5573 = vperm.xlu0 %5572, %v4725
  %v5574 = vpop.permute.xlu0 %5573
  %5576 = vset.pattern.permute.xlu0 2
  %5577 = vperm.xlu0 %5576, %v4726
  %v5578 = vpop.permute.xlu0 %5577
  %5580 = vset.pattern.permute.xlu0 2
  %5581 = vperm.xlu0 %5580, %v4727
  %v5582 = vpop.permute.xlu0 %5581
  %5584 = vset.pattern.permute.xlu0 2
  %5585 = vperm.xlu0 %5584, %v4728
  %v5586 = vpop.permute.xlu0 %5585
  %5588 = vset.pattern.permute.xlu0 2
  %5589 = vperm.xlu0 %5588, %v4729
  %v5590 = vpop.permute.xlu0 %5589
  %5592 = vset.pattern.permute.xlu0 2
  %5593 = vperm.xlu0 %5592, %v4730
  %v5594 = vpop.permute.xlu0 %5593
  %5596 = vset.pattern.permute.xlu0 2
  %5597 = vperm.xlu0 %5596, %v4731
  %v5598 = vpop.permute.xlu0 %5597
  %5600 = vset.pattern.permute.xlu0 2
  %5601 = vperm.xlu0 %5600, %v4732
  %v5602 = vpop.permute.xlu0 %5601
  %5604 = vset.pattern.permute.xlu0 2
  %5605 = vperm.xlu0 %5604, %v4733
  %v5606 = vpop.permute.xlu0 %5605
  %5608 = vset.pattern.permute.xlu0 2
  %5609 = vperm.xlu0 %5608, %v4734
  %v5610 = vpop.permute.xlu0 %5609
  %5612 = vset.pattern.permute.xlu0 2
  %5613 = vperm.xlu0 %5612, %v4735
  %v5614 = vpop.permute.xlu0 %5613
  %5616 = vset.pattern.permute.xlu0 2
  %5617 = vperm.xlu0 %5616, %v4736
  %v5618 = vpop.permute.xlu0 %5617
  %5620 = vset.pattern.permute.xlu0 2
  %5621 = vperm.xlu0 %5620, %v4737
  %v5622 = vpop.permute.xlu0 %5621
  %5624 = vset.pattern.permute.xlu0 2
  %5625 = vperm.xlu0 %5624, %v4738
  %v5626 = vpop.permute.xlu0 %5625
  %5628 = vset.pattern.permute.xlu0 2
  %5629 = vperm.xlu0 %5628, %v4739
  %v5630 = vpop.permute.xlu0 %5629
  %5632 = vset.pattern.permute.xlu0 2
  %5633 = vperm.xlu0 %5632, %v4740
  %v5634 = vpop.permute.xlu0 %5633
  %5636 = vset.pattern.permute.xlu0 2
  %5637 = vperm.xlu0 %5636, %v4741
  %v5638 = vpop.permute.xlu0 %5637
  %5640 = vset.pattern.permute.xlu0 2
  %5641 = vperm.xlu0 %5640, %v4742
  %v5642 = vpop.permute.xlu0 %5641
  %5644 = vset.pattern.permute.xlu0 2
  %5645 = vperm.xlu0 %5644, %v4743
  %v5646 = vpop.permute.xlu0 %5645
  %5648 = vset.pattern.permute.xlu0 2
  %5649 = vperm.xlu0 %5648, %v4744
  %v5650 = vpop.permute.xlu0 %5649
  %5652 = vset.pattern.permute.xlu0 2
  %5653 = vperm.xlu0 %5652, %v4745
  %v5654 = vpop.permute.xlu0 %5653
  %5656 = vset.pattern.permute.xlu0 2
  %5657 = vperm.xlu0 %5656, %v4746
  %v5658 = vpop.permute.xlu0 %5657
  %5660 = vset.pattern.permute.xlu0 2
  %5661 = vperm.xlu0 %5660, %v4747
  %v5662 = vpop.permute.xlu0 %5661
  %5664 = vset.pattern.permute.xlu0 2
  %5665 = vperm.xlu0 %5664, %v4748
  %v5666 = vpop.permute.xlu0 %5665
  %5668 = vset.pattern.permute.xlu0 2
  %5669 = vperm.xlu0 %5668, %v4749
  %v5670 = vpop.permute.xlu0 %5669
  %5672 = vset.pattern.permute.xlu0 2
  %5673 = vperm.xlu0 %5672, %v4750
  %v5674 = vpop.permute.xlu0 %5673
  %5676 = vset.pattern.permute.xlu0 2
  %5677 = vperm.xlu0 %5676, %v4751
  %v5678 = vpop.permute.xlu0 %5677
  %5680 = vset.pattern.permute.xlu0 2
  %5681 = vperm.xlu0 %5680, %v4752
  %v5682 = vpop.permute.xlu0 %5681
  %5684 = vset.pattern.permute.xlu0 2
  %5685 = vperm.xlu0 %5684, %v4753
  %v5686 = vpop.permute.xlu0 %5685
  %5688 = vset.pattern.permute.xlu0 2
  %5689 = vperm.xlu0 %5688, %v4754
  %v5690 = vpop.permute.xlu0 %5689
  %5692 = vset.pattern.permute.xlu0 2
  %5693 = vperm.xlu0 %5692, %v4755
  %v5694 = vpop.permute.xlu0 %5693
  %5696 = vset.pattern.permute.xlu0 2
  %5697 = vperm.xlu0 %5696, %v4756
  %v5698 = vpop.permute.xlu0 %5697
  %5700 = vset.pattern.permute.xlu0 2
  %5701 = vperm.xlu0 %5700, %v4757
  %v5702 = vpop.permute.xlu0 %5701
  %5704 = vset.pattern.permute.xlu0 2
  %5705 = vperm.xlu0 %5704, %v4758
  %v5706 = vpop.permute.xlu0 %5705
  %5708 = vset.pattern.permute.xlu0 2
  %5709 = vperm.xlu0 %5708, %v4759
  %v5710 = vpop.permute.xlu0 %5709
  %5712 = vset.pattern.permute.xlu0 2
  %5713 = vperm.xlu0 %5712, %v4760
  %v5714 = vpop.permute.xlu0 %5713
  %5716 = vset.pattern.permute.xlu0 2
  %5717 = vperm.xlu0 %5716, %v4761
  %v5718 = vpop.permute.xlu0 %5717
  %5720 = vset.pattern.permute.xlu0 2
  %5721 = vperm.xlu0 %5720, %v4762
  %v5722 = vpop.permute.xlu0 %5721
  %5724 = vset.pattern.permute.xlu0 2
  %5725 = vperm.xlu0 %5724, %v4763
  %v5726 = vpop.permute.xlu0 %5725
  %5728 = vset.pattern.permute.xlu0 2
  %5729 = vperm.xlu0 %5728, %v4764
  %v5730 = vpop.permute.xlu0 %5729
  %5732 = vset.pattern.permute.xlu0 2
  %5733 = vperm.xlu0 %5732, %v4765
  %v5734 = vpop.permute.xlu0 %5733
  %5736 = vset.pattern.permute.xlu0 2
  %5737 = vperm.xlu0 %5736, %v4766
  %v5738 = vpop.permute.xlu0 %5737
  %5740 = vset.pattern.permute.xlu0 2
  %5741 = vperm.xlu0 %5740, %v4767
  %v5742 = vpop.permute.xlu0 %5741
  %5744 = vset.pattern.permute.xlu0 2
  %5745 = vperm.xlu0 %5744, %v4768
  %v5746 = vpop.permute.xlu0 %5745
  %5748 = vset.pattern.permute.xlu0 2
  %5749 = vperm.xlu0 %5748, %v4769
  %v5750 = vpop.permute.xlu0 %5749
  %5752 = vset.pattern.permute.xlu0 2
  %5753 = vperm.xlu0 %5752, %v4770
  %v5754 = vpop.permute.xlu0 %5753
  %5756 = vset.pattern.permute.xlu0 2
  %5757 = vperm.xlu0 %5756, %v4771
  %v5758 = vpop.permute.xlu0 %5757
  %5760 = vset.pattern.permute.xlu0 2
  %5761 = vperm.xlu0 %5760, %v4772
  %v5762 = vpop.permute.xlu0 %5761
  %5764 = vset.pattern.permute.xlu0 2
  %5765 = vperm.xlu0 %5764, %v4773
  %v5766 = vpop.permute.xlu0 %5765
  %5768 = vset.pattern.permute.xlu0 2
  %5769 = vperm.xlu0 %5768, %v4774
  %v5770 = vpop.permute.xlu0 %5769
  %5772 = vset.pattern.permute.xlu0 2
  %5773 = vperm.xlu0 %5772, %v4775
  %v5774 = vpop.permute.xlu0 %5773
  %5776 = vset.pattern.permute.xlu0 2
  %5777 = vperm.xlu0 %5776, %v4776
  %v5778 = vpop.permute.xlu0 %5777
  %5780 = vset.pattern.permute.xlu0 2
  %5781 = vperm.xlu0 %5780, %v4777
  %v5782 = vpop.permute.xlu0 %5781
  %5784 = vset.pattern.permute.xlu0 2
  %5785 = vperm.xlu0 %5784, %v4778
  %v5786 = vpop.permute.xlu0 %5785
  %5788 = vset.pattern.permute.xlu0 2
  %5789 = vperm.xlu0 %5788, %v4779
  %v5790 = vpop.permute.xlu0 %5789
  %5792 = vset.pattern.permute.xlu0 2
  %5793 = vperm.xlu0 %5792, %v4780
  %v5794 = vpop.permute.xlu0 %5793
  %5796 = vset.pattern.permute.xlu0 2
  %5797 = vperm.xlu0 %5796, %v4781
  %v5798 = vpop.permute.xlu0 %5797
  %5800 = vset.pattern.permute.xlu0 2
  %5801 = vperm.xlu0 %5800, %v4782
  %v5802 = vpop.permute.xlu0 %5801
  %5804 = vset.pattern.permute.xlu0 2
  %5805 = vperm.xlu0 %5804, %v4783
  %v5806 = vpop.permute.xlu0 %5805
  %v5808 = vmul.f32 %v5554, %v1782
  %v5809 = vmul.f32 %v5558, %v1785
  %v5810 = vmul.f32 %v5562, %v1790
  %v5811 = vmul.f32 %v5566, %v1793
  %v5812 = vmul.f32 %v5570, %v1798
  %v5813 = vmul.f32 %v5574, %v1801
  %v5814 = vmul.f32 %v5578, %v1806
  %v5815 = vmul.f32 %v5582, %v1809
  %v5816 = vmul.f32 %v5586, %v1814
  %v5817 = vmul.f32 %v5590, %v1817
  %v5818 = vmul.f32 %v5594, %v1822
  %v5819 = vmul.f32 %v5598, %v1825
  %v5820 = vmul.f32 %v5602, %v1830
  %v5821 = vmul.f32 %v5606, %v1833
  %v5822 = vmul.f32 %v5610, %v1838
  %v5823 = vmul.f32 %v5614, %v1841
  %v5824 = vmul.f32 %v5618, %v1846
  %v5825 = vmul.f32 %v5622, %v1849
  %v5826 = vmul.f32 %v5626, %v1854
  %v5827 = vmul.f32 %v5630, %v1857
  %v5828 = vmul.f32 %v5634, %v1862
  %v5829 = vmul.f32 %v5638, %v1865
  %v5830 = vmul.f32 %v5642, %v1870
  %v5831 = vmul.f32 %v5646, %v1873
  %v5832 = vmul.f32 %v5650, %v1878
  %v5833 = vmul.f32 %v5654, %v1881
  %v5834 = vmul.f32 %v5658, %v1886
  %v5835 = vmul.f32 %v5662, %v1889
  %v5836 = vmul.f32 %v5666, %v1894
  %v5837 = vmul.f32 %v5670, %v1897
  %v5838 = vmul.f32 %v5674, %v1902
  %v5839 = vmul.f32 %v5678, %v1905
  %v5840 = vmul.f32 %v5682, %v1910
  %v5841 = vmul.f32 %v5686, %v1913
  %v5842 = vmul.f32 %v5690, %v1918
  %v5843 = vmul.f32 %v5694, %v1921
  %v5844 = vmul.f32 %v5698, %v1926
  %v5845 = vmul.f32 %v5702, %v1929
  %v5846 = vmul.f32 %v5706, %v1934
  %v5847 = vmul.f32 %v5710, %v1937
  %v5848 = vmul.f32 %v5714, %v1942
  %v5849 = vmul.f32 %v5718, %v1945
  %v5850 = vmul.f32 %v5722, %v1950
  %v5851 = vmul.f32 %v5726, %v1953
  %v5852 = vmul.f32 %v5730, %v1958
  %v5853 = vmul.f32 %v5734, %v1961
  %v5854 = vmul.f32 %v5738, %v1966
  %v5855 = vmul.f32 %v5742, %v1969
  %v5856 = vmul.f32 %v5746, %v1974
  %v5857 = vmul.f32 %v5750, %v1977
  %v5858 = vmul.f32 %v5754, %v1982
  %v5859 = vmul.f32 %v5758, %v1985
  %v5860 = vmul.f32 %v5762, %v1990
  %v5861 = vmul.f32 %v5766, %v1993
  %v5862 = vmul.f32 %v5770, %v1998
  %v5863 = vmul.f32 %v5774, %v2001
  %v5864 = vmul.f32 %v5778, %v2006
  %v5865 = vmul.f32 %v5782, %v2009
  %v5866 = vmul.f32 %v5786, %v2014
  %v5867 = vmul.f32 %v5790, %v2017
  %v5868 = vmul.f32 %v5794, %v2022
  %v5869 = vmul.f32 %v5798, %v2025
  %v5870 = vmul.f32 %v5802, %v2030
  %v5871 = vmul.f32 %v5806, %v2033
  %v5872 = vadd.f32 %v5488, %v5808
  %v5873 = vadd.f32 %v5489, %v5809
  %v5874 = vadd.f32 %v5490, %v5810
  %v5875 = vadd.f32 %v5491, %v5811
  %v5876 = vadd.f32 %v5492, %v5812
  %v5877 = vadd.f32 %v5493, %v5813
  %v5878 = vadd.f32 %v5494, %v5814
  %v5879 = vadd.f32 %v5495, %v5815
  %v5880 = vadd.f32 %v5496, %v5816
  %v5881 = vadd.f32 %v5497, %v5817
  %v5882 = vadd.f32 %v5498, %v5818
  %v5883 = vadd.f32 %v5499, %v5819
  %v5884 = vadd.f32 %v5500, %v5820
  %v5885 = vadd.f32 %v5501, %v5821
  %v5886 = vadd.f32 %v5502, %v5822
  %v5887 = vadd.f32 %v5503, %v5823
  %v5888 = vadd.f32 %v5504, %v5824
  %v5889 = vadd.f32 %v5505, %v5825
  %v5890 = vadd.f32 %v5506, %v5826
  %v5891 = vadd.f32 %v5507, %v5827
  %v5892 = vadd.f32 %v5508, %v5828
  %v5893 = vadd.f32 %v5509, %v5829
  %v5894 = vadd.f32 %v5510, %v5830
  %v5895 = vadd.f32 %v5511, %v5831
  %v5896 = vadd.f32 %v5512, %v5832
  %v5897 = vadd.f32 %v5513, %v5833
  %v5898 = vadd.f32 %v5514, %v5834
  %v5899 = vadd.f32 %v5515, %v5835
  %v5900 = vadd.f32 %v5516, %v5836
  %v5901 = vadd.f32 %v5517, %v5837
  %v5902 = vadd.f32 %v5518, %v5838
  %v5903 = vadd.f32 %v5519, %v5839
  %v5904 = vadd.f32 %v5520, %v5840
  %v5905 = vadd.f32 %v5521, %v5841
  %v5906 = vadd.f32 %v5522, %v5842
  %v5907 = vadd.f32 %v5523, %v5843
  %v5908 = vadd.f32 %v5524, %v5844
  %v5909 = vadd.f32 %v5525, %v5845
  %v5910 = vadd.f32 %v5526, %v5846
  %v5911 = vadd.f32 %v5527, %v5847
  %v5912 = vadd.f32 %v5528, %v5848
  %v5913 = vadd.f32 %v5529, %v5849
  %v5914 = vadd.f32 %v5530, %v5850
  %v5915 = vadd.f32 %v5531, %v5851
  %v5916 = vadd.f32 %v5532, %v5852
  %v5917 = vadd.f32 %v5533, %v5853
  %v5918 = vadd.f32 %v5534, %v5854
  %v5919 = vadd.f32 %v5535, %v5855
  %v5920 = vadd.f32 %v5536, %v5856
  %v5921 = vadd.f32 %v5537, %v5857
  %v5922 = vadd.f32 %v5538, %v5858
  %v5923 = vadd.f32 %v5539, %v5859
  %v5924 = vadd.f32 %v5540, %v5860
  %v5925 = vadd.f32 %v5541, %v5861
  %v5926 = vadd.f32 %v5542, %v5862
  %v5927 = vadd.f32 %v5543, %v5863
  %v5928 = vadd.f32 %v5544, %v5864
  %v5929 = vadd.f32 %v5545, %v5865
  %v5930 = vadd.f32 %v5546, %v5866
  %v5931 = vadd.f32 %v5547, %v5867
  %v5932 = vadd.f32 %v5548, %v5868
  %v5933 = vadd.f32 %v5549, %v5869
  %v5934 = vadd.f32 %v5550, %v5870
  %v5935 = vadd.f32 %v5551, %v5871
  %v5936 = vadd.f32 %v5872, %v2333
  %v5937 = vadd.f32 %v5873, %v2336
  %v5938 = vadd.f32 %v5874, %v2341
  %v5939 = vadd.f32 %v5875, %v2344
  %v5940 = vadd.f32 %v5876, %v2349
  %v5941 = vadd.f32 %v5877, %v2352
  %v5942 = vadd.f32 %v5878, %v2357
  %v5943 = vadd.f32 %v5879, %v2360
  %v5944 = vadd.f32 %v5880, %v2365
  %v5945 = vadd.f32 %v5881, %v2368
  %v5946 = vadd.f32 %v5882, %v2373
  %v5947 = vadd.f32 %v5883, %v2376
  %v5948 = vadd.f32 %v5884, %v2381
  %v5949 = vadd.f32 %v5885, %v2384
  %v5950 = vadd.f32 %v5886, %v2389
  %v5951 = vadd.f32 %v5887, %v2392
  %v5952 = vadd.f32 %v5888, %v2397
  %v5953 = vadd.f32 %v5889, %v2400
  %v5954 = vadd.f32 %v5890, %v2405
  %v5955 = vadd.f32 %v5891, %v2408
  %v5956 = vadd.f32 %v5892, %v2413
  %v5957 = vadd.f32 %v5893, %v2416
  %v5958 = vadd.f32 %v5894, %v2421
  %v5959 = vadd.f32 %v5895, %v2424
  %v5960 = vadd.f32 %v5896, %v2429
  %v5961 = vadd.f32 %v5897, %v2432
  %v5962 = vadd.f32 %v5898, %v2437
  %v5963 = vadd.f32 %v5899, %v2440
  %v5964 = vadd.f32 %v5900, %v2445
  %v5965 = vadd.f32 %v5901, %v2448
  %v5966 = vadd.f32 %v5902, %v2453
  %v5967 = vadd.f32 %v5903, %v2456
  %v5968 = vadd.f32 %v5904, %v2461
  %v5969 = vadd.f32 %v5905, %v2464
  %v5970 = vadd.f32 %v5906, %v2469
  %v5971 = vadd.f32 %v5907, %v2472
  %v5972 = vadd.f32 %v5908, %v2477
  %v5973 = vadd.f32 %v5909, %v2480
  %v5974 = vadd.f32 %v5910, %v2485
  %v5975 = vadd.f32 %v5911, %v2488
  %v5976 = vadd.f32 %v5912, %v2493
  %v5977 = vadd.f32 %v5913, %v2496
  %v5978 = vadd.f32 %v5914, %v2501
  %v5979 = vadd.f32 %v5915, %v2504
  %v5980 = vadd.f32 %v5916, %v2509
  %v5981 = vadd.f32 %v5917, %v2512
  %v5982 = vadd.f32 %v5918, %v2517
  %v5983 = vadd.f32 %v5919, %v2520
  %v5984 = vadd.f32 %v5920, %v2525
  %v5985 = vadd.f32 %v5921, %v2528
  %v5986 = vadd.f32 %v5922, %v2533
  %v5987 = vadd.f32 %v5923, %v2536
  %v5988 = vadd.f32 %v5924, %v2541
  %v5989 = vadd.f32 %v5925, %v2544
  %v5990 = vadd.f32 %v5926, %v2549
  %v5991 = vadd.f32 %v5927, %v2552
  %v5992 = vadd.f32 %v5928, %v2557
  %v5993 = vadd.f32 %v5929, %v2560
  %v5994 = vadd.f32 %v5930, %v2565
  %v5995 = vadd.f32 %v5931, %v2568
  %v5996 = vadd.f32 %v5932, %v2573
  %v5997 = vadd.f32 %v5933, %v2576
  %v5998 = vadd.f32 %v5934, %v2581
  %v5999 = vadd.f32 %v5935, %v2584
  %v6000 = vmax.f32 %v5936, 0.0
  %v6001 = vmax.f32 %v5937, 0.0
  %v6002 = vmax.f32 %v5938, 0.0
  %v6003 = vmax.f32 %v5939, 0.0
  %v6004 = vmax.f32 %v5940, 0.0
  %v6005 = vmax.f32 %v5941, 0.0
  %v6006 = vmax.f32 %v5942, 0.0
  %v6007 = vmax.f32 %v5943, 0.0
  %v6008 = vmax.f32 %v5944, 0.0
  %v6009 = vmax.f32 %v5945, 0.0
  %v6010 = vmax.f32 %v5946, 0.0
  %v6011 = vmax.f32 %v5947, 0.0
  %v6012 = vmax.f32 %v5948, 0.0
  %v6013 = vmax.f32 %v5949, 0.0
  %v6014 = vmax.f32 %v5950, 0.0
  %v6015 = vmax.f32 %v5951, 0.0
  %v6016 = vmax.f32 %v5952, 0.0
  %v6017 = vmax.f32 %v5953, 0.0
  %v6018 = vmax.f32 %v5954, 0.0
  %v6019 = vmax.f32 %v5955, 0.0
  %v6020 = vmax.f32 %v5956, 0.0
  %v6021 = vmax.f32 %v5957, 0.0
  %v6022 = vmax.f32 %v5958, 0.0
  %v6023 = vmax.f32 %v5959, 0.0
  %v6024 = vmax.f32 %v5960, 0.0
  %v6025 = vmax.f32 %v5961, 0.0
  %v6026 = vmax.f32 %v5962, 0.0
  %v6027 = vmax.f32 %v5963, 0.0
  %v6028 = vmax.f32 %v5964, 0.0
  %v6029 = vmax.f32 %v5965, 0.0
  %v6030 = vmax.f32 %v5966, 0.0
  %v6031 = vmax.f32 %v5967, 0.0
  %v6032 = vmax.f32 %v5968, 0.0
  %v6033 = vmax.f32 %v5969, 0.0
  %v6034 = vmax.f32 %v5970, 0.0
  %v6035 = vmax.f32 %v5971, 0.0
  %v6036 = vmax.f32 %v5972, 0.0
  %v6037 = vmax.f32 %v5973, 0.0
  %v6038 = vmax.f32 %v5974, 0.0
  %v6039 = vmax.f32 %v5975, 0.0
  %v6040 = vmax.f32 %v5976, 0.0
  %v6041 = vmax.f32 %v5977, 0.0
  %v6042 = vmax.f32 %v5978, 0.0
  %v6043 = vmax.f32 %v5979, 0.0
  %v6044 = vmax.f32 %v5980, 0.0
  %v6045 = vmax.f32 %v5981, 0.0
  %v6046 = vmax.f32 %v5982, 0.0
  %v6047 = vmax.f32 %v5983, 0.0
  %v6048 = vmax.f32 %v5984, 0.0
  %v6049 = vmax.f32 %v5985, 0.0
  %v6050 = vmax.f32 %v5986, 0.0
  %v6051 = vmax.f32 %v5987, 0.0
  %v6052 = vmax.f32 %v5988, 0.0
  %v6053 = vmax.f32 %v5989, 0.0
  %v6054 = vmax.f32 %v5990, 0.0
  %v6055 = vmax.f32 %v5991, 0.0
  %v6056 = vmax.f32 %v5992, 0.0
  %v6057 = vmax.f32 %v5993, 0.0
  %v6058 = vmax.f32 %v5994, 0.0
  %v6059 = vmax.f32 %v5995, 0.0
  %v6060 = vmax.f32 %v5996, 0.0
  %v6061 = vmax.f32 %v5997, 0.0
  %v6062 = vmax.f32 %v5998, 0.0
  %v6063 = vmax.f32 %v5999, 0.0
  %v6064 = vpack.c.bf16 %v6001, %v6000
  %v6065 = vpack.c.bf16 %v6003, %v6002
  %v6066 = vpack.c.bf16 %v6005, %v6004
  %v6067 = vpack.c.bf16 %v6007, %v6006
  %v6068 = vpack.c.bf16 %v6009, %v6008
  %v6069 = vpack.c.bf16 %v6011, %v6010
  %v6070 = vpack.c.bf16 %v6013, %v6012
  %v6071 = vpack.c.bf16 %v6015, %v6014
  %v6072 = vpack.c.bf16 %v6017, %v6016
  %v6073 = vpack.c.bf16 %v6019, %v6018
  %v6074 = vpack.c.bf16 %v6021, %v6020
  %v6075 = vpack.c.bf16 %v6023, %v6022
  %v6076 = vpack.c.bf16 %v6025, %v6024
  %v6077 = vpack.c.bf16 %v6027, %v6026
  %v6078 = vpack.c.bf16 %v6029, %v6028
  %v6079 = vpack.c.bf16 %v6031, %v6030
  %v6080 = vpack.c.bf16 %v6033, %v6032
  %v6081 = vpack.c.bf16 %v6035, %v6034
  %v6082 = vpack.c.bf16 %v6037, %v6036
  %v6083 = vpack.c.bf16 %v6039, %v6038
  %v6084 = vpack.c.bf16 %v6041, %v6040
  %v6085 = vpack.c.bf16 %v6043, %v6042
  %v6086 = vpack.c.bf16 %v6045, %v6044
  %v6087 = vpack.c.bf16 %v6047, %v6046
  %v6088 = vpack.c.bf16 %v6049, %v6048
  %v6089 = vpack.c.bf16 %v6051, %v6050
  %v6090 = vpack.c.bf16 %v6053, %v6052
  %v6091 = vpack.c.bf16 %v6055, %v6054
  %v6092 = vpack.c.bf16 %v6057, %v6056
  %v6093 = vpack.c.bf16 %v6059, %v6058
  %v6094 = vpack.c.bf16 %v6061, %v6060
  %v6095 = vpack.c.bf16 %v6063, %v6062
  %v6096 = vld [vmem:[%s13] sm:$0xf]
  %v6097 = vld [vmem:[%s13 + $0x4] sm:$0xf]
  %v6098 = vld [vmem:[%s13 + $0x8] sm:$0xf]
  %v6099 = vld [vmem:[%s13 + $0xc] sm:$0xf]
  %v6100 = vld [vmem:[%s13 + $0x10] sm:$0xf]
  %v6101 = vld [vmem:[%s13 + $0x14] sm:$0xf]
  %v6102 = vld [vmem:[%s13 + $0x18] sm:$0xf]
  %v6103 = vld [vmem:[%s13 + $0x1c] sm:$0xf]
  %v6112 = vunpack.c.l.b16 %v6096
  %v6113 = vunpack.c.l.b16 %v6097
  %v6114 = vunpack.c.l.b16 %v6098
  %v6115 = vunpack.c.l.b16 %v6099
  %v6116 = vunpack.c.l.b16 %v6100
  %v6117 = vunpack.c.l.b16 %v6101
  %v6118 = vunpack.c.l.b16 %v6102
  %v6119 = vunpack.c.l.b16 %v6103
  %v6120 = vpack.c.b16 %v6113, %v6112
  %v6121 = vpack.c.b16 %v6115, %v6114
  %v6122 = vpack.c.b16 %v6117, %v6116
  %v6123 = vpack.c.b16 %v6119, %v6118
  %v6129 = vsel %vm496, %v6064, 0
  %v6132 = vsel %vm496, %v6065, 0
  %v6135 = vsel %vm496, %v6066, 0
  %v6138 = vsel %vm496, %v6067, 0
  %v6141 = vsel %vm496, %v6068, 0
  %v6144 = vsel %vm496, %v6069, 0
  %v6147 = vsel %vm496, %v6070, 0
  %v6150 = vsel %vm496, %v6071, 0
  %v6153 = vsel %vm496, %v6072, 0
  %v6156 = vsel %vm496, %v6073, 0
  %v6159 = vsel %vm496, %v6074, 0
  %v6162 = vsel %vm496, %v6075, 0
  %v6165 = vsel %vm496, %v6076, 0
  %v6168 = vsel %vm496, %v6077, 0
  %v6171 = vsel %vm496, %v6078, 0
  %v6174 = vsel %vm496, %v6079, 0
  %v6177 = vsel %vm496, %v6080, 0
  %v6180 = vsel %vm496, %v6081, 0
  %v6183 = vsel %vm496, %v6082, 0
  %v6186 = vsel %vm496, %v6083, 0
  %v6189 = vsel %vm496, %v6084, 0
  %v6192 = vsel %vm496, %v6085, 0
  %v6195 = vsel %vm496, %v6086, 0
  %v6198 = vsel %vm496, %v6087, 0
  %v6201 = vsel %vm496, %v6088, 0
  %v6204 = vsel %vm496, %v6089, 0
  %v6207 = vsel %vm496, %v6090, 0
  %v6210 = vsel %vm496, %v6091, 0
  %v6213 = vsel %vm496, %v6092, 0
  %v6216 = vsel %vm496, %v6093, 0
  %v6219 = vsel %vm496, %v6094, 0
  %v6222 = vsel %vm496, %v6095, 0
  %6224 = vmatprep.subr.bf16.mxu0 0
  %6225 = vmatpush1.bf16.msra.mxu0 %v6120
  %6226 = vmatprep.subr.bf16.mxu0 0
  %6227 = vmatpush1.bf16.msra.mxu0 %v6121
  %6228 = vmatprep.subr.bf16.mxu0 0
  %6229 = vmatpush1.bf16.msra.mxu0 %v6122
  %6230 = vmatprep.subr.bf16.mxu0 0
  %6231 = vmatpush1.bf16.msra.mxu0 %v6123
  %6232 = vmatprep.subr.bf16.mxu0 0
  %6233 = vmatpush1.bf16.msra.mxu0 0
  %6234 = vmatprep.subr.bf16.mxu0 0
  %6235 = vmatpush1.bf16.msra.mxu0 0
  %6236 = vmatprep.subr.bf16.mxu0 0
  %6237 = vmatpush1.bf16.msra.mxu0 0
  %6238 = vmatprep.subr.bf16.mxu0 0
  %6239 = vmatpush1.bf16.msra.mxu0 0
  %6240 = vmatprep.subr.bf16.mxu0 0
  %6241 = vmatpush1.bf16.msra.mxu0 0
  %6242 = vmatprep.subr.bf16.mxu0 0
  %6243 = vmatpush1.bf16.msra.mxu0 0
  %6244 = vmatprep.subr.bf16.mxu0 0
  %6245 = vmatpush1.bf16.msra.mxu0 0
  %6246 = vmatprep.subr.bf16.mxu0 0
  %6247 = vmatpush1.bf16.msra.mxu0 0
  %6248 = vmatprep.subr.bf16.mxu0 0
  %6249 = vmatpush1.bf16.msra.mxu0 0
  %6250 = vmatprep.subr.bf16.mxu0 0
  %6251 = vmatpush1.bf16.msra.mxu0 0
  %6252 = vmatprep.subr.bf16.mxu0 0
  %6253 = vmatpush1.bf16.msra.mxu0 0
  %6254 = vmatprep.subr.bf16.mxu0 0
  %6255 = vmatpush1.bf16.msra.mxu0 0
  %6256 = vmatprep.mubr.bf16.mxu0 0
  %6257 = vmatmul.mubr.bf16.gmra.mrb[0].mxu0 %v6129
  %v6258 = vpop.f32.mrb[0].mxu0
  %v6259 = vadd.f32 0.0, %v6258
  %v6260 = vpop.f32.mrb[0].mxu0
  %v6261 = vpop.f32.mrb[0].mxu0
  %v6262 = vadd.f32 0.0, %v6261
  %v6263 = vpop.f32.mrb[0].mxu0
  %6264 = vmatprep.mubr.bf16.mxu0 0
  %6265 = vmatmul.mubr.bf16.gmra.mrb[0].mxu0 %v6132
  %v6266 = vpop.f32.mrb[0].mxu0
  %v6267 = vadd.f32 0.0, %v6266
  %v6268 = vpop.f32.mrb[0].mxu0
  %v6269 = vpop.f32.mrb[0].mxu0
  %v6270 = vadd.f32 0.0, %v6269
  %v6271 = vpop.f32.mrb[0].mxu0
  %6272 = vmatprep.mubr.bf16.mxu0 0
  %6273 = vmatmul.mubr.bf16.gmra.mrb[0].mxu0 %v6135
  %v6274 = vpop.f32.mrb[0].mxu0
  %v6275 = vadd.f32 0.0, %v6274
  %v6276 = vpop.f32.mrb[0].mxu0
  %v6277 = vpop.f32.mrb[0].mxu0
  %v6278 = vadd.f32 0.0, %v6277
  %v6279 = vpop.f32.mrb[0].mxu0
  %6280 = vmatprep.mubr.bf16.mxu0 0
  %6281 = vmatmul.mubr.bf16.gmra.mrb[0].mxu0 %v6138
  %v6282 = vpop.f32.mrb[0].mxu0
  %v6283 = vadd.f32 0.0, %v6282
  %v6284 = vpop.f32.mrb[0].mxu0
  %v6285 = vpop.f32.mrb[0].mxu0
  %v6286 = vadd.f32 0.0, %v6285
  %v6287 = vpop.f32.mrb[0].mxu0
  %6288 = vmatprep.mubr.bf16.mxu0 0
  %6289 = vmatmul.mubr.bf16.gmra.mrb[0].mxu0 %v6141
  %v6290 = vpop.f32.mrb[0].mxu0
  %v6291 = vadd.f32 0.0, %v6290
  %v6292 = vpop.f32.mrb[0].mxu0
  %v6293 = vpop.f32.mrb[0].mxu0
  %v6294 = vadd.f32 0.0, %v6293
  %v6295 = vpop.f32.mrb[0].mxu0
  %6296 = vmatprep.mubr.bf16.mxu0 0
  %6297 = vmatmul.mubr.bf16.gmra.mrb[0].mxu0 %v6144
  %v6298 = vpop.f32.mrb[0].mxu0
  %v6299 = vadd.f32 0.0, %v6298
  %v6300 = vpop.f32.mrb[0].mxu0
  %v6301 = vpop.f32.mrb[0].mxu0
  %v6302 = vadd.f32 0.0, %v6301
  %v6303 = vpop.f32.mrb[0].mxu0
  %6304 = vmatprep.mubr.bf16.mxu0 0
  %6305 = vmatmul.mubr.bf16.gmra.mrb[0].mxu0 %v6147
  %v6306 = vpop.f32.mrb[0].mxu0
  %v6307 = vadd.f32 0.0, %v6306
  %v6308 = vpop.f32.mrb[0].mxu0
  %v6309 = vpop.f32.mrb[0].mxu0
  %v6310 = vadd.f32 0.0, %v6309
  %v6311 = vpop.f32.mrb[0].mxu0
  %6312 = vmatprep.mubr.bf16.mxu0 0
  %6313 = vmatmul.mubr.bf16.gmra.mrb[0].mxu0 %v6150
  %v6314 = vpop.f32.mrb[0].mxu0
  %v6315 = vadd.f32 0.0, %v6314
  %v6316 = vpop.f32.mrb[0].mxu0
  %v6317 = vpop.f32.mrb[0].mxu0
  %v6318 = vadd.f32 0.0, %v6317
  %v6319 = vpop.f32.mrb[0].mxu0
  %6320 = vmatprep.mubr.bf16.mxu0 0
  %6321 = vmatmul.mubr.bf16.gmra.mrb[0].mxu0 %v6153
  %v6322 = vpop.f32.mrb[0].mxu0
  %v6323 = vadd.f32 0.0, %v6322
  %v6324 = vpop.f32.mrb[0].mxu0
  %v6325 = vpop.f32.mrb[0].mxu0
  %v6326 = vadd.f32 0.0, %v6325
  %v6327 = vpop.f32.mrb[0].mxu0
  %6328 = vmatprep.mubr.bf16.mxu0 0
  %6329 = vmatmul.mubr.bf16.gmra.mrb[0].mxu0 %v6156
  %v6330 = vpop.f32.mrb[0].mxu0
  %v6331 = vadd.f32 0.0, %v6330
  %v6332 = vpop.f32.mrb[0].mxu0
  %v6333 = vpop.f32.mrb[0].mxu0
  %v6334 = vadd.f32 0.0, %v6333
  %v6335 = vpop.f32.mrb[0].mxu0
  %6336 = vmatprep.mubr.bf16.mxu0 0
  %6337 = vmatmul.mubr.bf16.gmra.mrb[0].mxu0 %v6159
  %v6338 = vpop.f32.mrb[0].mxu0
  %v6339 = vadd.f32 0.0, %v6338
  %v6340 = vpop.f32.mrb[0].mxu0
  %v6341 = vpop.f32.mrb[0].mxu0
  %v6342 = vadd.f32 0.0, %v6341
  %v6343 = vpop.f32.mrb[0].mxu0
  %6344 = vmatprep.mubr.bf16.mxu0 0
  %6345 = vmatmul.mubr.bf16.gmra.mrb[0].mxu0 %v6162
  %v6346 = vpop.f32.mrb[0].mxu0
  %v6347 = vadd.f32 0.0, %v6346
  %v6348 = vpop.f32.mrb[0].mxu0
  %v6349 = vpop.f32.mrb[0].mxu0
  %v6350 = vadd.f32 0.0, %v6349
  %v6351 = vpop.f32.mrb[0].mxu0
  %6352 = vmatprep.mubr.bf16.mxu0 0
  %6353 = vmatmul.mubr.bf16.gmra.mrb[0].mxu0 %v6165
  %v6354 = vpop.f32.mrb[0].mxu0
  %v6355 = vadd.f32 0.0, %v6354
  %v6356 = vpop.f32.mrb[0].mxu0
  %v6357 = vpop.f32.mrb[0].mxu0
  %v6358 = vadd.f32 0.0, %v6357
  %v6359 = vpop.f32.mrb[0].mxu0
  %6360 = vmatprep.mubr.bf16.mxu0 0
  %6361 = vmatmul.mubr.bf16.gmra.mrb[0].mxu0 %v6168
  %v6362 = vpop.f32.mrb[0].mxu0
  %v6363 = vadd.f32 0.0, %v6362
  %v6364 = vpop.f32.mrb[0].mxu0
  %v6365 = vpop.f32.mrb[0].mxu0
  %v6366 = vadd.f32 0.0, %v6365
  %v6367 = vpop.f32.mrb[0].mxu0
  %6368 = vmatprep.mubr.bf16.mxu0 0
  %6369 = vmatmul.mubr.bf16.gmra.mrb[0].mxu0 %v6171
  %v6370 = vpop.f32.mrb[0].mxu0
  %v6371 = vadd.f32 0.0, %v6370
  %v6372 = vpop.f32.mrb[0].mxu0
  %v6373 = vpop.f32.mrb[0].mxu0
  %v6374 = vadd.f32 0.0, %v6373
  %v6375 = vpop.f32.mrb[0].mxu0
  %6376 = vmatprep.mubr.bf16.mxu0 0
  %6377 = vmatmul.mubr.bf16.gmra.mrb[0].mxu0 %v6174
  %v6378 = vpop.f32.mrb[0].mxu0
  %v6379 = vadd.f32 0.0, %v6378
  %v6380 = vpop.f32.mrb[0].mxu0
  %v6381 = vpop.f32.mrb[0].mxu0
  %v6382 = vadd.f32 0.0, %v6381
  %v6383 = vpop.f32.mrb[0].mxu0
  %6384 = vmatprep.mubr.bf16.mxu0 0
  %6385 = vmatmul.mubr.bf16.gmra.mrb[0].mxu0 %v6177
  %v6386 = vpop.f32.mrb[0].mxu0
  %v6387 = vadd.f32 0.0, %v6386
  %v6388 = vpop.f32.mrb[0].mxu0
  %v6389 = vpop.f32.mrb[0].mxu0
  %v6390 = vadd.f32 0.0, %v6389
  %v6391 = vpop.f32.mrb[0].mxu0
  %6392 = vmatprep.mubr.bf16.mxu0 0
  %6393 = vmatmul.mubr.bf16.gmra.mrb[0].mxu0 %v6180
  %v6394 = vpop.f32.mrb[0].mxu0
  %v6395 = vadd.f32 0.0, %v6394
  %v6396 = vpop.f32.mrb[0].mxu0
  %v6397 = vpop.f32.mrb[0].mxu0
  %v6398 = vadd.f32 0.0, %v6397
  %v6399 = vpop.f32.mrb[0].mxu0
  %6400 = vmatprep.mubr.bf16.mxu0 0
  %6401 = vmatmul.mubr.bf16.gmra.mrb[0].mxu0 %v6183
  %v6402 = vpop.f32.mrb[0].mxu0
  %v6403 = vadd.f32 0.0, %v6402
  %v6404 = vpop.f32.mrb[0].mxu0
  %v6405 = vpop.f32.mrb[0].mxu0
  %v6406 = vadd.f32 0.0, %v6405
  %v6407 = vpop.f32.mrb[0].mxu0
  %6408 = vmatprep.mubr.bf16.mxu0 0
  %6409 = vmatmul.mubr.bf16.gmra.mrb[0].mxu0 %v6186
  %v6410 = vpop.f32.mrb[0].mxu0
  %v6411 = vadd.f32 0.0, %v6410
  %v6412 = vpop.f32.mrb[0].mxu0
  %v6413 = vpop.f32.mrb[0].mxu0
  %v6414 = vadd.f32 0.0, %v6413
  %v6415 = vpop.f32.mrb[0].mxu0
  %6416 = vmatprep.mubr.bf16.mxu0 0
  %6417 = vmatmul.mubr.bf16.gmra.mrb[0].mxu0 %v6189
  %v6418 = vpop.f32.mrb[0].mxu0
  %v6419 = vadd.f32 0.0, %v6418
  %v6420 = vpop.f32.mrb[0].mxu0
  %v6421 = vpop.f32.mrb[0].mxu0
  %v6422 = vadd.f32 0.0, %v6421
  %v6423 = vpop.f32.mrb[0].mxu0
  %6424 = vmatprep.mubr.bf16.mxu0 0
  %6425 = vmatmul.mubr.bf16.gmra.mrb[0].mxu0 %v6192
  %v6426 = vpop.f32.mrb[0].mxu0
  %v6427 = vadd.f32 0.0, %v6426
  %v6428 = vpop.f32.mrb[0].mxu0
  %v6429 = vpop.f32.mrb[0].mxu0
  %v6430 = vadd.f32 0.0, %v6429
  %v6431 = vpop.f32.mrb[0].mxu0
  %6432 = vmatprep.mubr.bf16.mxu0 0
  %6433 = vmatmul.mubr.bf16.gmra.mrb[0].mxu0 %v6195
  %v6434 = vpop.f32.mrb[0].mxu0
  %v6435 = vadd.f32 0.0, %v6434
  %v6436 = vpop.f32.mrb[0].mxu0
  %v6437 = vpop.f32.mrb[0].mxu0
  %v6438 = vadd.f32 0.0, %v6437
  %v6439 = vpop.f32.mrb[0].mxu0
  %6440 = vmatprep.mubr.bf16.mxu0 0
  %6441 = vmatmul.mubr.bf16.gmra.mrb[0].mxu0 %v6198
  %v6442 = vpop.f32.mrb[0].mxu0
  %v6443 = vadd.f32 0.0, %v6442
  %v6444 = vpop.f32.mrb[0].mxu0
  %v6445 = vpop.f32.mrb[0].mxu0
  %v6446 = vadd.f32 0.0, %v6445
  %v6447 = vpop.f32.mrb[0].mxu0
  %6448 = vmatprep.mubr.bf16.mxu0 0
  %6449 = vmatmul.mubr.bf16.gmra.mrb[0].mxu0 %v6201
  %v6450 = vpop.f32.mrb[0].mxu0
  %v6451 = vadd.f32 0.0, %v6450
  %v6452 = vpop.f32.mrb[0].mxu0
  %v6453 = vpop.f32.mrb[0].mxu0
  %v6454 = vadd.f32 0.0, %v6453
  %v6455 = vpop.f32.mrb[0].mxu0
  %6456 = vmatprep.mubr.bf16.mxu0 0
  %6457 = vmatmul.mubr.bf16.gmra.mrb[0].mxu0 %v6204
  %v6458 = vpop.f32.mrb[0].mxu0
  %v6459 = vadd.f32 0.0, %v6458
  %v6460 = vpop.f32.mrb[0].mxu0
  %v6461 = vpop.f32.mrb[0].mxu0
  %v6462 = vadd.f32 0.0, %v6461
  %v6463 = vpop.f32.mrb[0].mxu0
  %6464 = vmatprep.mubr.bf16.mxu0 0
  %6465 = vmatmul.mubr.bf16.gmra.mrb[0].mxu0 %v6207
  %v6466 = vpop.f32.mrb[0].mxu0
  %v6467 = vadd.f32 0.0, %v6466
  %v6468 = vpop.f32.mrb[0].mxu0
  %v6469 = vpop.f32.mrb[0].mxu0
  %v6470 = vadd.f32 0.0, %v6469
  %v6471 = vpop.f32.mrb[0].mxu0
  %6472 = vmatprep.mubr.bf16.mxu0 0
  %6473 = vmatmul.mubr.bf16.gmra.mrb[0].mxu0 %v6210
  %v6474 = vpop.f32.mrb[0].mxu0
  %v6475 = vadd.f32 0.0, %v6474
  %v6476 = vpop.f32.mrb[0].mxu0
  %v6477 = vpop.f32.mrb[0].mxu0
  %v6478 = vadd.f32 0.0, %v6477
  %v6479 = vpop.f32.mrb[0].mxu0
  %6480 = vmatprep.mubr.bf16.mxu0 0
  %6481 = vmatmul.mubr.bf16.gmra.mrb[0].mxu0 %v6213
  %v6482 = vpop.f32.mrb[0].mxu0
  %v6483 = vadd.f32 0.0, %v6482
  %v6484 = vpop.f32.mrb[0].mxu0
  %v6485 = vpop.f32.mrb[0].mxu0
  %v6486 = vadd.f32 0.0, %v6485
  %v6487 = vpop.f32.mrb[0].mxu0
  %6488 = vmatprep.mubr.bf16.mxu0 0
  %6489 = vmatmul.mubr.bf16.gmra.mrb[0].mxu0 %v6216
  %v6490 = vpop.f32.mrb[0].mxu0
  %v6491 = vadd.f32 0.0, %v6490
  %v6492 = vpop.f32.mrb[0].mxu0
  %v6493 = vpop.f32.mrb[0].mxu0
  %v6494 = vadd.f32 0.0, %v6493
  %v6495 = vpop.f32.mrb[0].mxu0
  %6496 = vmatprep.mubr.bf16.mxu0 0
  %6497 = vmatmul.mubr.bf16.gmra.mrb[0].mxu0 %v6219
  %v6498 = vpop.f32.mrb[0].mxu0
  %v6499 = vadd.f32 0.0, %v6498
  %v6500 = vpop.f32.mrb[0].mxu0
  %v6501 = vpop.f32.mrb[0].mxu0
  %v6502 = vadd.f32 0.0, %v6501
  %v6503 = vpop.f32.mrb[0].mxu0
  %6504 = vmatprep.mubr.bf16.mxu0 0
  %6505 = vmatmul.mubr.bf16.gmra.mrb[0].mxu0 %v6222
  %v6506 = vpop.f32.mrb[0].mxu0
  %v6507 = vadd.f32 0.0, %v6506
  %v6508 = vpop.f32.mrb[0].mxu0
  %v6509 = vpop.f32.mrb[0].mxu0
  %v6510 = vadd.f32 0.0, %v6509
  %v6511 = vpop.f32.mrb[0].mxu0
  %6512 = vdwg.mxu0
  %v6513 = vpack.c.bf16 %v6262, %v6259
  %v6514 = vpack.c.bf16 %v6270, %v6267
  %v6515 = vpack.c.bf16 %v6278, %v6275
  %v6516 = vpack.c.bf16 %v6286, %v6283
  %v6517 = vpack.c.bf16 %v6294, %v6291
  %v6518 = vpack.c.bf16 %v6302, %v6299
  %v6519 = vpack.c.bf16 %v6310, %v6307
  %v6520 = vpack.c.bf16 %v6318, %v6315
  %v6521 = vpack.c.bf16 %v6326, %v6323
  %v6522 = vpack.c.bf16 %v6334, %v6331
  %v6523 = vpack.c.bf16 %v6342, %v6339
  %v6524 = vpack.c.bf16 %v6350, %v6347
  %v6525 = vpack.c.bf16 %v6358, %v6355
  %v6526 = vpack.c.bf16 %v6366, %v6363
  %v6527 = vpack.c.bf16 %v6374, %v6371
  %v6528 = vpack.c.bf16 %v6382, %v6379
  %v6529 = vpack.c.bf16 %v6390, %v6387
  %v6530 = vpack.c.bf16 %v6398, %v6395
  %v6531 = vpack.c.bf16 %v6406, %v6403
  %v6532 = vpack.c.bf16 %v6414, %v6411
  %v6533 = vpack.c.bf16 %v6422, %v6419
  %v6534 = vpack.c.bf16 %v6430, %v6427
  %v6535 = vpack.c.bf16 %v6438, %v6435
  %v6536 = vpack.c.bf16 %v6446, %v6443
  %v6537 = vpack.c.bf16 %v6454, %v6451
  %v6538 = vpack.c.bf16 %v6462, %v6459
  %v6539 = vpack.c.bf16 %v6470, %v6467
  %v6540 = vpack.c.bf16 %v6478, %v6475
  %v6541 = vpack.c.bf16 %v6486, %v6483
  %v6542 = vpack.c.bf16 %v6494, %v6491
  %v6543 = vpack.c.bf16 %v6502, %v6499
  %v6544 = vpack.c.bf16 %v6510, %v6507
  %v6577 = vunpack.c.l.b16 %v6513
  %v6578 = vunpack.c.h.b16 %v6513
  %v6579 = vunpack.c.l.b16 %v6514
  %v6580 = vunpack.c.h.b16 %v6514
  %v6581 = vunpack.c.l.b16 %v6515
  %v6582 = vunpack.c.h.b16 %v6515
  %v6583 = vunpack.c.l.b16 %v6516
  %v6584 = vunpack.c.h.b16 %v6516
  %v6585 = vunpack.c.l.b16 %v6517
  %v6586 = vunpack.c.h.b16 %v6517
  %v6587 = vunpack.c.l.b16 %v6518
  %v6588 = vunpack.c.h.b16 %v6518
  %v6589 = vunpack.c.l.b16 %v6519
  %v6590 = vunpack.c.h.b16 %v6519
  %v6591 = vunpack.c.l.b16 %v6520
  %v6592 = vunpack.c.h.b16 %v6520
  %v6593 = vunpack.c.l.b16 %v6521
  %v6594 = vunpack.c.h.b16 %v6521
  %v6595 = vunpack.c.l.b16 %v6522
  %v6596 = vunpack.c.h.b16 %v6522
  %v6597 = vunpack.c.l.b16 %v6523
  %v6598 = vunpack.c.h.b16 %v6523
  %v6599 = vunpack.c.l.b16 %v6524
  %v6600 = vunpack.c.h.b16 %v6524
  %v6601 = vunpack.c.l.b16 %v6525
  %v6602 = vunpack.c.h.b16 %v6525
  %v6603 = vunpack.c.l.b16 %v6526
  %v6604 = vunpack.c.h.b16 %v6526
  %v6605 = vunpack.c.l.b16 %v6527
  %v6606 = vunpack.c.h.b16 %v6527
  %v6607 = vunpack.c.l.b16 %v6528
  %v6608 = vunpack.c.h.b16 %v6528
  %v6609 = vunpack.c.l.b16 %v6529
  %v6610 = vunpack.c.h.b16 %v6529
  %v6611 = vunpack.c.l.b16 %v6530
  %v6612 = vunpack.c.h.b16 %v6530
  %v6613 = vunpack.c.l.b16 %v6531
  %v6614 = vunpack.c.h.b16 %v6531
  %v6615 = vunpack.c.l.b16 %v6532
  %v6616 = vunpack.c.h.b16 %v6532
  %v6617 = vunpack.c.l.b16 %v6533
  %v6618 = vunpack.c.h.b16 %v6533
  %v6619 = vunpack.c.l.b16 %v6534
  %v6620 = vunpack.c.h.b16 %v6534
  %v6621 = vunpack.c.l.b16 %v6535
  %v6622 = vunpack.c.h.b16 %v6535
  %v6623 = vunpack.c.l.b16 %v6536
  %v6624 = vunpack.c.h.b16 %v6536
  %v6625 = vunpack.c.l.b16 %v6537
  %v6626 = vunpack.c.h.b16 %v6537
  %v6627 = vunpack.c.l.b16 %v6538
  %v6628 = vunpack.c.h.b16 %v6538
  %v6629 = vunpack.c.l.b16 %v6539
  %v6630 = vunpack.c.h.b16 %v6539
  %v6631 = vunpack.c.l.b16 %v6540
  %v6632 = vunpack.c.h.b16 %v6540
  %v6633 = vunpack.c.l.b16 %v6541
  %v6634 = vunpack.c.h.b16 %v6541
  %v6635 = vunpack.c.l.b16 %v6542
  %v6636 = vunpack.c.h.b16 %v6542
  %v6637 = vunpack.c.l.b16 %v6543
  %v6638 = vunpack.c.h.b16 %v6543
  %v6639 = vunpack.c.l.b16 %v6544
  %v6640 = vunpack.c.h.b16 %v6544
  %v6641 = vpack.c.b16 %v6577, %v6577
  %v6642 = vpack.c.b16 %v6578, %v6578
  %v6643 = vpack.c.b16 %v6579, %v6579
  %v6644 = vpack.c.b16 %v6580, %v6580
  %v6645 = vpack.c.b16 %v6581, %v6581
  %v6646 = vpack.c.b16 %v6582, %v6582
  %v6647 = vpack.c.b16 %v6583, %v6583
  %v6648 = vpack.c.b16 %v6584, %v6584
  %v6649 = vpack.c.b16 %v6585, %v6585
  %v6650 = vpack.c.b16 %v6586, %v6586
  %v6651 = vpack.c.b16 %v6587, %v6587
  %v6652 = vpack.c.b16 %v6588, %v6588
  %v6653 = vpack.c.b16 %v6589, %v6589
  %v6654 = vpack.c.b16 %v6590, %v6590
  %v6655 = vpack.c.b16 %v6591, %v6591
  %v6656 = vpack.c.b16 %v6592, %v6592
  %v6657 = vpack.c.b16 %v6593, %v6593
  %v6658 = vpack.c.b16 %v6594, %v6594
  %v6659 = vpack.c.b16 %v6595, %v6595
  %v6660 = vpack.c.b16 %v6596, %v6596
  %v6661 = vpack.c.b16 %v6597, %v6597
  %v6662 = vpack.c.b16 %v6598, %v6598
  %v6663 = vpack.c.b16 %v6599, %v6599
  %v6664 = vpack.c.b16 %v6600, %v6600
  %v6665 = vpack.c.b16 %v6601, %v6601
  %v6666 = vpack.c.b16 %v6602, %v6602
  %v6667 = vpack.c.b16 %v6603, %v6603
  %v6668 = vpack.c.b16 %v6604, %v6604
  %v6669 = vpack.c.b16 %v6605, %v6605
  %v6670 = vpack.c.b16 %v6606, %v6606
  %v6671 = vpack.c.b16 %v6607, %v6607
  %v6672 = vpack.c.b16 %v6608, %v6608
  %v6673 = vpack.c.b16 %v6609, %v6609
  %v6674 = vpack.c.b16 %v6610, %v6610
  %v6675 = vpack.c.b16 %v6611, %v6611
  %v6676 = vpack.c.b16 %v6612, %v6612
  %v6677 = vpack.c.b16 %v6613, %v6613
  %v6678 = vpack.c.b16 %v6614, %v6614
  %v6679 = vpack.c.b16 %v6615, %v6615
  %v6680 = vpack.c.b16 %v6616, %v6616
  %v6681 = vpack.c.b16 %v6617, %v6617
  %v6682 = vpack.c.b16 %v6618, %v6618
  %v6683 = vpack.c.b16 %v6619, %v6619
  %v6684 = vpack.c.b16 %v6620, %v6620
  %v6685 = vpack.c.b16 %v6621, %v6621
  %v6686 = vpack.c.b16 %v6622, %v6622
  %v6687 = vpack.c.b16 %v6623, %v6623
  %v6688 = vpack.c.b16 %v6624, %v6624
  %v6689 = vpack.c.b16 %v6625, %v6625
  %v6690 = vpack.c.b16 %v6626, %v6626
  %v6691 = vpack.c.b16 %v6627, %v6627
  %v6692 = vpack.c.b16 %v6628, %v6628
  %v6693 = vpack.c.b16 %v6629, %v6629
  %v6694 = vpack.c.b16 %v6630, %v6630
  %v6695 = vpack.c.b16 %v6631, %v6631
  %v6696 = vpack.c.b16 %v6632, %v6632
  %v6697 = vpack.c.b16 %v6633, %v6633
  %v6698 = vpack.c.b16 %v6634, %v6634
  %v6699 = vpack.c.b16 %v6635, %v6635
  %v6700 = vpack.c.b16 %v6636, %v6636
  %v6701 = vpack.c.b16 %v6637, %v6637
  %v6702 = vpack.c.b16 %v6638, %v6638
  %v6703 = vpack.c.b16 %v6639, %v6639
  %v6704 = vpack.c.b16 %v6640, %v6640
  %vm6769 = vcmask 519168
  %6770 = vst.msk [vmem:[%s14] sm:$0xf] %vm6769, %v6641
  %6771 = vst.msk [vmem:[%s14 + $0x4] sm:$0xf] %vm6769, %v6642
  %6772 = vst.msk [vmem:[%s14 + $0x8] sm:$0xf] %vm6769, %v6643
  %6773 = vst.msk [vmem:[%s14 + $0xc] sm:$0xf] %vm6769, %v6644
  %6774 = vst.msk [vmem:[%s14 + $0x10] sm:$0xf] %vm6769, %v6645
  %6775 = vst.msk [vmem:[%s14 + $0x14] sm:$0xf] %vm6769, %v6646
  %6776 = vst.msk [vmem:[%s14 + $0x18] sm:$0xf] %vm6769, %v6647
  %6777 = vst.msk [vmem:[%s14 + $0x1c] sm:$0xf] %vm6769, %v6648
  %6778 = vst.msk [vmem:[%s14 + $0x20] sm:$0xf] %vm6769, %v6649
  %6779 = vst.msk [vmem:[%s14 + $0x24] sm:$0xf] %vm6769, %v6650
  %6780 = vst.msk [vmem:[%s14 + $0x28] sm:$0xf] %vm6769, %v6651
  %6781 = vst.msk [vmem:[%s14 + $0x2c] sm:$0xf] %vm6769, %v6652
  %6782 = vst.msk [vmem:[%s14 + $0x30] sm:$0xf] %vm6769, %v6653
  %6783 = vst.msk [vmem:[%s14 + $0x34] sm:$0xf] %vm6769, %v6654
  %6784 = vst.msk [vmem:[%s14 + $0x38] sm:$0xf] %vm6769, %v6655
  %6785 = vst.msk [vmem:[%s14 + $0x3c] sm:$0xf] %vm6769, %v6656
  %6786 = vst.msk [vmem:[%s14 + $0x40] sm:$0xf] %vm6769, %v6657
  %6787 = vst.msk [vmem:[%s14 + $0x44] sm:$0xf] %vm6769, %v6658
  %6788 = vst.msk [vmem:[%s14 + $0x48] sm:$0xf] %vm6769, %v6659
  %6789 = vst.msk [vmem:[%s14 + $0x4c] sm:$0xf] %vm6769, %v6660
  %6790 = vst.msk [vmem:[%s14 + $0x50] sm:$0xf] %vm6769, %v6661
  %6791 = vst.msk [vmem:[%s14 + $0x54] sm:$0xf] %vm6769, %v6662
  %6792 = vst.msk [vmem:[%s14 + $0x58] sm:$0xf] %vm6769, %v6663
  %6793 = vst.msk [vmem:[%s14 + $0x5c] sm:$0xf] %vm6769, %v6664
  %6794 = vst.msk [vmem:[%s14 + $0x60] sm:$0xf] %vm6769, %v6665
  %6795 = vst.msk [vmem:[%s14 + $0x64] sm:$0xf] %vm6769, %v6666
  %6796 = vst.msk [vmem:[%s14 + $0x68] sm:$0xf] %vm6769, %v6667
  %6797 = vst.msk [vmem:[%s14 + $0x6c] sm:$0xf] %vm6769, %v6668
  %6798 = vst.msk [vmem:[%s14 + $0x70] sm:$0xf] %vm6769, %v6669
  %6799 = vst.msk [vmem:[%s14 + $0x74] sm:$0xf] %vm6769, %v6670
  %6800 = vst.msk [vmem:[%s14 + $0x78] sm:$0xf] %vm6769, %v6671
  %6801 = vst.msk [vmem:[%s14 + $0x7c] sm:$0xf] %vm6769, %v6672
  %6802 = vst.msk [vmem:[%s14 + $0x80] sm:$0xf] %vm6769, %v6673
  %6803 = vst.msk [vmem:[%s14 + $0x84] sm:$0xf] %vm6769, %v6674
  %6804 = vst.msk [vmem:[%s14 + $0x88] sm:$0xf] %vm6769, %v6675
  %6805 = vst.msk [vmem:[%s14 + $0x8c] sm:$0xf] %vm6769, %v6676
  %6806 = vst.msk [vmem:[%s14 + $0x90] sm:$0xf] %vm6769, %v6677
  %6807 = vst.msk [vmem:[%s14 + $0x94] sm:$0xf] %vm6769, %v6678
  %6808 = vst.msk [vmem:[%s14 + $0x98] sm:$0xf] %vm6769, %v6679
  %6809 = vst.msk [vmem:[%s14 + $0x9c] sm:$0xf] %vm6769, %v6680
  %6810 = vst.msk [vmem:[%s14 + $0xa0] sm:$0xf] %vm6769, %v6681
  %6811 = vst.msk [vmem:[%s14 + $0xa4] sm:$0xf] %vm6769, %v6682
  %6812 = vst.msk [vmem:[%s14 + $0xa8] sm:$0xf] %vm6769, %v6683
  %6813 = vst.msk [vmem:[%s14 + $0xac] sm:$0xf] %vm6769, %v6684
  %6814 = vst.msk [vmem:[%s14 + $0xb0] sm:$0xf] %vm6769, %v6685
  %6815 = vst.msk [vmem:[%s14 + $0xb4] sm:$0xf] %vm6769, %v6686
  %6816 = vst.msk [vmem:[%s14 + $0xb8] sm:$0xf] %vm6769, %v6687
  %6817 = vst.msk [vmem:[%s14 + $0xbc] sm:$0xf] %vm6769, %v6688
  %6818 = vst.msk [vmem:[%s14 + $0xc0] sm:$0xf] %vm6769, %v6689
  %6819 = vst.msk [vmem:[%s14 + $0xc4] sm:$0xf] %vm6769, %v6690
  %6820 = vst.msk [vmem:[%s14 + $0xc8] sm:$0xf] %vm6769, %v6691
  %6821 = vst.msk [vmem:[%s14 + $0xcc] sm:$0xf] %vm6769, %v6692
  %6822 = vst.msk [vmem:[%s14 + $0xd0] sm:$0xf] %vm6769, %v6693
  %6823 = vst.msk [vmem:[%s14 + $0xd4] sm:$0xf] %vm6769, %v6694
  %6824 = vst.msk [vmem:[%s14 + $0xd8] sm:$0xf] %vm6769, %v6695
  %6825 = vst.msk [vmem:[%s14 + $0xdc] sm:$0xf] %vm6769, %v6696
  %6826 = vst.msk [vmem:[%s14 + $0xe0] sm:$0xf] %vm6769, %v6697
  %6827 = vst.msk [vmem:[%s14 + $0xe4] sm:$0xf] %vm6769, %v6698
  %6828 = vst.msk [vmem:[%s14 + $0xe8] sm:$0xf] %vm6769, %v6699
  %6829 = vst.msk [vmem:[%s14 + $0xec] sm:$0xf] %vm6769, %v6700
  %6830 = vst.msk [vmem:[%s14 + $0xf0] sm:$0xf] %vm6769, %v6701
  %6831 = vst.msk [vmem:[%s14 + $0xf4] sm:$0xf] %vm6769, %v6702
  %6832 = vst.msk [vmem:[%s14 + $0xf8] sm:$0xf] %vm6769, %v6703
  %6833 = vst.msk [vmem:[%s14 + $0xfc] sm:$0xf] %vm6769, %v6704
  // Predicated region
  $region58: #{tpu_custom_call.1} parent=0 // pred_check
    _
  $region59: #{tpu_custom_call.1} parent=0 // pred_check_branch
    %6835 = sbr.rel (0) target = $region61
  $region60: #{tpu_custom_call.1} parent=0 // pred_region
    _
  $region61: #{tpu_custom_call.1} parent=0 // pred_fallthru
    _
  // Predicated region
  $region62: #{tpu_custom_call.1} parent=0 // pred_check
    _
  $region63: #{tpu_custom_call.1} parent=0 // pred_check_branch
    %6837 = sbr.rel (0) target = $region65
  $region64: #{tpu_custom_call.1} parent=0 // pred_region
    _
  $region65: #{tpu_custom_call.1} parent=0 // pred_fallthru
    _

</llo_original>
